<compile_context>
chip_gen: v7x
topology: tpu7x:2x2x1
jax: 0.10.0
libtpu: 0.0.40
codegen_flags: <defaults>
</compile_context>

<pallas_src>
import functools

import jax
import jax.numpy as jnp
from jax.experimental import pallas as pl
from jax.experimental.pallas import tpu as pltpu


def _pair(v):
    return tuple(v) if isinstance(v, (tuple, list)) else (v, v)


def _round_up(x, m):
    return (x + m - 1) // m * m


def _vmem_limit_bytes():
    cap = 64 * 1024 * 1024                       # v7x-safe fallback
    try:
        info = pltpu.get_tpu_info()
        cap = int(getattr(info, "vmem_capacity_bytes", cap))
    except Exception:
        pass
    return max(32 * 1024 * 1024, min(100 * 1024 * 1024, (cap * 3) // 4))


def _pick_row_tile(rows, max_rows):
    """Largest multiple-of-8 divisor of `rows` <= max_rows, preferring >= 2 grid steps
    (keeps both v7x TensorCores busy and the DMA pipeline alive)."""
    divs = [d for d in range(8, rows + 1, 8) if rows % d == 0 and d <= max_rows]
    if not divs:
        return rows                              # single full block (equals array dim)
    multi = [d for d in divs if rows // d >= 2]
    return max(multi) if multi else max(divs)


def _phase_taps(K, S, D, pad):
    """For each output phase p in [0,S): (k, offset) with offset=(p+pad-k*D)//S when it divides."""
    taps, offs = [], []
    for p in range(S):
        t = []
        for k in range(K):
            r = p + pad - k * D
            if r % S == 0:
                t.append((k, r // S))
                offs.append(r // S)
        taps.append(t)
    return taps, min(offs), max(offs)


# ------------------ kernel A: per-batch phase-decomposed deconv + single-pass BN stats ------------------
def _conv_stats_kernel(x_ref, w_ref, y_ref, stats_ref, *,
                       H, Wt, Wv, sh0, sw0, tap_list, Cin):
    """x_ref    : (Hp, Wp, Cin)    bf16 halo-padded NHWC slab (one batch element, VMEM resident)
       w_ref    : (T, Cin, Cph_s)  bf16 per-tap phase-packed ConvTranspose2d weight
       y_ref    : (H*Wt, Cph_s)    bf16 pre-BN conv output (bias intentionally omitted)
       stats_ref: (2, Cph_s)       f32  [sum ; sum-of-squares] over the valid rows (pre-bias)."""
    acc = None
    for t, (dh, dw) in enumerate(tap_list):
        win = x_ref[sh0 + dh: sh0 + dh + H, sw0 + dw: sw0 + dw + Wt, :]   # (H, Wt, Cin)
        lhs = win.reshape(H * Wt, Cin)           # layout no-op: Wt is a multiple of 16
        part = jnp.dot(lhs, w_ref[t], preferred_element_type=jnp.float32)
        acc = part if acc is None else acc + part
    y_ref[...] = acc.astype(y_ref.dtype)         # bf16 intermediate: half the HBM writeback

    if Wv != Wt:                                 # exclude the W-padding columns from the stats
        rid = jax.lax.broadcasted_iota(jnp.int32, (H * Wt, 1), 0)
        acc = jnp.where(rid % Wt < Wv, acc, 0.0)
    stats_ref[0:1, :] = jnp.sum(acc, axis=0, keepdims=True)
    stats_ref[1:2, :] = jnp.sum(acc * acc, axis=0, keepdims=True)


# ------------------ kernel B: lane-dense BN affine + activation (bf16 in / bf16 out) --------------------
def _bn_act_kernel(y_ref, scale_ref, shift_ref, out_ref, *, nonlinear):
    y = y_ref[...].astype(jnp.float32) * scale_ref[...] + shift_ref[...]   # f32 math (v5e-safe)
    if nonlinear == 'relu':
        y = jnp.maximum(y, 0.0)
    elif nonlinear == 'sigmoid':
        y = jax.nn.sigmoid(y)
    else:
        raise NotImplementedError(nonlinear)
    out_ref[...] = y.astype(out_ref.dtype)


# --------------------------------------------------------------------------------------- wrapper
def decoder_block_2d(x_nchw, skip_nchw, params, *, kernel_size, stride=None,
                     dilation=1, nonlinear='relu', eps=1e-5):
    Kh, Kw = _pair(kernel_size)
    if stride is None:
        stride = (Kh, Kw)
    Sh, Sw = _pair(stride)
    Dh, Dw = _pair(dilation)

    if skip_nchw is not None:
        x_nchw = jnp.concatenate([x_nchw, skip_nchw], axis=1)
    B, Cin, H, W = x_nchw.shape

    weight = params['weight']                          # (Cin, Cout, Kh, Kw) PyTorch ConvTranspose2d layout
    gamma = params['gamma'].astype(jnp.float32)
    beta = params['beta'].astype(jnp.float32)
    Cout = weight.shape[1]

    Kh_eff = (Kh - 1) * Dh + 1
    Kw_eff = (Kw - 1) * Dw + 1
    crop_h, crop_w = Kh_eff - Sh, Kw_eff - Sw
    # TODO(synk): the zero-pad branch of F.pad (effective kernel < stride) is not implemented.
    assert crop_h >= 0 and crop_w >= 0, "only the cropping (negative F.pad) case is supported"
    pad_top, pad_left = crop_h // 2, crop_w // 2
    Ho, Wo = H * Sh, W * Sw

    # --- stride-phase (subpixel) decomposition of the transposed conv -------------------------
    taps_h, omin_h, omax_h = _phase_taps(Kh, Sh, Dh, pad_top)
    taps_w, omin_w, omax_w = _phase_taps(Kw, Sw, Dw, pad_left)
    Kph, Kpw = omax_h - omin_h + 1, omax_w - omin_w + 1      # equivalent stride-1 conv taps
    Cph = Sh * Sw * Cout                                     # phase-packed output channels
    Cph_s = _round_up(Cph, 128) if Cph < 128 else Cph        # lane-dense kernel-A stores

    # Halo-padded NHWC slab (bf16).  W is padded to a multiple of 16 so the in-kernel
    # (H, Wt, Cin) -> (H*Wt, Cin) reshape is a layout no-op for packed bf16.
    Wt = _round_up(W, 16)
    pb_h, pa_h = max(0, -omin_h), max(0, omax_h)
    pb_w = max(0, -omin_w)
    pa_w = max(0, omax_w) + (Wt - W)
    x = jnp.transpose(x_nchw, (0, 2, 3, 1)).astype(jnp.bfloat16)
    xpad = jnp.pad(x, ((0, 0), (pb_h, pa_h), (pb_w, pa_w), (0, 0)))
    Hp, Wp = H + pb_h + pa_h, W + pb_w + pa_w
    sh0, sw0 = omin_h + pb_h, omin_w + pb_w                  # window start offsets (>= 0)

    # Per-tap phase-packed weights (T, Cin, Cph_s); taps with no contribution are dropped.
    # No spatial flip: the ConvTranspose2d scatter form is used directly.
    wf = weight.astype(jnp.float32)
    tap_list, wblocks = [], []
    for dh in range(Kph):
        for dw in range(Kpw):
            blk = jnp.zeros((Cin, Cph), jnp.float32)
            used = False
            for ph in range(Sh):
                for (kh, oh) in taps_h[ph]:
                    if oh - omin_h != dh:
                        continue
                    for pw in range(Sw):
                        for (kw, ow) in taps_w[pw]:
                            if ow - omin_w != dw:
                                continue
                            col = (ph * Sw + pw) * Cout
                            blk = blk.at[:, col:col + Cout].set(wf[:, :, kh, kw])
                            used = True
            if used:
                tap_list.append((dh, dw))
                wblocks.append(blk)
    wtap = jnp.stack(wblocks, axis=0)
    if Cph_s != Cph:
        wtap = jnp.pad(wtap, ((0, 0), (0, 0), (0, Cph_s - Cph)))
    wtap = wtap.astype(jnp.bfloat16)
    T = len(tap_list)

    vmem_limit = _vmem_limit_bytes()
    cparams = pltpu.CompilerParams(dimension_semantics=("parallel",),
                                   vmem_limit_bytes=vmem_limit)

    # --- kernel A: grid over batch, whole per-batch slab per step ------------------------------
    HWt = H * Wt
    slab = 2 * (Hp * Wp * Cin * 2 + HWt * Cph_s * 2) + T * Cin * Cph_s * 2 + HWt * Cph_s * 4
    # TODO(synk): add an H-chunked variant (halo make_async_copy) for very large H*W slabs.
    assert slab < vmem_limit, f"per-batch slab ({slab} B) exceeds VMEM budget ({vmem_limit} B)"

    conv, stats = pl.pallas_call(
        functools.partial(_conv_stats_kernel, H=H, Wt=Wt, Wv=W, sh0=sh0, sw0=sw0,
                          tap_list=tuple(tap_list), Cin=Cin),
        grid=(B,),
        in_specs=[pl.BlockSpec((None, Hp, Wp, Cin), lambda b: (b, 0, 0, 0)),
                  pl.BlockSpec((T, Cin, Cph_s), lambda b: (0, 0, 0))],
        out_specs=[pl.BlockSpec((HWt, Cph_s), lambda b: (b, 0)),
                   pl.BlockSpec((None, 2, Cph_s), lambda b: (b, 0, 0))],
        out_shape=[jax.ShapeDtypeStruct((B * HWt, Cph_s), jnp.bfloat16),
                   jax.ShapeDtypeStruct((B, 2, Cph_s), jnp.float32)],
        compiler_params=cparams,
    )(xpad, wtap)

    # --- tiny JAX glue: per-channel scale & shift from the (pre-bias) per-batch stats ----------
    cnt = float(B * H * W * Sh * Sw)                          # == B*Ho*Wo valid positions
    s = jnp.sum(stats, axis=0)[:, :Cph].reshape(2, Sh * Sw, Cout).sum(axis=1)   # (2, Cout)
    mean = s[0] / cnt
    var = jnp.maximum(s[1] / cnt - mean * mean, 0.0)
    scale = gamma * jax.lax.rsqrt(var + eps)
    # Train-mode BatchNorm subtracts the per-channel batch mean, so the ConvTranspose2d bias
    # cancels exactly -> it is deliberately never added in the fused path.
    shift = beta - mean * scale
    # TODO(synk): BatchNorm2d running_mean/running_var updates are computable from `stats`
    # for free but are not returned (the module forward only returns the activation).

    # --- kernel B: lane-dense BN affine + activation (bf16 in / bf16 out) -----------------------
    rows2 = B * H
    WC = Wt * Cph_s
    y2 = conv.reshape(rows2, WC)                              # contiguous -> free reshape

    col_scale = jnp.tile(scale, Sh * Sw)
    col_shift = jnp.tile(shift, Sh * Sw)
    if Cph_s != Cph:
        col_scale = jnp.pad(col_scale, (0, Cph_s - Cph))
        col_shift = jnp.pad(col_shift, (0, Cph_s - Cph))
    wide_scale = jnp.tile(col_scale, Wt).reshape(1, WC)
    wide_shift = jnp.tile(col_shift, Wt).reshape(1, WC)

    tr_budget = max(8, int((vmem_limit // 2) // (WC * 8)))    # bf16 in+out, double-buffered
    TR = _pick_row_tile(rows2, tr_budget)

    out2 = pl.pallas_call(
        functools.partial(_bn_act_kernel, nonlinear=nonlinear),
        grid=(rows2 // TR,),
        in_specs=[pl.BlockSpec((TR, WC), lambda i: (i, 0)),
                  pl.BlockSpec((1, WC), lambda i: (0, 0)),
                  pl.BlockSpec((1, WC), lambda i: (0, 0))],
        out_specs=pl.BlockSpec((TR, WC), lambda i: (i, 0)),
        out_shape=jax.ShapeDtypeStruct((rows2, WC), jnp.bfloat16),
        compiler_params=cparams,
    )(y2, wide_scale, wide_shift)

    # TODO(synk): when Wo >= 128, fuse this BN/act pass with the pixel-shuffle/NCHW transpose
    # below into one Pallas kernel (lane-dense NCHW stores); at Wo < 128 the bf16 intermediate
    # plus a single fused XLA transpose pass is the cheaper option.
    out4 = out2.reshape(B, H, Wt, Cph_s)[:, :, :W, :Cph]
    out6 = out4.reshape(B, H, W, Sh, Sw, Cout)
    out = jnp.transpose(out6, (0, 5, 1, 3, 2, 4)).reshape(B, Cout, Ho, Wo)
    return out.astype(jnp.float32)


# --------------------------------------------------------------------------- reference (pure JAX)
def _reference(x_nchw, skip_nchw, params, *, kernel_size, stride, dilation,
               nonlinear='relu', eps=1e-5):
    Kh, Kw = _pair(kernel_size)
    Sh, Sw = _pair(stride)
    Dh, Dw = _pair(dilation)
    if skip_nchw is not None:
        x_nchw = jnp.concatenate([x_nchw, skip_nchw], axis=1)

    Kh_eff, Kw_eff = (Kh - 1) * Dh + 1, (Kw - 1) * Dw + 1
    ph, pw = Kh_eff - Sh, Kw_eff - Sw
    pt, plft = ph // 2, pw // 2
    pb, prgt = ph - pt, pw - plft

    x = jnp.transpose(x_nchw, (0, 2, 3, 1)).astype(jnp.float32)
    wflip = jnp.flip(jnp.transpose(params['weight'], (2, 3, 0, 1)), axis=(0, 1)).astype(jnp.float32)
    conv = jax.lax.conv_general_dilated(
        x, wflip, window_strides=(1, 1),
        padding=(((Kh - 1) * Dh - pt, (Kh - 1) * Dh - pb),
                 ((Kw - 1) * Dw - plft, (Kw - 1) * Dw - prgt)),
        lhs_dilation=(Sh, Sw), rhs_dilation=(Dh, Dw),
        dimension_numbers=('NHWC', 'HWIO', 'NHWC'),
        precision=jax.lax.Precision.HIGHEST)
    conv = conv + params['bias'].reshape(1, 1, 1, -1)
    mean = conv.mean(axis=(0, 1, 2), keepdims=True)
    var = jnp.square(conv - mean).mean(axis=(0, 1, 2), keepdims=True)
    y = (conv - mean) * jax.lax.rsqrt(var + eps)
    y = y * params['gamma'].reshape(1, 1, 1, -1) + params['beta'].reshape(1, 1, 1, -1)
    y = jnp.maximum(y, 0.0) if nonlinear == 'relu' else jax.nn.sigmoid(y)
    return jnp.transpose(y, (0, 3, 1, 2))


# --------------------------------------------------------------------------- main
if __name__ == "__main__":
    # DecoderBlock2d(in_channels=8, out_channels=8, kernel_size=4, stride=2, dilation=1)
    B, C1, C2, H, W = 2, 4, 4, 8, 8
    Cin, Cout, Ksz, Str, Dil = C1 + C2, 8, 4, 2, 1

    key = jax.random.PRNGKey(0)
    kx, ks, kw, kb, kg, kbt = jax.random.split(key, 6)
    x = jax.random.normal(kx, (B, C1, H, W), jnp.float32)
    skip = jax.random.normal(ks, (B, C2, H, W), jnp.float32)
    params = {
        'weight': 0.1 * jax.random.normal(kw, (Cin, Cout, Ksz, Ksz), jnp.float32),
        'bias':   0.1 * jax.random.normal(kb, (Cout,), jnp.float32),
        'gamma':  1.0 + 0.1 * jax.random.normal(kg, (Cout,), jnp.float32),
        'beta':   0.1 * jax.random.normal(kbt, (Cout,), jnp.float32),
    }

    fwd = jax.jit(functools.partial(decoder_block_2d, kernel_size=Ksz, stride=Str,
                                    dilation=Dil, nonlinear='relu'))
    out = jax.block_until_ready(fwd(x, skip, params))

    ref = _reference(x, skip, params, kernel_size=Ksz, stride=Str, dilation=Dil,
                     nonlinear='relu')
    assert out.shape == (B, Cout, H * Str, W * Str), out.shape
    max_err = float(jnp.max(jnp.abs(out - ref)))
    assert max_err < 5e-2, f"mismatch vs reference, max abs err = {max_err}"

    print("KERNEL_OK")
</pallas_src>

<mosaic_0001>
module attributes {stable_mosaic.version = 11 : i64} {
  func.func @_bn_act_kernel(%arg0: i32, %arg1: memref<8x2048xbf16, #tpu.memory_space<vmem>>, %arg2: memref<1x2048xf32, #tpu.memory_space<vmem>>, %arg3: memref<1x2048xf32, #tpu.memory_space<vmem>>, %arg4: memref<8x2048xbf16, #tpu.memory_space<vmem>>) attributes {dimension_semantics = [#tpu.dimension_semantics<parallel>], iteration_bounds = array<i64: 2>, scalar_prefetch = 0 : i64, scratch_operands = 0 : i64, tpu.core_type = #tpu.core_type<tc>, window_params = [{transform_indices = @transform_0, window_bounds = array<i64: 8, 2048>}, {pipeline_mode = #tpu.pipeline_mode<synchronous>, transform_indices = @transform_1, window_bounds = array<i64: 1, 2048>}, {pipeline_mode = #tpu.pipeline_mode<synchronous>, transform_indices = @transform_2, window_bounds = array<i64: 1, 2048>}, {transform_indices = @transform_3, window_bounds = array<i64: 8, 2048>}]} {
    %c0 = arith.constant 0 : index
    %c0_0 = arith.constant 0 : index
    %0 = vector.load %arg1[%c0, %c0_0] : memref<8x2048xbf16, #tpu.memory_space<vmem>>, vector<8x2048xbf16>
    %1 = arith.extf %0 : vector<8x2048xbf16> to vector<8x2048xf32>
    %c0_1 = arith.constant 0 : index
    %c0_2 = arith.constant 0 : index
    %2 = vector.load %arg2[%c0_1, %c0_2] : memref<1x2048xf32, #tpu.memory_space<vmem>>, vector<1x2048xf32>
    %3 = vector.broadcast %2 : vector<1x2048xf32> to vector<8x2048xf32>
    %4 = arith.mulf %1, %3 : vector<8x2048xf32>
    %c0_3 = arith.constant 0 : index
    %c0_4 = arith.constant 0 : index
    %5 = vector.load %arg3[%c0_3, %c0_4] : memref<1x2048xf32, #tpu.memory_space<vmem>>, vector<1x2048xf32>
    %6 = vector.broadcast %5 : vector<1x2048xf32> to vector<8x2048xf32>
    %7 = arith.addf %4, %6 : vector<8x2048xf32>
    %cst = arith.constant 0.000000e+00 : f32
    %8 = vector.broadcast %cst : f32 to vector<8x2048xf32>
    %9 = arith.maximumf %7, %8 : vector<8x2048xf32>
    %10 = arith.truncf %9 : vector<8x2048xf32> to vector<8x2048xbf16>
    %c0_5 = arith.constant 0 : index
    %c0_6 = arith.constant 0 : index
    %11 = vector.load %arg4[%c0_5, %c0_6] : memref<8x2048xbf16, #tpu.memory_space<vmem>>, vector<8x2048xbf16>
    tpu.vector_store %arg4[%c0_5, %c0_6], %10 {strides = array<i32>} : memref<8x2048xbf16, #tpu.memory_space<vmem>>, vector<8x2048xbf16>,
    return
  }
  func.func @transform_0(%arg0: i32) -> (i32, i32) {
    %c0_i32 = arith.constant 0 : i32
    %c0_i32_0 = arith.constant 0 : i32
    return %arg0, %c0_i32 : i32, i32
  }
  func.func @transform_1(%arg0: i32) -> (i32, i32) {
    %c0_i32 = arith.constant 0 : i32
    %c0_i32_0 = arith.constant 0 : i32
    %c0_i32_1 = arith.constant 0 : i32
    return %c0_i32, %c0_i32_0 : i32, i32
  }
  func.func @transform_2(%arg0: i32) -> (i32, i32) {
    %c0_i32 = arith.constant 0 : i32
    %c0_i32_0 = arith.constant 0 : i32
    %c0_i32_1 = arith.constant 0 : i32
    return %c0_i32, %c0_i32_0 : i32, i32
  }
  func.func @transform_3(%arg0: i32) -> (i32, i32) {
    %c0_i32 = arith.constant 0 : i32
    %c0_i32_0 = arith.constant 0 : i32
    return %arg0, %c0_i32 : i32, i32
  }
}

module attributes {stable_mosaic.version = 11 : i64} {
  func.func @_conv_stats_kernel(%arg0: i32, %arg1: memref<1x10x18x8xbf16, #tpu.memory_space<vmem>>, %arg2: memref<9x8x128xbf16, #tpu.memory_space<vmem>>, %arg3: memref<128x128xbf16, #tpu.memory_space<vmem>>, %arg4: memref<1x2x128xf32, #tpu.memory_space<vmem>>) attributes {dimension_semantics = [#tpu.dimension_semantics<parallel>], iteration_bounds = array<i64: 2>, scalar_prefetch = 0 : i64, scratch_operands = 0 : i64, tpu.core_type = #tpu.core_type<tc>, window_params = [{transform_indices = @transform_0, window_bounds = array<i64: 1, 10, 18, 8>}, {pipeline_mode = #tpu.pipeline_mode<synchronous>, transform_indices = @transform_1, window_bounds = array<i64: 9, 8, 128>}, {transform_indices = @transform_2, window_bounds = array<i64: 128, 128>}, {transform_indices = @transform_3, window_bounds = array<i64: 1, 2, 128>}]} {
    %c0 = arith.constant 0 : index
    %c0_0 = arith.constant 0 : index
    %c0_1 = arith.constant 0 : index
    %c0_2 = arith.constant 0 : index
    %0 = vector.load %arg1[%c0, %c0_0, %c0_1, %c0_2] : memref<1x10x18x8xbf16, #tpu.memory_space<vmem>>, vector<1x8x16x8xbf16>
    %1 = vector.shape_cast %0 : vector<1x8x16x8xbf16> to vector<8x16x8xbf16>
    %2 = vector.shape_cast %1 : vector<8x16x8xbf16> to vector<128x8xbf16>
    %c0_3 = arith.constant 0 : index
    %c0_4 = arith.constant 0 : index
    %c0_5 = arith.constant 0 : index
    %3 = vector.load %arg2[%c0_3, %c0_4, %c0_5] : memref<9x8x128xbf16, #tpu.memory_space<vmem>>, vector<1x8x128xbf16>
    %4 = vector.shape_cast %3 : vector<1x8x128xbf16> to vector<8x128xbf16>
    %cst = arith.constant dense<0.000000e+00> : vector<128x128xf32>
    %5 = tpu.matmul %2, %4, %cst {dimension_numbers = #tpu.dot_dimension_numbers<[1], [0], [0], [1], [0, 0, 1, 1], [], []>} : vector<128x8xbf16>, vector<8x128xbf16>, vector<128x128xf32> -> vector<128x128xf32>
    %c0_6 = arith.constant 0 : index
    %c0_7 = arith.constant 0 : index
    %c1 = arith.constant 1 : index
    %c0_8 = arith.constant 0 : index
    %6 = vector.load %arg1[%c0_6, %c0_7, %c1, %c0_8] : memref<1x10x18x8xbf16, #tpu.memory_space<vmem>>, vector<1x8x16x8xbf16>
    %7 = vector.shape_cast %6 : vector<1x8x16x8xbf16> to vector<8x16x8xbf16>
    %8 = vector.shape_cast %7 : vector<8x16x8xbf16> to vector<128x8xbf16>
    %c1_9 = arith.constant 1 : index
    %c0_10 = arith.constant 0 : index
    %c0_11 = arith.constant 0 : index
    %9 = vector.load %arg2[%c1_9, %c0_10, %c0_11] : memref<9x8x128xbf16, #tpu.memory_space<vmem>>, vector<1x8x128xbf16>
    %10 = vector.shape_cast %9 : vector<1x8x128xbf16> to vector<8x128xbf16>
    %cst_12 = arith.constant dense<0.000000e+00> : vector<128x128xf32>
    %11 = tpu.matmul %8, %10, %cst_12 {dimension_numbers = #tpu.dot_dimension_numbers<[1], [0], [0], [1], [0, 0, 1, 1], [], []>} : vector<128x8xbf16>, vector<8x128xbf16>, vector<128x128xf32> -> vector<128x128xf32>
    %12 = arith.addf %5, %11 : vector<128x128xf32>
    %c0_13 = arith.constant 0 : index
    %c0_14 = arith.constant 0 : index
    %c2 = arith.constant 2 : index
    %c0_15 = arith.constant 0 : index
    %13 = vector.load %arg1[%c0_13, %c0_14, %c2, %c0_15] : memref<1x10x18x8xbf16, #tpu.memory_space<vmem>>, vector<1x8x16x8xbf16>
    %14 = vector.shape_cast %13 : vector<1x8x16x8xbf16> to vector<8x16x8xbf16>
    %15 = vector.shape_cast %14 : vector<8x16x8xbf16> to vector<128x8xbf16>
    %c2_16 = arith.constant 2 : index
    %c0_17 = arith.constant 0 : index
    %c0_18 = arith.constant 0 : index
    %16 = vector.load %arg2[%c2_16, %c0_17, %c0_18] : memref<9x8x128xbf16, #tpu.memory_space<vmem>>, vector<1x8x128xbf16>
    %17 = vector.shape_cast %16 : vector<1x8x128xbf16> to vector<8x128xbf16>
    %cst_19 = arith.constant dense<0.000000e+00> : vector<128x128xf32>
    %18 = tpu.matmul %15, %17, %cst_19 {dimension_numbers = #tpu.dot_dimension_numbers<[1], [0], [0], [1], [0, 0, 1, 1], [], []>} : vector<128x8xbf16>, vector<8x128xbf16>, vector<128x128xf32> -> vector<128x128xf32>
    %19 = arith.addf %12, %18 : vector<128x128xf32>
    %c0_20 = arith.constant 0 : index
    %c1_21 = arith.constant 1 : index
    %c0_22 = arith.constant 0 : index
    %c0_23 = arith.constant 0 : index
    %20 = vector.load %arg1[%c0_20, %c1_21, %c0_22, %c0_23] : memref<1x10x18x8xbf16, #tpu.memory_space<vmem>>, vector<1x8x16x8xbf16>
    %21 = vector.shape_cast %20 : vector<1x8x16x8xbf16> to vector<8x16x8xbf16>
    %22 = vector.shape_cast %21 : vector<8x16x8xbf16> to vector<128x8xbf16>
    %c3 = arith.constant 3 : index
    %c0_24 = arith.constant 0 : index
    %c0_25 = arith.constant 0 : index
    %23 = vector.load %arg2[%c3, %c0_24, %c0_25] : memref<9x8x128xbf16, #tpu.memory_space<vmem>>, vector<1x8x128xbf16>
    %24 = vector.shape_cast %23 : vector<1x8x128xbf16> to vector<8x128xbf16>
    %cst_26 = arith.constant dense<0.000000e+00> : vector<128x128xf32>
    %25 = tpu.matmul %22, %24, %cst_26 {dimension_numbers = #tpu.dot_dimension_numbers<[1], [0], [0], [1], [0, 0, 1, 1], [], []>} : vector<128x8xbf16>, vector<8x128xbf16>, vector<128x128xf32> -> vector<128x128xf32>
    %26 = arith.addf %19, %25 : vector<128x128xf32>
    %c0_27 = arith.constant 0 : index
    %c1_28 = arith.constant 1 : index
    %c1_29 = arith.constant 1 : index
    %c0_30 = arith.constant 0 : index
    %27 = vector.load %arg1[%c0_27, %c1_28, %c1_29, %c0_30] : memref<1x10x18x8xbf16, #tpu.memory_space<vmem>>, vector<1x8x16x8xbf16>
    %28 = vector.shape_cast %27 : vector<1x8x16x8xbf16> to vector<8x16x8xbf16>
    %29 = vector.shape_cast %28 : vector<8x16x8xbf16> to vector<128x8xbf16>
    %c4 = arith.constant 4 : index
    %c0_31 = arith.constant 0 : index
    %c0_32 = arith.constant 0 : index
    %30 = vector.load %arg2[%c4, %c0_31, %c0_32] : memref<9x8x128xbf16, #tpu.memory_space<vmem>>, vector<1x8x128xbf16>
    %31 = vector.shape_cast %30 : vector<1x8x128xbf16> to vector<8x128xbf16>
    %cst_33 = arith.constant dense<0.000000e+00> : vector<128x128xf32>
    %32 = tpu.matmul %29, %31, %cst_33 {dimension_numbers = #tpu.dot_dimension_numbers<[1], [0], [0], [1], [0, 0, 1, 1], [], []>} : vector<128x8xbf16>, vector<8x128xbf16>, vector<128x128xf32> -> vector<128x128xf32>
    %33 = arith.addf %26, %32 : vector<128x128xf32>
    %c0_34 = arith.constant 0 : index
    %c1_35 = arith.constant 1 : index
    %c2_36 = arith.constant 2 : index
    %c0_37 = arith.constant 0 : index
    %34 = vector.load %arg1[%c0_34, %c1_35, %c2_36, %c0_37] : memref<1x10x18x8xbf16, #tpu.memory_space<vmem>>, vector<1x8x16x8xbf16>
    %35 = vector.shape_cast %34 : vector<1x8x16x8xbf16> to vector<8x16x8xbf16>
    %36 = vector.shape_cast %35 : vector<8x16x8xbf16> to vector<128x8xbf16>
    %c5 = arith.constant 5 : index
    %c0_38 = arith.constant 0 : index
    %c0_39 = arith.constant 0 : index
    %37 = vector.load %arg2[%c5, %c0_38, %c0_39] : memref<9x8x128xbf16, #tpu.memory_space<vmem>>, vector<1x8x128xbf16>
    %38 = vector.shape_cast %37 : vector<1x8x128xbf16> to vector<8x128xbf16>
    %cst_40 = arith.constant dense<0.000000e+00> : vector<128x128xf32>
    %39 = tpu.matmul %36, %38, %cst_40 {dimension_numbers = #tpu.dot_dimension_numbers<[1], [0], [0], [1], [0, 0, 1, 1], [], []>} : vector<128x8xbf16>, vector<8x128xbf16>, vector<128x128xf32> -> vector<128x128xf32>
    %40 = arith.addf %33, %39 : vector<128x128xf32>
    %c0_41 = arith.constant 0 : index
    %c2_42 = arith.constant 2 : index
    %c0_43 = arith.constant 0 : index
    %c0_44 = arith.constant 0 : index
    %41 = vector.load %arg1[%c0_41, %c2_42, %c0_43, %c0_44] : memref<1x10x18x8xbf16, #tpu.memory_space<vmem>>, vector<1x8x16x8xbf16>
    %42 = vector.shape_cast %41 : vector<1x8x16x8xbf16> to vector<8x16x8xbf16>
    %43 = vector.shape_cast %42 : vector<8x16x8xbf16> to vector<128x8xbf16>
    %c6 = arith.constant 6 : index
    %c0_45 = arith.constant 0 : index
    %c0_46 = arith.constant 0 : index
    %44 = vector.load %arg2[%c6, %c0_45, %c0_46] : memref<9x8x128xbf16, #tpu.memory_space<vmem>>, vector<1x8x128xbf16>
    %45 = vector.shape_cast %44 : vector<1x8x128xbf16> to vector<8x128xbf16>
    %cst_47 = arith.constant dense<0.000000e+00> : vector<128x128xf32>
    %46 = tpu.matmul %43, %45, %cst_47 {dimension_numbers = #tpu.dot_dimension_numbers<[1], [0], [0], [1], [0, 0, 1, 1], [], []>} : vector<128x8xbf16>, vector<8x128xbf16>, vector<128x128xf32> -> vector<128x128xf32>
    %47 = arith.addf %40, %46 : vector<128x128xf32>
    %c0_48 = arith.constant 0 : index
    %c2_49 = arith.constant 2 : index
    %c1_50 = arith.constant 1 : index
    %c0_51 = arith.constant 0 : index
    %48 = vector.load %arg1[%c0_48, %c2_49, %c1_50, %c0_51] : memref<1x10x18x8xbf16, #tpu.memory_space<vmem>>, vector<1x8x16x8xbf16>
    %49 = vector.shape_cast %48 : vector<1x8x16x8xbf16> to vector<8x16x8xbf16>
    %50 = vector.shape_cast %49 : vector<8x16x8xbf16> to vector<128x8xbf16>
    %c7 = arith.constant 7 : index
    %c0_52 = arith.constant 0 : index
    %c0_53 = arith.constant 0 : index
    %51 = vector.load %arg2[%c7, %c0_52, %c0_53] : memref<9x8x128xbf16, #tpu.memory_space<vmem>>, vector<1x8x128xbf16>
    %52 = vector.shape_cast %51 : vector<1x8x128xbf16> to vector<8x128xbf16>
    %cst_54 = arith.constant dense<0.000000e+00> : vector<128x128xf32>
    %53 = tpu.matmul %50, %52, %cst_54 {dimension_numbers = #tpu.dot_dimension_numbers<[1], [0], [0], [1], [0, 0, 1, 1], [], []>} : vector<128x8xbf16>, vector<8x128xbf16>, vector<128x128xf32> -> vector<128x128xf32>
    %54 = arith.addf %47, %53 : vector<128x128xf32>
    %c0_55 = arith.constant 0 : index
    %c2_56 = arith.constant 2 : index
    %c2_57 = arith.constant 2 : index
    %c0_58 = arith.constant 0 : index
    %55 = vector.load %arg1[%c0_55, %c2_56, %c2_57, %c0_58] : memref<1x10x18x8xbf16, #tpu.memory_space<vmem>>, vector<1x8x16x8xbf16>
    %56 = vector.shape_cast %55 : vector<1x8x16x8xbf16> to vector<8x16x8xbf16>
    %57 = vector.shape_cast %56 : vector<8x16x8xbf16> to vector<128x8xbf16>
    %c8 = arith.constant 8 : index
    %c0_59 = arith.constant 0 : index
    %c0_60 = arith.constant 0 : index
    %58 = vector.load %arg2[%c8, %c0_59, %c0_60] : memref<9x8x128xbf16, #tpu.memory_space<vmem>>, vector<1x8x128xbf16>
    %59 = vector.shape_cast %58 : vector<1x8x128xbf16> to vector<8x128xbf16>
    %cst_61 = arith.constant dense<0.000000e+00> : vector<128x128xf32>
    %60 = tpu.matmul %57, %59, %cst_61 {dimension_numbers = #tpu.dot_dimension_numbers<[1], [0], [0], [1], [0, 0, 1, 1], [], []>} : vector<128x8xbf16>, vector<8x128xbf16>, vector<128x128xf32> -> vector<128x128xf32>
    %61 = arith.addf %54, %60 : vector<128x128xf32>
    %62 = arith.truncf %61 : vector<128x128xf32> to vector<128x128xbf16>
    %c0_62 = arith.constant 0 : index
    %c0_63 = arith.constant 0 : index
    %63 = vector.load %arg3[%c0_62, %c0_63] : memref<128x128xbf16, #tpu.memory_space<vmem>>, vector<128x128xbf16>
    tpu.vector_store %arg3[%c0_62, %c0_63], %62 {strides = array<i32>} : memref<128x128xbf16, #tpu.memory_space<vmem>>, vector<128x128xbf16>,
    %64 = tpu.iota {dimensions = array<i32: 0>} : vector<128x1xi32>
    %c16_i32 = arith.constant 16 : i32
    %c0_i32 = arith.constant 0 : i32
    %65 = arith.cmpi eq, %c16_i32, %c0_i32 : i32
    %c1_i32 = arith.constant 1 : i32
    %66 = arith.select %65, %c1_i32, %c16_i32 : i32
    %67 = vector.broadcast %66 : i32 to vector<128x1xi32>
    %68 = arith.remsi %64, %67 : vector<128x1xi32>
    %c0_i32_64 = arith.constant 0 : i32
    %69 = vector.broadcast %c0_i32_64 : i32 to vector<128x1xi32>
    %70 = arith.cmpi ne, %68, %69 : vector<128x1xi32>
    %c0_i32_65 = arith.constant 0 : i32
    %71 = vector.broadcast %c0_i32_65 : i32 to vector<128x1xi32>
    %72 = arith.cmpi slt, %68, %71 : vector<128x1xi32>
    %c0_i32_66 = arith.constant 0 : i32
    %73 = arith.cmpi slt, %66, %c0_i32_66 : i32
    %74 = vector.broadcast %73 : i1 to vector<128x1xi1>
    %75 = vector.broadcast %74 : vector<128x1xi1> to vector<128x1xi1>
    %76 = arith.xori %72, %75 : vector<128x1xi1>
    %77 = arith.andi %76, %70 : vector<128x1xi1>
    %78 = vector.broadcast %66 : i32 to vector<128x1xi32>
    %79 = arith.addi %68, %78 : vector<128x1xi32>
    %80 = arith.select %77, %79, %68 : vector<128x1xi1>, vector<128x1xi32>
    %c8_i32 = arith.constant 8 : i32
    %81 = vector.broadcast %c8_i32 : i32 to vector<128x1xi32>
    %82 = arith.cmpi slt, %80, %81 : vector<128x1xi32>
    %cst_67 = arith.constant 0.000000e+00 : f32
    %83 = vector.shape_cast %82 : vector<128x1xi1> to vector<128x1xi1>
    %84 = vector.broadcast %83 : vector<128x1xi1> to vector<128x128xi1>
    %85 = vector.broadcast %cst_67 : f32 to vector<128x128xf32>
    %86 = arith.select %84, %61, %85 : vector<128x128xi1>, vector<128x128xf32>
    %cst_68 = arith.constant dense<0.000000e+00> : vector<128xf32>
    %87 = vector.multi_reduction <add>, %86, %cst_68 [0] : vector<128x128xf32> to vector<128xf32>
    %88 = vector.shape_cast %87 : vector<128xf32> to vector<1x128xf32>
    %c0_69 = arith.constant 0 : index
    %c0_70 = arith.constant 0 : index
    %c0_71 = arith.constant 0 : index
    %89 = vector.load %arg4[%c0_69, %c0_70, %c0_71] : memref<1x2x128xf32, #tpu.memory_space<vmem>>, vector<1x1x128xf32>
    %90 = vector.shape_cast %89 : vector<1x1x128xf32> to vector<1x128xf32>
    %91 = vector.shape_cast %88 : vector<1x128xf32> to vector<1x1x128xf32>
    tpu.vector_store %arg4[%c0_69, %c0_70, %c0_71], %91 {strides = array<i32>} : memref<1x2x128xf32, #tpu.memory_space<vmem>>, vector<1x1x128xf32>,
    %92 = arith.mulf %86, %86 : vector<128x128xf32>
    %cst_72 = arith.constant dense<0.000000e+00> : vector<128xf32>
    %93 = vector.multi_reduction <add>, %92, %cst_72 [0] : vector<128x128xf32> to vector<128xf32>
    %94 = vector.shape_cast %93 : vector<128xf32> to vector<1x128xf32>
    %c0_73 = arith.constant 0 : index
    %c1_74 = arith.constant 1 : index
    %c0_75 = arith.constant 0 : index
    %95 = vector.load %arg4[%c0_73, %c1_74, %c0_75] : memref<1x2x128xf32, #tpu.memory_space<vmem>>, vector<1x1x128xf32>
    %96 = vector.shape_cast %95 : vector<1x1x128xf32> to vector<1x128xf32>
    %97 = vector.shape_cast %94 : vector<1x128xf32> to vector<1x1x128xf32>
    tpu.vector_store %arg4[%c0_73, %c1_74, %c0_75], %97 {strides = array<i32>} : memref<1x2x128xf32, #tpu.memory_space<vmem>>, vector<1x1x128xf32>,
    return
  }
  func.func @transform_0(%arg0: i32) -> (i32, i32, i32, i32) {
    %c0_i32 = arith.constant 0 : i32
    %c0_i32_0 = arith.constant 0 : i32
    %c0_i32_1 = arith.constant 0 : i32
    %c0_i32_2 = arith.constant 0 : i32
    return %arg0, %c0_i32, %c0_i32_0, %c0_i32_1 : i32, i32, i32, i32
  }
  func.func @transform_1(%arg0: i32) -> (i32, i32, i32) {
    %c0_i32 = arith.constant 0 : i32
    %c0_i32_0 = arith.constant 0 : i32
    %c0_i32_1 = arith.constant 0 : i32
    %c0_i32_2 = arith.constant 0 : i32
    return %c0_i32, %c0_i32_0, %c0_i32_1 : i32, i32, i32
  }
  func.func @transform_2(%arg0: i32) -> (i32, i32) {
    %c0_i32 = arith.constant 0 : i32
    %c0_i32_0 = arith.constant 0 : i32
    return %arg0, %c0_i32 : i32, i32
  }
  func.func @transform_3(%arg0: i32) -> (i32, i32, i32) {
    %c0_i32 = arith.constant 0 : i32
    %c0_i32_0 = arith.constant 0 : i32
    %c0_i32_1 = arith.constant 0 : i32
    return %arg0, %c0_i32, %c0_i32_0 : i32, i32, i32
  }
}

</mosaic_0001>

<llo_original>
// kernel: tile.28
$region0: #{tile.28}
  #allocation0 [shape = 's32[1]{0}', space=sflag, size = 0x4, scoped, tag = 'scoped memory for tile.28']
  %s0 = inlined_call_operand.vmem [shape: f32[8], index: 0, kind: input, shape index: {}]
  %s1 = inlined_call_operand.vmem [shape: f32[4,8], index: 1, kind: output, shape index: {}]
  // Predicated region
  $region2: #{tile.28} parent=0 // pred_check
    _
  $region3: #{tile.28} parent=0 // pred_check_branch
    %3 = sbr.rel (0) target = $region5
  $region4: #{tile.28} parent=0 // pred_region
    _
  $region5: #{tile.28} parent=0 // pred_fallthru
    _
  %v4 = vld [vmem:[%s0] ss:$0 sm:$0xff]
  %5 = vst [vmem:[%s1] sm:$0xf] %v4

// kernel: tile.29
$region0: #{tile.29}
  %s0 = inlined_call_operand.vmem [shape: f32[4,8], index: 0, kind: input, shape index: {}]
  %s1 = inlined_call_operand.vmem [shape: f32[32], index: 1, kind: output, shape index: {}]
  $region1: #{tile.29} parent=0
    #allocation0 [shape = 'u8[4096]{0}', space=vmem, size = 0x1000, scoped, tag = 'scoped mem for output reshape']
    #allocation1 [shape = 'u8[4096]{0}', space=vmem, size = 0x1000, scoped, tag = 'scoped mem for input reshape']
    %s3 = sshllo.u32 0, 4
    %v4 = vld [vmem:[%s0] sm:%s3]
    %5 = vst [vmem:[#allocation1] sm:%s3] %v4
    %v6 = vld [vmem:[#allocation1] sm:$0x1]
    %vm7 = vcmask 64512
    %8 = vst.msk [vmem:[#allocation0] sm:$0x1] %vm7, %v6
    %s9 = scalar_lea.vmem [#allocation1], 3
    %v10 = vld [vmem:[%s9] sm:$0x1]
    %11 = vrot.lane.b32.xlu0 %v10, 24
    %v12 = vpop.permute.xlu0 %11
    %vm13 = vcmask 261312
    %14 = vst.msk [vmem:[#allocation0] sm:$0x1] %vm13, %v12
    %s15 = scalar_lea.vmem [#allocation1], 2
    %v16 = vld [vmem:[%s15] sm:$0x1]
    %17 = vrot.lane.b32.xlu0 %v16, 16
    %v18 = vpop.permute.xlu0 %17
    %vm19 = vcmask 195712
    %20 = vst.msk [vmem:[#allocation0] sm:$0x1] %vm19, %v18
    %s21 = scalar_lea.vmem [#allocation1], 1
    %v22 = vld [vmem:[%s21] sm:$0x1]
    %23 = vrot.lane.b32.xlu0 %v22, 8
    %v24 = vpop.permute.xlu0 %23
    %vm25 = vcmask 130112
    %26 = vst.msk [vmem:[#allocation0] sm:$0x1] %vm25, %v24
    %s28 = sshllo.u32 0, 1
    %v30 = vld [vmem:[#allocation0] sm:%s28]
    %s31 = sshllo.u32 0, 1
    %32 = vst [vmem:[%s1] sm:%s31] %v30

// kernel: tile.33
$region0: #{tile.33}
  #allocation0 [shape = 's32[1]{0}', space=sflag, size = 0x4, scoped, tag = 'scoped memory for tile.33']
  %s0 = inlined_call_operand.vmem [shape: f32[128], index: 0, kind: input, shape index: {}]
  %s1 = inlined_call_operand.vmem [shape: f32[16,128], index: 1, kind: output, shape index: {}]
  // Predicated region
  $region2: #{tile.33} parent=0 // pred_check
    _
  $region3: #{tile.33} parent=0 // pred_check_branch
    %3 = sbr.rel (0) target = $region5
  $region4: #{tile.33} parent=0 // pred_region
    _
  $region5: #{tile.33} parent=0 // pred_fallthru
    _
  %v4 = vld [vmem:[%s0] ss:$0 sm:$0xff]
  %5 = vst [vmem:[%s1] sm:$0xff] %v4
  %s6 = scalar_lea.vmem %s1, 8
  %7 = vst [vmem:[%s6] sm:$0xff] %v4

// kernel: decoder_block_2d.3
$region0: #{decoder_block_2d.3}
  #allocation0 [shape = 'u32[]', space=smem, size = 0x4, offset = 0x4, fixed_abs, tag = 'smem constant byte address 0x4 - core index']
  #allocation1 [shape = 'u32[144,128]{1,0:T(1,128)}', space=vmem, size = 0x12000, scoped, tag = 'internal scratch']
  %s0 = inlined_call_operand.vmem [shape: bf16[16,2048], index: 0, kind: input, shape index: {}]
  %s1 = inlined_call_operand.vmem [shape: f32[1,2048], index: 1, kind: input, shape index: {}]
  %s2 = inlined_call_operand.vmem [shape: f32[1,2048], index: 2, kind: input, shape index: {}]
  %s3 = inlined_call_operand.vmem [shape: bf16[16,2048], index: 3, kind: output, shape index: {}]
  %s4 = sld [smem:[#allocation0]]
  $region45: #{decoder_block_2d.3} parent=0
    _
  %s6 = ssub.s32 1, %s4
  %s7 = scalar_select 0, %s6, %s4
  loop: start=0, step=1, limit=4
  $region2: #{decoder_block_2d.3} parent=0 // loop_pre_header
    _
  $region3: #{decoder_block_2d.3} parent=0 // loop_header
    %s9 = sphi 0, %s13
    %p10 = scmp.ge.s32.totalorder %s9, 4
    %s19 = sphi 0, %s21
    %s22 = sphi 0, %s19
    %s23 = sphi 0, %s22
    %s39 = sphi 0, %s23
    %s43 = sphi 0, %s43
    %s45 = sphi 0, %s43
    %s46 = sphi 0, %s45
    %s60 = sphi 0, %s46
    %s64 = sphi 0, %s64
    %s66 = sphi 0, %s64
    %s67 = sphi 0, %s66
    %s81 = sphi 0, %s67
    %s87 = sphi 0, %s89
    %s90 = sphi 0, %s87
    %s91 = sphi 0, %s90
    %s107 = sphi 0, %s91
  $region4: #{decoder_block_2d.3} parent=0 // loop_header_branch
    %12 = sbr.rel (%p10) target = $region8
  $region5: #{decoder_block_2d.3} parent=0 // loop_body
    %s14 = ssub.s32 %s9, 1
    %s15 = ssub.s32 %s9, 2
    %s16 = sadd.s32 %s9, 1
    %s17 = ssub.s32 %s9, %s16
    %p18 = scmp.eq.s32.totalorder %s17, 0
    %s20 = sadd.s32 %s19, 1
    %s21 = scalar_select %p18, %s19, %s20
    %p24 = pneg %p18
    %p25 = scmp.eq.s32.totalorder %s9, 1
    %p26 = por %p24, %p25
    %p27 = scmp.ne.s32.totalorder %s19, %s22
    %p28 = scmp.eq.s32.totalorder %s9, 0
    %p29 = por %p27, %p28
    %p30 = scmp.ne.s32.totalorder %s19, %s22
    %p31 = scmp.eq.s32.totalorder %s14, 1
    %p32 = por %p30, %p31
    %p33 = scmp.ne.s32.totalorder %s22, %s23
    %p34 = scmp.eq.s32.totalorder %s14, 0
    %p35 = por %p33, %p34
    %p36 = scmp.ne.s32.totalorder %s22, %s23
    %p37 = scmp.eq.s32.totalorder %s15, 1
    %p38 = por %p36, %p37
    %p40 = scmp.ne.s32.totalorder %s23, %s39
    %p41 = scmp.eq.s32.totalorder %s15, 0
    %p42 = por %p40, %p41
    %s44 = sadd.s32 %s43, 1
    %p47 = scmp.eq.s32.totalorder %s9, 1
    %p48 = scmp.ne.s32.totalorder %s43, %s45
    %p49 = scmp.eq.s32.totalorder %s9, 0
    %p50 = por %p48, %p49
    %p51 = scmp.ne.s32.totalorder %s43, %s45
    %p52 = scmp.eq.s32.totalorder %s14, 1
    %p53 = por %p51, %p52
    %p54 = scmp.ne.s32.totalorder %s45, %s46
    %p55 = scmp.eq.s32.totalorder %s14, 0
    %p56 = por %p54, %p55
    %p57 = scmp.ne.s32.totalorder %s45, %s46
    %p58 = scmp.eq.s32.totalorder %s15, 1
    %p59 = por %p57, %p58
    %p61 = scmp.ne.s32.totalorder %s46, %s60
    %p62 = scmp.eq.s32.totalorder %s15, 0
    %p63 = por %p61, %p62
    %s65 = sadd.s32 %s64, 1
    %p68 = scmp.eq.s32.totalorder %s9, 1
    %p69 = scmp.ne.s32.totalorder %s64, %s66
    %p70 = scmp.eq.s32.totalorder %s9, 0
    %p71 = por %p69, %p70
    %p72 = scmp.ne.s32.totalorder %s64, %s66
    %p73 = scmp.eq.s32.totalorder %s14, 1
    %p74 = por %p72, %p73
    %p75 = scmp.ne.s32.totalorder %s66, %s67
    %p76 = scmp.eq.s32.totalorder %s14, 0
    %p77 = por %p75, %p76
    %p78 = scmp.ne.s32.totalorder %s66, %s67
    %p79 = scmp.eq.s32.totalorder %s15, 1
    %p80 = por %p78, %p79
    %p82 = scmp.ne.s32.totalorder %s67, %s81
    %p83 = scmp.eq.s32.totalorder %s15, 0
    %p84 = por %p82, %p83
    %s85 = ssub.s32 %s9, %s16
    %p86 = scmp.eq.s32.totalorder %s85, 0
    %s88 = sadd.s32 %s87, 1
    %s89 = scalar_select %p86, %s87, %s88
    %p92 = pneg %p86
    %p93 = scmp.eq.s32.totalorder %s9, 1
    %p94 = por %p92, %p93
    %p95 = scmp.ne.s32.totalorder %s87, %s90
    %p96 = scmp.eq.s32.totalorder %s9, 0
    %p97 = por %p95, %p96
    %p98 = scmp.ne.s32.totalorder %s87, %s90
    %p99 = scmp.eq.s32.totalorder %s14, 1
    %p100 = por %p98, %p99
    %p101 = scmp.ne.s32.totalorder %s90, %s91
    %p102 = scmp.eq.s32.totalorder %s14, 0
    %p103 = por %p101, %p102
    %p104 = scmp.ne.s32.totalorder %s90, %s91
    %p105 = scmp.eq.s32.totalorder %s15, 1
    %p106 = por %p104, %p105
    %p108 = scmp.ne.s32.totalorder %s91, %s107
    %p109 = scmp.eq.s32.totalorder %s15, 0
    %p110 = por %p108, %p109
    %p111 = scmp.le.s32.totalorder 1, %s9
    %p112 = scmp.lt.s32.totalorder %s9, 3
    %p113 = pnand %p111, %p112
    %p114 = pneg %p113
    // Predicated region
    $region9: #{decoder_block_2d.3} parent=5 // pred_check
      _
    $region10: #{decoder_block_2d.3} parent=5 // pred_check_branch
      %116 = sbr.rel (%p113) target = $region12
    $region11: #{decoder_block_2d.3} parent=5 // pred_region
      %s117 = ssub.s32 %s9, 1
      // Predicated region
      $region13: #{decoder_block_2d.3} parent=11 // pred_check
        %p118 = pneg %p56
      $region14: #{decoder_block_2d.3} parent=11 // pred_check_branch
        %120 = sbr.rel (%p118) target = $region16
      $region15: #{decoder_block_2d.3} parent=11 // pred_region
        _
      $region16: #{decoder_block_2d.3} parent=11 // pred_fallthru
        _
      // Predicated region
      $region17: #{decoder_block_2d.3} parent=11 // pred_check
        %p121 = pneg %p77
      $region18: #{decoder_block_2d.3} parent=11 // pred_check_branch
        %123 = sbr.rel (%p121) target = $region20
      $region19: #{decoder_block_2d.3} parent=11 // pred_region
        _
      $region20: #{decoder_block_2d.3} parent=11 // pred_fallthru
        _
    $region12: #{decoder_block_2d.3} parent=5 // pred_fallthru
      _
    %p124 = scmp.lt.s32.totalorder %s9, 2
    // Predicated region
    $region21: #{decoder_block_2d.3} parent=5 // pred_check
      %p125 = pneg %p124
    $region22: #{decoder_block_2d.3} parent=5 // pred_check_branch
      %127 = sbr.rel (%p125) target = $region24
    $region23: #{decoder_block_2d.3} parent=5 // pred_region
      // Predicated region
      $region25: #{decoder_block_2d.3} parent=23 // pred_check
        %p128 = pneg %p29
      $region26: #{decoder_block_2d.3} parent=23 // pred_check_branch
        %130 = sbr.rel (%p128) target = $region28
      $region27: #{decoder_block_2d.3} parent=23 // pred_region
        %p131 = scmp.lt.s32.totalorder %s9, 1
        %s132 = scalar_select %p131, %s9, 1
        %s133 = smul.addr %s132, 16
        %s134 = smul.addr %s133, 4
        %s135 = scalar_lea.vmem %s0, %s134
      $region28: #{decoder_block_2d.3} parent=23 // pred_fallthru
        _
    $region24: #{decoder_block_2d.3} parent=5 // pred_fallthru
      _
    %p136 = scmp.le.s32.totalorder 1, %s9
    %p137 = scmp.lt.s32.totalorder %s9, 3
    %p138 = pnand %p136, %p137
    %p139 = pneg %p138
    // Predicated region
    $region29: #{decoder_block_2d.3} parent=5 // pred_check
      _
    $region30: #{decoder_block_2d.3} parent=5 // pred_check_branch
      %141 = sbr.rel (%p138) target = $region32
    $region31: #{decoder_block_2d.3} parent=5 // pred_region
      %s142 = ssub.s32 %s9, 1
      %p143 = scmp.lt.s32.totalorder %s14, 1
      %s144 = scalar_select %p143, %s14, 1
      %s145 = smul.addr %s144, 16
      %s146 = smul.addr %s145, 4
      %s147 = scalar_lea.vmem %s0, %s146
      %p148 = pneg %p35
      %p149 = pneg %p32
      %p150 = pneg %p56
      %p151 = pneg %p53
      %p152 = pneg %p77
      %p153 = pneg %p74
      %p154 = pneg %p103
      %p155 = pneg %p100
      %p156 = scmp.lt.s32.totalorder %s14, 1
      %s157 = scalar_select %p156, %s14, 1
      %s158 = smul.addr %s157, 16
      %s159 = smul.addr %s158, 4
      %s160 = scalar_lea.vmem %s3, %s159
      %p161 = scmp.lt.s32.totalorder %s14, 1
      %s162 = scalar_select %p161, %s14, 1
      %s163 = smul.addr %s162, 16
      %s164 = smul.addr %s163, 4
      %s165 = scalar_lea.vmem %s0, %s164
      %p166 = scmp.lt.s32.totalorder %s14, 1
      %s167 = scalar_select %p166, %s14, 1
      %s168 = smul.addr %s167, 16
      %s169 = smul.addr %s168, 4
      %s170 = scalar_lea.vmem %s3, %s169
      %v171 = vld [vmem:[%s165] sm:$0xff]
      %v172 = vld [vmem:[%s165 + $0x8] sm:$0xff]
      %v173 = vld [vmem:[%s165 + $0x10] sm:$0xff]
      %v174 = vld [vmem:[%s165 + $0x18] sm:$0xff]
      %v175 = vld [vmem:[%s165 + $0x20] sm:$0xff]
      %v176 = vld [vmem:[%s165 + $0x28] sm:$0xff]
      %v177 = vld [vmem:[%s165 + $0x30] sm:$0xff]
      %v178 = vld [vmem:[%s165 + $0x38] sm:$0xff]
      %v179 = vunpack.c.l.bf16 %v171
      %v180 = vunpack.c.h.bf16 %v171
      %v181 = vunpack.c.l.bf16 %v172
      %v182 = vunpack.c.h.bf16 %v172
      %v183 = vunpack.c.l.bf16 %v173
      %v184 = vunpack.c.h.bf16 %v173
      %v185 = vunpack.c.l.bf16 %v174
      %v186 = vunpack.c.h.bf16 %v174
      %v187 = vunpack.c.l.bf16 %v175
      %v188 = vunpack.c.h.bf16 %v175
      %v189 = vunpack.c.l.bf16 %v176
      %v190 = vunpack.c.h.bf16 %v176
      %v191 = vunpack.c.l.bf16 %v177
      %v192 = vunpack.c.h.bf16 %v177
      %v193 = vunpack.c.l.bf16 %v178
      %v194 = vunpack.c.h.bf16 %v178
      %v195 = vld [vmem:[%s1] sm:$0xff]
      %v196 = vld [vmem:[%s1 + $0x8] sm:$0xff]
      %v199 = vlaneseq
      %v200 = vshrl.u32 %v199, 7
      %v201 = vsub.s32 0, %v200
      %v202 = vrot.slane %v195, %v201
      %v203 = vlaneseq
      %v204 = vshrl.u32 %v203, 7
      %v205 = vsub.s32 1, %v204
      %v206 = vrot.slane %v195, %v205
      %v207 = vlaneseq
      %v208 = vshrl.u32 %v207, 7
      %v209 = vsub.s32 2, %v208
      %v210 = vrot.slane %v195, %v209
      %v211 = vlaneseq
      %v212 = vshrl.u32 %v211, 7
      %v213 = vsub.s32 3, %v212
      %v214 = vrot.slane %v195, %v213
      %v215 = vlaneseq
      %v216 = vshrl.u32 %v215, 7
      %v217 = vsub.s32 4, %v216
      %v218 = vrot.slane %v195, %v217
      %v219 = vlaneseq
      %v220 = vshrl.u32 %v219, 7
      %v221 = vsub.s32 5, %v220
      %v222 = vrot.slane %v195, %v221
      %v223 = vlaneseq
      %v224 = vshrl.u32 %v223, 7
      %v225 = vsub.s32 6, %v224
      %v226 = vrot.slane %v195, %v225
      %v227 = vlaneseq
      %v228 = vshrl.u32 %v227, 7
      %v229 = vsub.s32 7, %v228
      %v230 = vrot.slane %v195, %v229
      %v231 = vlaneseq
      %v232 = vshrl.u32 %v231, 7
      %v233 = vsub.s32 0, %v232
      %v234 = vrot.slane %v196, %v233
      %v235 = vlaneseq
      %v236 = vshrl.u32 %v235, 7
      %v237 = vsub.s32 1, %v236
      %v238 = vrot.slane %v196, %v237
      %v239 = vlaneseq
      %v240 = vshrl.u32 %v239, 7
      %v241 = vsub.s32 2, %v240
      %v242 = vrot.slane %v196, %v241
      %v243 = vlaneseq
      %v244 = vshrl.u32 %v243, 7
      %v245 = vsub.s32 3, %v244
      %v246 = vrot.slane %v196, %v245
      %v247 = vlaneseq
      %v248 = vshrl.u32 %v247, 7
      %v249 = vsub.s32 4, %v248
      %v250 = vrot.slane %v196, %v249
      %v251 = vlaneseq
      %v252 = vshrl.u32 %v251, 7
      %v253 = vsub.s32 5, %v252
      %v254 = vrot.slane %v196, %v253
      %v255 = vlaneseq
      %v256 = vshrl.u32 %v255, 7
      %v257 = vsub.s32 6, %v256
      %v258 = vrot.slane %v196, %v257
      %v259 = vlaneseq
      %v260 = vshrl.u32 %v259, 7
      %v261 = vsub.s32 7, %v260
      %v262 = vrot.slane %v196, %v261
      %v279 = vmul.f32 %v179, %v202
      %v280 = vmul.f32 %v180, %v206
      %v281 = vmul.f32 %v181, %v210
      %v282 = vmul.f32 %v182, %v214
      %v283 = vmul.f32 %v183, %v218
      %v284 = vmul.f32 %v184, %v222
      %v285 = vmul.f32 %v185, %v226
      %v286 = vmul.f32 %v186, %v230
      %v287 = vmul.f32 %v187, %v234
      %v288 = vmul.f32 %v188, %v238
      %v289 = vmul.f32 %v189, %v242
      %v290 = vmul.f32 %v190, %v246
      %v291 = vmul.f32 %v191, %v250
      %v292 = vmul.f32 %v192, %v254
      %v293 = vmul.f32 %v193, %v258
      %v294 = vmul.f32 %v194, %v262
      %v295 = vld [vmem:[%s2] sm:$0xff]
      %v296 = vld [vmem:[%s2 + $0x8] sm:$0xff]
      %v299 = vlaneseq
      %v300 = vshrl.u32 %v299, 7
      %v301 = vsub.s32 0, %v300
      %v302 = vrot.slane %v295, %v301
      %v303 = vlaneseq
      %v304 = vshrl.u32 %v303, 7
      %v305 = vsub.s32 1, %v304
      %v306 = vrot.slane %v295, %v305
      %v307 = vlaneseq
      %v308 = vshrl.u32 %v307, 7
      %v309 = vsub.s32 2, %v308
      %v310 = vrot.slane %v295, %v309
      %v311 = vlaneseq
      %v312 = vshrl.u32 %v311, 7
      %v313 = vsub.s32 3, %v312
      %v314 = vrot.slane %v295, %v313
      %v315 = vlaneseq
      %v316 = vshrl.u32 %v315, 7
      %v317 = vsub.s32 4, %v316
      %v318 = vrot.slane %v295, %v317
      %v319 = vlaneseq
      %v320 = vshrl.u32 %v319, 7
      %v321 = vsub.s32 5, %v320
      %v322 = vrot.slane %v295, %v321
      %v323 = vlaneseq
      %v324 = vshrl.u32 %v323, 7
      %v325 = vsub.s32 6, %v324
      %v326 = vrot.slane %v295, %v325
      %v327 = vlaneseq
      %v328 = vshrl.u32 %v327, 7
      %v329 = vsub.s32 7, %v328
      %v330 = vrot.slane %v295, %v329
      %v331 = vlaneseq
      %v332 = vshrl.u32 %v331, 7
      %v333 = vsub.s32 0, %v332
      %v334 = vrot.slane %v296, %v333
      %v335 = vlaneseq
      %v336 = vshrl.u32 %v335, 7
      %v337 = vsub.s32 1, %v336
      %v338 = vrot.slane %v296, %v337
      %v339 = vlaneseq
      %v340 = vshrl.u32 %v339, 7
      %v341 = vsub.s32 2, %v340
      %v342 = vrot.slane %v296, %v341
      %v343 = vlaneseq
      %v344 = vshrl.u32 %v343, 7
      %v345 = vsub.s32 3, %v344
      %v346 = vrot.slane %v296, %v345
      %v347 = vlaneseq
      %v348 = vshrl.u32 %v347, 7
      %v349 = vsub.s32 4, %v348
      %v350 = vrot.slane %v296, %v349
      %v351 = vlaneseq
      %v352 = vshrl.u32 %v351, 7
      %v353 = vsub.s32 5, %v352
      %v354 = vrot.slane %v296, %v353
      %v355 = vlaneseq
      %v356 = vshrl.u32 %v355, 7
      %v357 = vsub.s32 6, %v356
      %v358 = vrot.slane %v296, %v357
      %v359 = vlaneseq
      %v360 = vshrl.u32 %v359, 7
      %v361 = vsub.s32 7, %v360
      %v362 = vrot.slane %v296, %v361
      %v379 = vadd.f32 %v279, %v302
      %v380 = vadd.f32 %v280, %v306
      %v381 = vadd.f32 %v281, %v310
      %v382 = vadd.f32 %v282, %v314
      %v383 = vadd.f32 %v283, %v318
      %v384 = vadd.f32 %v284, %v322
      %v385 = vadd.f32 %v285, %v326
      %v386 = vadd.f32 %v286, %v330
      %v387 = vadd.f32 %v287, %v334
      %v388 = vadd.f32 %v288, %v338
      %v389 = vadd.f32 %v289, %v342
      %v390 = vadd.f32 %v290, %v346
      %v391 = vadd.f32 %v291, %v350
      %v392 = vadd.f32 %v292, %v354
      %v393 = vadd.f32 %v293, %v358
      %v394 = vadd.f32 %v294, %v362
      %v395 = vmax.f32 %v379, 0.0
      %v396 = vmax.f32 %v380, 0.0
      %v397 = vmax.f32 %v381, 0.0
      %v398 = vmax.f32 %v382, 0.0
      %v399 = vmax.f32 %v383, 0.0
      %v400 = vmax.f32 %v384, 0.0
      %v401 = vmax.f32 %v385, 0.0
      %v402 = vmax.f32 %v386, 0.0
      %v403 = vmax.f32 %v387, 0.0
      %v404 = vmax.f32 %v388, 0.0
      %v405 = vmax.f32 %v389, 0.0
      %v406 = vmax.f32 %v390, 0.0
      %v407 = vmax.f32 %v391, 0.0
      %v408 = vmax.f32 %v392, 0.0
      %v409 = vmax.f32 %v393, 0.0
      %v410 = vmax.f32 %v394, 0.0
      %v411 = vpack.c.bf16 %v395, %v395
      %v412 = vpack.c.bf16 %v396, %v396
      %v413 = vpack.c.bf16 %v397, %v397
      %v414 = vpack.c.bf16 %v398, %v398
      %v415 = vpack.c.bf16 %v399, %v399
      %v416 = vpack.c.bf16 %v400, %v400
      %v417 = vpack.c.bf16 %v401, %v401
      %v418 = vpack.c.bf16 %v402, %v402
      %v419 = vpack.c.bf16 %v403, %v403
      %v420 = vpack.c.bf16 %v404, %v404
      %v421 = vpack.c.bf16 %v405, %v405
      %v422 = vpack.c.bf16 %v406, %v406
      %v423 = vpack.c.bf16 %v407, %v407
      %v424 = vpack.c.bf16 %v408, %v408
      %v425 = vpack.c.bf16 %v409, %v409
      %v426 = vpack.c.bf16 %v410, %v410
      %v443 = vunpack.c.l.b16 %v411
      %v444 = vunpack.c.l.b16 %v412
      %v445 = vunpack.c.l.b16 %v413
      %v446 = vunpack.c.l.b16 %v414
      %v447 = vunpack.c.l.b16 %v415
      %v448 = vunpack.c.l.b16 %v416
      %v449 = vunpack.c.l.b16 %v417
      %v450 = vunpack.c.l.b16 %v418
      %v451 = vunpack.c.l.b16 %v419
      %v452 = vunpack.c.l.b16 %v420
      %v453 = vunpack.c.l.b16 %v421
      %v454 = vunpack.c.l.b16 %v422
      %v455 = vunpack.c.l.b16 %v423
      %v456 = vunpack.c.l.b16 %v424
      %v457 = vunpack.c.l.b16 %v425
      %v458 = vunpack.c.l.b16 %v426
      %v459 = vpack.c.b16 %v444, %v443
      %v460 = vpack.c.b16 %v446, %v445
      %v461 = vpack.c.b16 %v448, %v447
      %v462 = vpack.c.b16 %v450, %v449
      %v463 = vpack.c.b16 %v452, %v451
      %v464 = vpack.c.b16 %v454, %v453
      %v465 = vpack.c.b16 %v456, %v455
      %v466 = vpack.c.b16 %v458, %v457
      %475 = vst [vmem:[%s170] sm:$0xff] %v459
      %476 = vst [vmem:[%s170 + $0x8] sm:$0xff] %v460
      %477 = vst [vmem:[%s170 + $0x10] sm:$0xff] %v461
      %478 = vst [vmem:[%s170 + $0x18] sm:$0xff] %v462
      %479 = vst [vmem:[%s170 + $0x20] sm:$0xff] %v463
      %480 = vst [vmem:[%s170 + $0x28] sm:$0xff] %v464
      %481 = vst [vmem:[%s170 + $0x30] sm:$0xff] %v465
      %482 = vst [vmem:[%s170 + $0x38] sm:$0xff] %v466
      %p483 = scmp.lt.s32.totalorder %s14, 1
      %s484 = scalar_select %p483, %s14, 1
      %s485 = smul.addr %s484, 16
      %s486 = smul.addr %s485, 4
      %s487 = scalar_lea.vmem %s3, %s486
      // Predicated region
      $region33: #{decoder_block_2d.3} parent=31 // pred_check
        %p488 = pneg %p100
      $region34: #{decoder_block_2d.3} parent=31 // pred_check_branch
        %490 = sbr.rel (%p488) target = $region36
      $region35: #{decoder_block_2d.3} parent=31 // pred_region
        _
      $region36: #{decoder_block_2d.3} parent=31 // pred_fallthru
        _
    $region32: #{decoder_block_2d.3} parent=5 // pred_fallthru
      _
    %p491 = scmp.le.s32.totalorder 2, %s9
    // Predicated region
    $region37: #{decoder_block_2d.3} parent=5 // pred_check
      %p492 = pneg %p491
    $region38: #{decoder_block_2d.3} parent=5 // pred_check_branch
      %494 = sbr.rel (%p492) target = $region40
    $region39: #{decoder_block_2d.3} parent=5 // pred_region
      %s495 = ssub.s32 %s9, 2
      // Predicated region
      $region41: #{decoder_block_2d.3} parent=39 // pred_check
        %p496 = pneg %p106
      $region42: #{decoder_block_2d.3} parent=39 // pred_check_branch
        %498 = sbr.rel (%p496) target = $region44
      $region43: #{decoder_block_2d.3} parent=39 // pred_region
        %p499 = scmp.lt.s32.totalorder %s15, 1
        %s500 = scalar_select %p499, %s15, 1
        %s501 = smul.addr %s500, 16
        %s502 = smul.addr %s501, 4
        %s503 = scalar_lea.vmem %s3, %s502
      $region44: #{decoder_block_2d.3} parent=39 // pred_fallthru
        _
    $region40: #{decoder_block_2d.3} parent=5 // pred_fallthru
      _
  $region6: #{decoder_block_2d.3} parent=0 // loop_footer
    %s13 = sadd.s32 1, %s9
  $region7: #{decoder_block_2d.3} parent=0 // loop_footer_branch
    %8 = sbr.rel target = $region3
  $region8: #{decoder_block_2d.3} parent=0 // loop_exit
    _

// kernel: decoder_block_2d.2
$region0: #{decoder_block_2d.2}
  #allocation0 [shape = 'u32[]', space=smem, size = 0x4, offset = 0x4, fixed_abs, tag = 'smem constant byte address 0x4 - core index']
  #allocation1 [shape = 'u32[144,128]{1,0:T(1,128)}', space=vmem, size = 0x12000, scoped, tag = 'internal scratch']
  %s0 = inlined_call_operand.vmem [shape: bf16[2,10,18,8], index: 0, kind: input, shape index: {}]
  %s1 = inlined_call_operand.vmem [shape: bf16[9,8,128], index: 1, kind: input, shape index: {}]
  %s2 = inlined_call_operand.vmem [shape: bf16[256,128], index: 2, kind: output, shape index: {0}]
  %s3 = inlined_call_operand.vmem [shape: f32[2,2,128], index: 3, kind: output, shape index: {1}]
  %4 = xla_tuple %s2, %s3
  %s5 = sld [smem:[#allocation0]]
  $region49: #{decoder_block_2d.2} parent=0
    _
  %s7 = ssub.s32 1, %s5
  %s8 = scalar_select 0, %s7, %s5
  loop: start=0, step=1, limit=4
  $region2: #{decoder_block_2d.2} parent=0 // loop_pre_header
    _
  $region3: #{decoder_block_2d.2} parent=0 // loop_header
    %s10 = sphi 0, %s14
    %p11 = scmp.ge.s32.totalorder %s10, 4
    %s20 = sphi 0, %s22
    %s23 = sphi 0, %s20
    %s24 = sphi 0, %s23
    %s40 = sphi 0, %s24
    %s44 = sphi 0, %s44
    %s46 = sphi 0, %s44
    %s47 = sphi 0, %s46
    %s61 = sphi 0, %s47
    %s67 = sphi 0, %s69
    %s70 = sphi 0, %s67
    %s71 = sphi 0, %s70
    %s87 = sphi 0, %s71
    %s93 = sphi 0, %s95
    %s96 = sphi 0, %s93
    %s97 = sphi 0, %s96
    %s113 = sphi 0, %s97
  $region4: #{decoder_block_2d.2} parent=0 // loop_header_branch
    %13 = sbr.rel (%p11) target = $region8
  $region5: #{decoder_block_2d.2} parent=0 // loop_body
    %s15 = ssub.s32 %s10, 1
    %s16 = ssub.s32 %s10, 2
    %s17 = sadd.s32 %s10, 1
    %s18 = ssub.s32 %s10, %s17
    %p19 = scmp.eq.s32.totalorder %s18, 0
    %s21 = sadd.s32 %s20, 1
    %s22 = scalar_select %p19, %s20, %s21
    %p25 = pneg %p19
    %p26 = scmp.eq.s32.totalorder %s10, 1
    %p27 = por %p25, %p26
    %p28 = scmp.ne.s32.totalorder %s20, %s23
    %p29 = scmp.eq.s32.totalorder %s10, 0
    %p30 = por %p28, %p29
    %p31 = scmp.ne.s32.totalorder %s20, %s23
    %p32 = scmp.eq.s32.totalorder %s15, 1
    %p33 = por %p31, %p32
    %p34 = scmp.ne.s32.totalorder %s23, %s24
    %p35 = scmp.eq.s32.totalorder %s15, 0
    %p36 = por %p34, %p35
    %p37 = scmp.ne.s32.totalorder %s23, %s24
    %p38 = scmp.eq.s32.totalorder %s16, 1
    %p39 = por %p37, %p38
    %p41 = scmp.ne.s32.totalorder %s24, %s40
    %p42 = scmp.eq.s32.totalorder %s16, 0
    %p43 = por %p41, %p42
    %s45 = sadd.s32 %s44, 1
    %p48 = scmp.eq.s32.totalorder %s10, 1
    %p49 = scmp.ne.s32.totalorder %s44, %s46
    %p50 = scmp.eq.s32.totalorder %s10, 0
    %p51 = por %p49, %p50
    %p52 = scmp.ne.s32.totalorder %s44, %s46
    %p53 = scmp.eq.s32.totalorder %s15, 1
    %p54 = por %p52, %p53
    %p55 = scmp.ne.s32.totalorder %s46, %s47
    %p56 = scmp.eq.s32.totalorder %s15, 0
    %p57 = por %p55, %p56
    %p58 = scmp.ne.s32.totalorder %s46, %s47
    %p59 = scmp.eq.s32.totalorder %s16, 1
    %p60 = por %p58, %p59
    %p62 = scmp.ne.s32.totalorder %s47, %s61
    %p63 = scmp.eq.s32.totalorder %s16, 0
    %p64 = por %p62, %p63
    %s65 = ssub.s32 %s10, %s17
    %p66 = scmp.eq.s32.totalorder %s65, 0
    %s68 = sadd.s32 %s67, 1
    %s69 = scalar_select %p66, %s67, %s68
    %p72 = pneg %p66
    %p73 = scmp.eq.s32.totalorder %s10, 1
    %p74 = por %p72, %p73
    %p75 = scmp.ne.s32.totalorder %s67, %s70
    %p76 = scmp.eq.s32.totalorder %s10, 0
    %p77 = por %p75, %p76
    %p78 = scmp.ne.s32.totalorder %s67, %s70
    %p79 = scmp.eq.s32.totalorder %s15, 1
    %p80 = por %p78, %p79
    %p81 = scmp.ne.s32.totalorder %s70, %s71
    %p82 = scmp.eq.s32.totalorder %s15, 0
    %p83 = por %p81, %p82
    %p84 = scmp.ne.s32.totalorder %s70, %s71
    %p85 = scmp.eq.s32.totalorder %s16, 1
    %p86 = por %p84, %p85
    %p88 = scmp.ne.s32.totalorder %s71, %s87
    %p89 = scmp.eq.s32.totalorder %s16, 0
    %p90 = por %p88, %p89
    %s91 = ssub.s32 %s10, %s17
    %p92 = scmp.eq.s32.totalorder %s91, 0
    %s94 = sadd.s32 %s93, 1
    %s95 = scalar_select %p92, %s93, %s94
    %p98 = pneg %p92
    %p99 = scmp.eq.s32.totalorder %s10, 1
    %p100 = por %p98, %p99
    %p101 = scmp.ne.s32.totalorder %s93, %s96
    %p102 = scmp.eq.s32.totalorder %s10, 0
    %p103 = por %p101, %p102
    %p104 = scmp.ne.s32.totalorder %s93, %s96
    %p105 = scmp.eq.s32.totalorder %s15, 1
    %p106 = por %p104, %p105
    %p107 = scmp.ne.s32.totalorder %s96, %s97
    %p108 = scmp.eq.s32.totalorder %s15, 0
    %p109 = por %p107, %p108
    %p110 = scmp.ne.s32.totalorder %s96, %s97
    %p111 = scmp.eq.s32.totalorder %s16, 1
    %p112 = por %p110, %p111
    %p114 = scmp.ne.s32.totalorder %s97, %s113
    %p115 = scmp.eq.s32.totalorder %s16, 0
    %p116 = por %p114, %p115
    %p117 = scmp.le.s32.totalorder 1, %s10
    %p118 = scmp.lt.s32.totalorder %s10, 3
    %p119 = pnand %p117, %p118
    %p120 = pneg %p119
    // Predicated region
    $region9: #{decoder_block_2d.2} parent=5 // pred_check
      _
    $region10: #{decoder_block_2d.2} parent=5 // pred_check_branch
      %122 = sbr.rel (%p119) target = $region12
    $region11: #{decoder_block_2d.2} parent=5 // pred_region
      %s123 = ssub.s32 %s10, 1
      // Predicated region
      $region13: #{decoder_block_2d.2} parent=11 // pred_check
        %p124 = pneg %p57
      $region14: #{decoder_block_2d.2} parent=11 // pred_check_branch
        %126 = sbr.rel (%p124) target = $region16
      $region15: #{decoder_block_2d.2} parent=11 // pred_region
        _
      $region16: #{decoder_block_2d.2} parent=11 // pred_fallthru
        _
    $region12: #{decoder_block_2d.2} parent=5 // pred_fallthru
      _
    %p127 = scmp.lt.s32.totalorder %s10, 2
    // Predicated region
    $region17: #{decoder_block_2d.2} parent=5 // pred_check
      %p128 = pneg %p127
    $region18: #{decoder_block_2d.2} parent=5 // pred_check_branch
      %130 = sbr.rel (%p128) target = $region20
    $region19: #{decoder_block_2d.2} parent=5 // pred_region
      // Predicated region
      $region21: #{decoder_block_2d.2} parent=19 // pred_check
        %p131 = pneg %p30
      $region22: #{decoder_block_2d.2} parent=19 // pred_check_branch
        %133 = sbr.rel (%p131) target = $region24
      $region23: #{decoder_block_2d.2} parent=19 // pred_region
        %p134 = scmp.lt.s32.totalorder %s10, 1
        %s135 = scalar_select %p134, %s10, 1
        %s136 = smul.addr %s135, 30
        %s137 = smul.addr %s136, 4
        %s138 = scalar_lea.vmem %s0, %s137
      $region24: #{decoder_block_2d.2} parent=19 // pred_fallthru
        _
    $region20: #{decoder_block_2d.2} parent=5 // pred_fallthru
      _
    %p139 = scmp.le.s32.totalorder 1, %s10
    %p140 = scmp.lt.s32.totalorder %s10, 3
    %p141 = pnand %p139, %p140
    %p142 = pneg %p141
    // Predicated region
    $region25: #{decoder_block_2d.2} parent=5 // pred_check
      _
    $region26: #{decoder_block_2d.2} parent=5 // pred_check_branch
      %144 = sbr.rel (%p141) target = $region28
    $region27: #{decoder_block_2d.2} parent=5 // pred_region
      %s145 = ssub.s32 %s10, 1
      %p146 = scmp.lt.s32.totalorder %s15, 1
      %s147 = scalar_select %p146, %s15, 1
      %s148 = smul.addr %s147, 30
      %s149 = smul.addr %s148, 4
      %s150 = scalar_lea.vmem %s0, %s149
      %p151 = pneg %p36
      %p152 = pneg %p33
      %p153 = pneg %p57
      %p154 = pneg %p54
      %p155 = pneg %p83
      %p156 = pneg %p80
      %s157 = smul.u32 16, %s15
      %p158 = scmp.lt.s32.totalorder %s157, 31
      %s159 = scalar_select %p158, %s157, 31
      %s160 = smul.addr %s159, 4
      %s161 = scalar_lea.vmem %s2, %s160
      %p162 = pneg %p109
      %p163 = pneg %p106
      %p164 = scmp.lt.s32.totalorder %s15, 1
      %s165 = scalar_select %p164, %s15, 1
      %s166 = smul.addr %s165, 2
      %s167 = scalar_lea.vmem %s3, %s166
      %p168 = scmp.lt.s32.totalorder %s15, 1
      %s169 = scalar_select %p168, %s15, 1
      %s170 = smul.addr %s169, 30
      %s171 = smul.addr %s170, 4
      %s172 = scalar_lea.vmem %s0, %s171
      %s173 = smul.u32 16, %s15
      %p174 = scmp.lt.s32.totalorder %s173, 31
      %s175 = scalar_select %p174, %s173, 31
      %s176 = smul.addr %s175, 4
      %s177 = scalar_lea.vmem %s2, %s176
      %s178 = smul.u32 16, %s15
      %p179 = scmp.lt.s32.totalorder %s15, 1
      %s180 = scalar_select %p179, %s15, 1
      %s181 = smul.addr %s180, 2
      %s182 = scalar_lea.vmem %s3, %s181
      %v184 = vld [vmem:[%s172] sm:$0xf]
      %v185 = vld [vmem:[%s172 + $0x4] sm:$0xf]
      %v186 = vld [vmem:[%s172 + $0xc] sm:$0xf]
      %v187 = vld [vmem:[%s172 + $0x10] sm:$0xf]
      %v188 = vld [vmem:[%s172 + $0x18] sm:$0xf]
      %v189 = vld [vmem:[%s172 + $0x1c] sm:$0xf]
      %v190 = vld [vmem:[%s172 + $0x24] sm:$0xf]
      %v191 = vld [vmem:[%s172 + $0x28] sm:$0xf]
      %v192 = vld [vmem:[%s172 + $0x30] sm:$0xf]
      %v193 = vld [vmem:[%s172 + $0x34] sm:$0xf]
      %v194 = vld [vmem:[%s172 + $0x3c] sm:$0xf]
      %v195 = vld [vmem:[%s172 + $0x40] sm:$0xf]
      %v196 = vld [vmem:[%s172 + $0x48] sm:$0xf]
      %v197 = vld [vmem:[%s172 + $0x4c] sm:$0xf]
      %v198 = vld [vmem:[%s172 + $0x54] sm:$0xf]
      %v199 = vld [vmem:[%s172 + $0x58] sm:$0xf]
      %v200 = vld [vmem:[%s1] sm:$0xf]
      %v201 = vld [vmem:[%s172 + $0x8] sm:$0x1]
      %v202 = vld [vmem:[%s172 + $0x14] sm:$0x1]
      %v203 = vld [vmem:[%s172 + $0x20] sm:$0x1]
      %v204 = vld [vmem:[%s172 + $0x2c] sm:$0x1]
      %v205 = vld [vmem:[%s172 + $0x38] sm:$0x1]
      %v206 = vld [vmem:[%s172 + $0x44] sm:$0x1]
      %v207 = vld [vmem:[%s172 + $0x50] sm:$0x1]
      %v208 = vld [vmem:[%s172 + $0x5c] sm:$0x1]
      %vm209 = vsmask.f32 3328
      %vm210 = vsmask.f32 7440
      %vm211 = vmor %vm209, %vm210
      %v213 = vshrl.u32 %v184, 16
      %v215 = vrot.slane %v213, 4
      %v216 = vshll.u32 %v184, 16
      %v218 = vrot.slane %v216, 5
      %v219 = vor.u32 %v215, %v218
      %v220 = vrot.slane %v219, 4
      %v222 = vshll.u32 %v185, 16
      %v224 = vrot.slane %v222, 5
      %v225 = vsel %vm211, %v220, %v224
      %v226 = vshrl.u32 %v185, 16
      %v228 = vrot.slane %v226, 4
      %v229 = vor.u32 %v228, %v224
      %v230 = vrot.slane %v229, 4
      %v232 = vshll.u32 %v201, 16
      %v234 = vrot.slane %v232, 5
      %v235 = vsel %vm211, %v230, %v234
      %v237 = vshrl.u32 %v186, 16
      %v239 = vrot.slane %v237, 4
      %v240 = vshll.u32 %v186, 16
      %v242 = vrot.slane %v240, 5
      %v243 = vor.u32 %v239, %v242
      %v244 = vrot.slane %v243, 4
      %v246 = vshll.u32 %v187, 16
      %v248 = vrot.slane %v246, 5
      %v249 = vsel %vm211, %v244, %v248
      %v250 = vshrl.u32 %v187, 16
      %v252 = vrot.slane %v250, 4
      %v253 = vor.u32 %v252, %v248
      %v254 = vrot.slane %v253, 4
      %v256 = vshll.u32 %v202, 16
      %v258 = vrot.slane %v256, 5
      %v259 = vsel %vm211, %v254, %v258
      %v261 = vshrl.u32 %v188, 16
      %v263 = vrot.slane %v261, 4
      %v264 = vshll.u32 %v188, 16
      %v266 = vrot.slane %v264, 5
      %v267 = vor.u32 %v263, %v266
      %v268 = vrot.slane %v267, 4
      %v270 = vshll.u32 %v189, 16
      %v272 = vrot.slane %v270, 5
      %v273 = vsel %vm211, %v268, %v272
      %v274 = vshrl.u32 %v189, 16
      %v276 = vrot.slane %v274, 4
      %v277 = vor.u32 %v276, %v272
      %v278 = vrot.slane %v277, 4
      %v280 = vshll.u32 %v203, 16
      %v282 = vrot.slane %v280, 5
      %v283 = vsel %vm211, %v278, %v282
      %v285 = vshrl.u32 %v190, 16
      %v287 = vrot.slane %v285, 4
      %v288 = vshll.u32 %v190, 16
      %v290 = vrot.slane %v288, 5
      %v291 = vor.u32 %v287, %v290
      %v292 = vrot.slane %v291, 4
      %v294 = vshll.u32 %v191, 16
      %v296 = vrot.slane %v294, 5
      %v297 = vsel %vm211, %v292, %v296
      %v298 = vshrl.u32 %v191, 16
      %v300 = vrot.slane %v298, 4
      %v301 = vor.u32 %v300, %v296
      %v302 = vrot.slane %v301, 4
      %v304 = vshll.u32 %v204, 16
      %v306 = vrot.slane %v304, 5
      %v307 = vsel %vm211, %v302, %v306
      %v309 = vshrl.u32 %v192, 16
      %v311 = vrot.slane %v309, 4
      %v312 = vshll.u32 %v192, 16
      %v314 = vrot.slane %v312, 5
      %v315 = vor.u32 %v311, %v314
      %v316 = vrot.slane %v315, 4
      %v318 = vshll.u32 %v193, 16
      %v320 = vrot.slane %v318, 5
      %v321 = vsel %vm211, %v316, %v320
      %v322 = vshrl.u32 %v193, 16
      %v324 = vrot.slane %v322, 4
      %v325 = vor.u32 %v324, %v320
      %v326 = vrot.slane %v325, 4
      %v328 = vshll.u32 %v205, 16
      %v330 = vrot.slane %v328, 5
      %v331 = vsel %vm211, %v326, %v330
      %v333 = vshrl.u32 %v194, 16
      %v335 = vrot.slane %v333, 4
      %v336 = vshll.u32 %v194, 16
      %v338 = vrot.slane %v336, 5
      %v339 = vor.u32 %v335, %v338
      %v340 = vrot.slane %v339, 4
      %v342 = vshll.u32 %v195, 16
      %v344 = vrot.slane %v342, 5
      %v345 = vsel %vm211, %v340, %v344
      %v346 = vshrl.u32 %v195, 16
      %v348 = vrot.slane %v346, 4
      %v349 = vor.u32 %v348, %v344
      %v350 = vrot.slane %v349, 4
      %v352 = vshll.u32 %v206, 16
      %v354 = vrot.slane %v352, 5
      %v355 = vsel %vm211, %v350, %v354
      %v357 = vshrl.u32 %v196, 16
      %v359 = vrot.slane %v357, 4
      %v360 = vshll.u32 %v196, 16
      %v362 = vrot.slane %v360, 5
      %v363 = vor.u32 %v359, %v362
      %v364 = vrot.slane %v363, 4
      %v366 = vshll.u32 %v197, 16
      %v368 = vrot.slane %v366, 5
      %v369 = vsel %vm211, %v364, %v368
      %v370 = vshrl.u32 %v197, 16
      %v372 = vrot.slane %v370, 4
      %v373 = vor.u32 %v372, %v368
      %v374 = vrot.slane %v373, 4
      %v376 = vshll.u32 %v207, 16
      %v378 = vrot.slane %v376, 5
      %v379 = vsel %vm211, %v374, %v378
      %v381 = vshrl.u32 %v198, 16
      %v383 = vrot.slane %v381, 4
      %v384 = vshll.u32 %v198, 16
      %v386 = vrot.slane %v384, 5
      %v387 = vor.u32 %v383, %v386
      %v388 = vrot.slane %v387, 4
      %v390 = vshll.u32 %v199, 16
      %v392 = vrot.slane %v390, 5
      %v393 = vsel %vm211, %v388, %v392
      %v394 = vshrl.u32 %v199, 16
      %v396 = vrot.slane %v394, 4
      %v397 = vor.u32 %v396, %v392
      %v398 = vrot.slane %v397, 4
      %v400 = vshll.u32 %v208, 16
      %v402 = vrot.slane %v400, 5
      %v403 = vsel %vm211, %v398, %v402
      %s404 = scalar_lea.vmem %s1, 4
      %v405 = vld [vmem:[%s404] sm:$0xf]
      %v406 = vunpack.c.l.b16 %v225
      %v407 = vunpack.c.l.b16 %v235
      %v408 = vunpack.c.l.b16 %v249
      %v409 = vunpack.c.l.b16 %v259
      %v410 = vunpack.c.l.b16 %v273
      %v411 = vunpack.c.l.b16 %v283
      %v412 = vunpack.c.l.b16 %v297
      %v413 = vunpack.c.l.b16 %v307
      %v414 = vunpack.c.l.b16 %v321
      %v415 = vunpack.c.l.b16 %v331
      %v416 = vunpack.c.l.b16 %v345
      %v417 = vunpack.c.l.b16 %v355
      %v418 = vunpack.c.l.b16 %v369
      %v419 = vunpack.c.l.b16 %v379
      %v420 = vunpack.c.l.b16 %v393
      %v421 = vunpack.c.l.b16 %v403
      %v422 = vpack.c.b16 %v407, %v406
      %v423 = vpack.c.b16 %v409, %v408
      %v424 = vpack.c.b16 %v411, %v410
      %v425 = vpack.c.b16 %v413, %v412
      %v426 = vpack.c.b16 %v415, %v414
      %v427 = vpack.c.b16 %v417, %v416
      %v428 = vpack.c.b16 %v419, %v418
      %v429 = vpack.c.b16 %v421, %v420
      %vm430 = vcmask 64512
      %v432 = vsel %vm430, %v422, 0
      %v435 = vsel %vm430, %v423, 0
      %v438 = vsel %vm430, %v424, 0
      %v441 = vsel %vm430, %v425, 0
      %v444 = vsel %vm430, %v426, 0
      %v447 = vsel %vm430, %v427, 0
      %v450 = vsel %vm430, %v428, 0
      %v453 = vsel %vm430, %v429, 0
      %vm455 = vcmask 1043456
      %v457 = vsel %vm455, %v405, 0
      %459 = vmatprep.subr.bf16.mxu0 0
      %460 = vmatpush1.bf16.msra.mxu0 %v457
      %461 = vmatprep.subr.bf16.mxu0 0
      %462 = vmatpush1.bf16.msra.mxu0 0
      %463 = vmatprep.subr.bf16.mxu0 0
      %464 = vmatpush1.bf16.msra.mxu0 0
      %465 = vmatprep.subr.bf16.mxu0 0
      %466 = vmatpush1.bf16.msra.mxu0 0
      %467 = vmatprep.subr.bf16.mxu0 0
      %468 = vmatpush1.bf16.msra.mxu0 0
      %469 = vmatprep.subr.bf16.mxu0 0
      %470 = vmatpush1.bf16.msra.mxu0 0
      %471 = vmatprep.subr.bf16.mxu0 0
      %472 = vmatpush1.bf16.msra.mxu0 0
      %473 = vmatprep.subr.bf16.mxu0 0
      %474 = vmatpush1.bf16.msra.mxu0 0
      %475 = vmatprep.subr.bf16.mxu0 0
      %476 = vmatpush1.bf16.msra.mxu0 0
      %477 = vmatprep.subr.bf16.mxu0 0
      %478 = vmatpush1.bf16.msra.mxu0 0
      %479 = vmatprep.subr.bf16.mxu0 0
      %480 = vmatpush1.bf16.msra.mxu0 0
      %481 = vmatprep.subr.bf16.mxu0 0
      %482 = vmatpush1.bf16.msra.mxu0 0
      %483 = vmatprep.subr.bf16.mxu0 0
      %484 = vmatpush1.bf16.msra.mxu0 0
      %485 = vmatprep.subr.bf16.mxu0 0
      %486 = vmatpush1.bf16.msra.mxu0 0
      %487 = vmatprep.subr.bf16.mxu0 0
      %488 = vmatpush1.bf16.msra.mxu0 0
      %489 = vmatprep.subr.bf16.mxu0 0
      %490 = vmatpush1.bf16.msra.mxu0 0
      %491 = vmatprep.mubr.bf16.mxu0 0
      %492 = vmatmul.mubr.bf16.gmra.mrb[0].mxu0 %v432
      %v493 = vpop.f32.mrb[0].mxu0
      %v494 = vadd.f32 0.0, %v493
      %v495 = vpop.f32.mrb[0].mxu0
      %v496 = vpop.f32.mrb[0].mxu0
      %v497 = vadd.f32 0.0, %v496
      %v498 = vpop.f32.mrb[0].mxu0
      %499 = vmatprep.mubr.bf16.mxu0 0
      %500 = vmatmul.mubr.bf16.gmra.mrb[0].mxu0 %v435
      %v501 = vpop.f32.mrb[0].mxu0
      %v502 = vadd.f32 0.0, %v501
      %v503 = vpop.f32.mrb[0].mxu0
      %v504 = vpop.f32.mrb[0].mxu0
      %v505 = vadd.f32 0.0, %v504
      %v506 = vpop.f32.mrb[0].mxu0
      %507 = vmatprep.mubr.bf16.mxu0 0
      %508 = vmatmul.mubr.bf16.gmra.mrb[0].mxu0 %v438
      %v509 = vpop.f32.mrb[0].mxu0
      %v510 = vadd.f32 0.0, %v509
      %v511 = vpop.f32.mrb[0].mxu0
      %v512 = vpop.f32.mrb[0].mxu0
      %v513 = vadd.f32 0.0, %v512
      %v514 = vpop.f32.mrb[0].mxu0
      %515 = vmatprep.mubr.bf16.mxu0 0
      %516 = vmatmul.mubr.bf16.gmra.mrb[0].mxu0 %v441
      %v517 = vpop.f32.mrb[0].mxu0
      %v518 = vadd.f32 0.0, %v517
      %v519 = vpop.f32.mrb[0].mxu0
      %v520 = vpop.f32.mrb[0].mxu0
      %v521 = vadd.f32 0.0, %v520
      %v522 = vpop.f32.mrb[0].mxu0
      %523 = vmatprep.mubr.bf16.mxu0 0
      %524 = vmatmul.mubr.bf16.gmra.mrb[0].mxu0 %v444
      %v525 = vpop.f32.mrb[0].mxu0
      %v526 = vadd.f32 0.0, %v525
      %v527 = vpop.f32.mrb[0].mxu0
      %v528 = vpop.f32.mrb[0].mxu0
      %v529 = vadd.f32 0.0, %v528
      %v530 = vpop.f32.mrb[0].mxu0
      %531 = vmatprep.mubr.bf16.mxu0 0
      %532 = vmatmul.mubr.bf16.gmra.mrb[0].mxu0 %v447
      %v533 = vpop.f32.mrb[0].mxu0
      %v534 = vadd.f32 0.0, %v533
      %v535 = vpop.f32.mrb[0].mxu0
      %v536 = vpop.f32.mrb[0].mxu0
      %v537 = vadd.f32 0.0, %v536
      %v538 = vpop.f32.mrb[0].mxu0
      %539 = vmatprep.mubr.bf16.mxu0 0
      %540 = vmatmul.mubr.bf16.gmra.mrb[0].mxu0 %v450
      %v541 = vpop.f32.mrb[0].mxu0
      %v542 = vadd.f32 0.0, %v541
      %v543 = vpop.f32.mrb[0].mxu0
      %v544 = vpop.f32.mrb[0].mxu0
      %v545 = vadd.f32 0.0, %v544
      %v546 = vpop.f32.mrb[0].mxu0
      %547 = vmatprep.mubr.bf16.mxu0 0
      %548 = vmatmul.mubr.bf16.gmra.mrb[0].mxu0 %v453
      %v549 = vpop.f32.mrb[0].mxu0
      %v550 = vadd.f32 0.0, %v549
      %v551 = vpop.f32.mrb[0].mxu0
      %v552 = vpop.f32.mrb[0].mxu0
      %v553 = vadd.f32 0.0, %v552
      %v554 = vpop.f32.mrb[0].mxu0
      %555 = vdwg.mxu0
      %v572 = vunpack.c.l.b16 %v184
      %v573 = vunpack.c.l.b16 %v185
      %v574 = vunpack.c.l.b16 %v186
      %v575 = vunpack.c.l.b16 %v187
      %v576 = vunpack.c.l.b16 %v188
      %v577 = vunpack.c.l.b16 %v189
      %v578 = vunpack.c.l.b16 %v190
      %v579 = vunpack.c.l.b16 %v191
      %v580 = vunpack.c.l.b16 %v192
      %v581 = vunpack.c.l.b16 %v193
      %v582 = vunpack.c.l.b16 %v194
      %v583 = vunpack.c.l.b16 %v195
      %v584 = vunpack.c.l.b16 %v196
      %v585 = vunpack.c.l.b16 %v197
      %v586 = vunpack.c.l.b16 %v198
      %v587 = vunpack.c.l.b16 %v199
      %v588 = vpack.c.b16 %v573, %v572
      %v589 = vpack.c.b16 %v575, %v574
      %v590 = vpack.c.b16 %v577, %v576
      %v591 = vpack.c.b16 %v579, %v578
      %v592 = vpack.c.b16 %v581, %v580
      %v593 = vpack.c.b16 %v583, %v582
      %v594 = vpack.c.b16 %v585, %v584
      %v595 = vpack.c.b16 %v587, %v586
      %v597 = vsel %vm430, %v588, 0
      %v600 = vsel %vm430, %v589, 0
      %v603 = vsel %vm430, %v590, 0
      %v606 = vsel %vm430, %v591, 0
      %v609 = vsel %vm430, %v592, 0
      %v612 = vsel %vm430, %v593, 0
      %v615 = vsel %vm430, %v594, 0
      %v618 = vsel %vm430, %v595, 0
      %v621 = vsel %vm455, %v200, 0
      %623 = vmatprep.subr.bf16.mxu0 0
      %624 = vmatpush1.bf16.msra.mxu0 %v621
      %625 = vmatprep.subr.bf16.mxu0 0
      %626 = vmatpush1.bf16.msra.mxu0 0
      %627 = vmatprep.subr.bf16.mxu0 0
      %628 = vmatpush1.bf16.msra.mxu0 0
      %629 = vmatprep.subr.bf16.mxu0 0
      %630 = vmatpush1.bf16.msra.mxu0 0
      %631 = vmatprep.subr.bf16.mxu0 0
      %632 = vmatpush1.bf16.msra.mxu0 0
      %633 = vmatprep.subr.bf16.mxu0 0
      %634 = vmatpush1.bf16.msra.mxu0 0
      %635 = vmatprep.subr.bf16.mxu0 0
      %636 = vmatpush1.bf16.msra.mxu0 0
      %637 = vmatprep.subr.bf16.mxu0 0
      %638 = vmatpush1.bf16.msra.mxu0 0
      %639 = vmatprep.subr.bf16.mxu0 0
      %640 = vmatpush1.bf16.msra.mxu0 0
      %641 = vmatprep.subr.bf16.mxu0 0
      %642 = vmatpush1.bf16.msra.mxu0 0
      %643 = vmatprep.subr.bf16.mxu0 0
      %644 = vmatpush1.bf16.msra.mxu0 0
      %645 = vmatprep.subr.bf16.mxu0 0
      %646 = vmatpush1.bf16.msra.mxu0 0
      %647 = vmatprep.subr.bf16.mxu0 0
      %648 = vmatpush1.bf16.msra.mxu0 0
      %649 = vmatprep.subr.bf16.mxu0 0
      %650 = vmatpush1.bf16.msra.mxu0 0
      %651 = vmatprep.subr.bf16.mxu0 0
      %652 = vmatpush1.bf16.msra.mxu0 0
      %653 = vmatprep.subr.bf16.mxu0 0
      %654 = vmatpush1.bf16.msra.mxu0 0
      %655 = vmatprep.mubr.bf16.mxu0 0
      %656 = vmatmul.mubr.bf16.gmra.mrb[0].mxu0 %v597
      %v657 = vpop.f32.mrb[0].mxu0
      %v658 = vadd.f32 %v494, %v657
      %v659 = vpop.f32.mrb[0].mxu0
      %v660 = vpop.f32.mrb[0].mxu0
      %v661 = vadd.f32 %v497, %v660
      %v662 = vpop.f32.mrb[0].mxu0
      %663 = vmatprep.mubr.bf16.mxu0 0
      %664 = vmatmul.mubr.bf16.gmra.mrb[0].mxu0 %v600
      %v665 = vpop.f32.mrb[0].mxu0
      %v666 = vadd.f32 %v502, %v665
      %v667 = vpop.f32.mrb[0].mxu0
      %v668 = vpop.f32.mrb[0].mxu0
      %v669 = vadd.f32 %v505, %v668
      %v670 = vpop.f32.mrb[0].mxu0
      %671 = vmatprep.mubr.bf16.mxu0 0
      %672 = vmatmul.mubr.bf16.gmra.mrb[0].mxu0 %v603
      %v673 = vpop.f32.mrb[0].mxu0
      %v674 = vadd.f32 %v510, %v673
      %v675 = vpop.f32.mrb[0].mxu0
      %v676 = vpop.f32.mrb[0].mxu0
      %v677 = vadd.f32 %v513, %v676
      %v678 = vpop.f32.mrb[0].mxu0
      %679 = vmatprep.mubr.bf16.mxu0 0
      %680 = vmatmul.mubr.bf16.gmra.mrb[0].mxu0 %v606
      %v681 = vpop.f32.mrb[0].mxu0
      %v682 = vadd.f32 %v518, %v681
      %v683 = vpop.f32.mrb[0].mxu0
      %v684 = vpop.f32.mrb[0].mxu0
      %v685 = vadd.f32 %v521, %v684
      %v686 = vpop.f32.mrb[0].mxu0
      %687 = vmatprep.mubr.bf16.mxu0 0
      %688 = vmatmul.mubr.bf16.gmra.mrb[0].mxu0 %v609
      %v689 = vpop.f32.mrb[0].mxu0
      %v690 = vadd.f32 %v526, %v689
      %v691 = vpop.f32.mrb[0].mxu0
      %v692 = vpop.f32.mrb[0].mxu0
      %v693 = vadd.f32 %v529, %v692
      %v694 = vpop.f32.mrb[0].mxu0
      %695 = vmatprep.mubr.bf16.mxu0 0
      %696 = vmatmul.mubr.bf16.gmra.mrb[0].mxu0 %v612
      %v697 = vpop.f32.mrb[0].mxu0
      %v698 = vadd.f32 %v534, %v697
      %v699 = vpop.f32.mrb[0].mxu0
      %v700 = vpop.f32.mrb[0].mxu0
      %v701 = vadd.f32 %v537, %v700
      %v702 = vpop.f32.mrb[0].mxu0
      %703 = vmatprep.mubr.bf16.mxu0 0
      %704 = vmatmul.mubr.bf16.gmra.mrb[0].mxu0 %v615
      %v705 = vpop.f32.mrb[0].mxu0
      %v706 = vadd.f32 %v542, %v705
      %v707 = vpop.f32.mrb[0].mxu0
      %v708 = vpop.f32.mrb[0].mxu0
      %v709 = vadd.f32 %v545, %v708
      %v710 = vpop.f32.mrb[0].mxu0
      %711 = vmatprep.mubr.bf16.mxu0 0
      %712 = vmatmul.mubr.bf16.gmra.mrb[0].mxu0 %v618
      %v713 = vpop.f32.mrb[0].mxu0
      %v714 = vadd.f32 %v550, %v713
      %v715 = vpop.f32.mrb[0].mxu0
      %v716 = vpop.f32.mrb[0].mxu0
      %v717 = vadd.f32 %v553, %v716
      %v718 = vpop.f32.mrb[0].mxu0
      %719 = vdwg.mxu0
      %v720 = vld [vmem:[%s172] sm:$0xe]
      %v721 = vld [vmem:[%s172 + $0xc] sm:$0xe]
      %v722 = vld [vmem:[%s172 + $0x18] sm:$0xe]
      %v723 = vld [vmem:[%s172 + $0x24] sm:$0xe]
      %v724 = vld [vmem:[%s172 + $0x30] sm:$0xe]
      %v725 = vld [vmem:[%s172 + $0x3c] sm:$0xe]
      %v726 = vld [vmem:[%s172 + $0x48] sm:$0xe]
      %v727 = vld [vmem:[%s172 + $0x54] sm:$0xe]
      %vm744 = vcmask 1042432
      %vm745 = vcmask 1046532
      %vm746 = vmor %vm744, %vm745
      %v747 = vrot.slane %v720, 5
      %v748 = vrot.slane %v747, 4
      %v749 = vrot.slane %v185, 5
      %v750 = vsel %vm746, %v748, %v749
      %v751 = vrot.slane %v749, 4
      %v752 = vrot.slane %v201, 5
      %v753 = vsel %vm746, %v751, %v752
      %v754 = vrot.slane %v721, 5
      %v755 = vrot.slane %v754, 4
      %v756 = vrot.slane %v187, 5
      %v757 = vsel %vm746, %v755, %v756
      %v758 = vrot.slane %v756, 4
      %v759 = vrot.slane %v202, 5
      %v760 = vsel %vm746, %v758, %v759
      %v761 = vrot.slane %v722, 5
      %v762 = vrot.slane %v761, 4
      %v763 = vrot.slane %v189, 5
      %v764 = vsel %vm746, %v762, %v763
      %v765 = vrot.slane %v763, 4
      %v766 = vrot.slane %v203, 5
      %v767 = vsel %vm746, %v765, %v766
      %v768 = vrot.slane %v723, 5
      %v769 = vrot.slane %v768, 4
      %v770 = vrot.slane %v191, 5
      %v771 = vsel %vm746, %v769, %v770
      %v772 = vrot.slane %v770, 4
      %v773 = vrot.slane %v204, 5
      %v774 = vsel %vm746, %v772, %v773
      %v775 = vrot.slane %v724, 5
      %v776 = vrot.slane %v775, 4
      %v777 = vrot.slane %v193, 5
      %v778 = vsel %vm746, %v776, %v777
      %v779 = vrot.slane %v777, 4
      %v780 = vrot.slane %v205, 5
      %v781 = vsel %vm746, %v779, %v780
      %v782 = vrot.slane %v725, 5
      %v783 = vrot.slane %v782, 4
      %v784 = vrot.slane %v195, 5
      %v785 = vsel %vm746, %v783, %v784
      %v786 = vrot.slane %v784, 4
      %v787 = vrot.slane %v206, 5
      %v788 = vsel %vm746, %v786, %v787
      %v789 = vrot.slane %v726, 5
      %v790 = vrot.slane %v789, 4
      %v791 = vrot.slane %v197, 5
      %v792 = vsel %vm746, %v790, %v791
      %v793 = vrot.slane %v791, 4
      %v794 = vrot.slane %v207, 5
      %v795 = vsel %vm746, %v793, %v794
      %v796 = vrot.slane %v727, 5
      %v797 = vrot.slane %v796, 4
      %v798 = vrot.slane %v199, 5
      %v799 = vsel %vm746, %v797, %v798
      %v800 = vrot.slane %v798, 4
      %v801 = vrot.slane %v208, 5
      %v802 = vsel %vm746, %v800, %v801
      %s803 = scalar_lea.vmem %s1, 8
      %v804 = vld [vmem:[%s803] sm:$0xf]
      %v805 = vunpack.c.l.b16 %v750
      %v806 = vunpack.c.l.b16 %v753
      %v807 = vunpack.c.l.b16 %v757
      %v808 = vunpack.c.l.b16 %v760
      %v809 = vunpack.c.l.b16 %v764
      %v810 = vunpack.c.l.b16 %v767
      %v811 = vunpack.c.l.b16 %v771
      %v812 = vunpack.c.l.b16 %v774
      %v813 = vunpack.c.l.b16 %v778
      %v814 = vunpack.c.l.b16 %v781
      %v815 = vunpack.c.l.b16 %v785
      %v816 = vunpack.c.l.b16 %v788
      %v817 = vunpack.c.l.b16 %v792
      %v818 = vunpack.c.l.b16 %v795
      %v819 = vunpack.c.l.b16 %v799
      %v820 = vunpack.c.l.b16 %v802
      %v821 = vpack.c.b16 %v806, %v805
      %v822 = vpack.c.b16 %v808, %v807
      %v823 = vpack.c.b16 %v810, %v809
      %v824 = vpack.c.b16 %v812, %v811
      %v825 = vpack.c.b16 %v814, %v813
      %v826 = vpack.c.b16 %v816, %v815
      %v827 = vpack.c.b16 %v818, %v817
      %v828 = vpack.c.b16 %v820, %v819
      %v830 = vsel %vm430, %v821, 0
      %v833 = vsel %vm430, %v822, 0
      %v836 = vsel %vm430, %v823, 0
      %v839 = vsel %vm430, %v824, 0
      %v842 = vsel %vm430, %v825, 0
      %v845 = vsel %vm430, %v826, 0
      %v848 = vsel %vm430, %v827, 0
      %v851 = vsel %vm430, %v828, 0
      %v854 = vsel %vm455, %v804, 0
      %856 = vmatprep.subr.bf16.mxu0 0
      %857 = vmatpush1.bf16.msra.mxu0 %v854
      %858 = vmatprep.subr.bf16.mxu0 0
      %859 = vmatpush1.bf16.msra.mxu0 0
      %860 = vmatprep.subr.bf16.mxu0 0
      %861 = vmatpush1.bf16.msra.mxu0 0
      %862 = vmatprep.subr.bf16.mxu0 0
      %863 = vmatpush1.bf16.msra.mxu0 0
      %864 = vmatprep.subr.bf16.mxu0 0
      %865 = vmatpush1.bf16.msra.mxu0 0
      %866 = vmatprep.subr.bf16.mxu0 0
      %867 = vmatpush1.bf16.msra.mxu0 0
      %868 = vmatprep.subr.bf16.mxu0 0
      %869 = vmatpush1.bf16.msra.mxu0 0
      %870 = vmatprep.subr.bf16.mxu0 0
      %871 = vmatpush1.bf16.msra.mxu0 0
      %872 = vmatprep.subr.bf16.mxu0 0
      %873 = vmatpush1.bf16.msra.mxu0 0
      %874 = vmatprep.subr.bf16.mxu0 0
      %875 = vmatpush1.bf16.msra.mxu0 0
      %876 = vmatprep.subr.bf16.mxu0 0
      %877 = vmatpush1.bf16.msra.mxu0 0
      %878 = vmatprep.subr.bf16.mxu0 0
      %879 = vmatpush1.bf16.msra.mxu0 0
      %880 = vmatprep.subr.bf16.mxu0 0
      %881 = vmatpush1.bf16.msra.mxu0 0
      %882 = vmatprep.subr.bf16.mxu0 0
      %883 = vmatpush1.bf16.msra.mxu0 0
      %884 = vmatprep.subr.bf16.mxu0 0
      %885 = vmatpush1.bf16.msra.mxu0 0
      %886 = vmatprep.subr.bf16.mxu0 0
      %887 = vmatpush1.bf16.msra.mxu0 0
      %888 = vmatprep.mubr.bf16.mxu0 0
      %889 = vmatmul.mubr.bf16.gmra.mrb[0].mxu0 %v830
      %v890 = vpop.f32.mrb[0].mxu0
      %v891 = vadd.f32 0.0, %v890
      %v892 = vpop.f32.mrb[0].mxu0
      %v893 = vpop.f32.mrb[0].mxu0
      %v894 = vadd.f32 0.0, %v893
      %v895 = vpop.f32.mrb[0].mxu0
      %896 = vmatprep.mubr.bf16.mxu0 0
      %897 = vmatmul.mubr.bf16.gmra.mrb[0].mxu0 %v833
      %v898 = vpop.f32.mrb[0].mxu0
      %v899 = vadd.f32 0.0, %v898
      %v900 = vpop.f32.mrb[0].mxu0
      %v901 = vpop.f32.mrb[0].mxu0
      %v902 = vadd.f32 0.0, %v901
      %v903 = vpop.f32.mrb[0].mxu0
      %904 = vmatprep.mubr.bf16.mxu0 0
      %905 = vmatmul.mubr.bf16.gmra.mrb[0].mxu0 %v836
      %v906 = vpop.f32.mrb[0].mxu0
      %v907 = vadd.f32 0.0, %v906
      %v908 = vpop.f32.mrb[0].mxu0
      %v909 = vpop.f32.mrb[0].mxu0
      %v910 = vadd.f32 0.0, %v909
      %v911 = vpop.f32.mrb[0].mxu0
      %912 = vmatprep.mubr.bf16.mxu0 0
      %913 = vmatmul.mubr.bf16.gmra.mrb[0].mxu0 %v839
      %v914 = vpop.f32.mrb[0].mxu0
      %v915 = vadd.f32 0.0, %v914
      %v916 = vpop.f32.mrb[0].mxu0
      %v917 = vpop.f32.mrb[0].mxu0
      %v918 = vadd.f32 0.0, %v917
      %v919 = vpop.f32.mrb[0].mxu0
      %920 = vmatprep.mubr.bf16.mxu0 0
      %921 = vmatmul.mubr.bf16.gmra.mrb[0].mxu0 %v842
      %v922 = vpop.f32.mrb[0].mxu0
      %v923 = vadd.f32 0.0, %v922
      %v924 = vpop.f32.mrb[0].mxu0
      %v925 = vpop.f32.mrb[0].mxu0
      %v926 = vadd.f32 0.0, %v925
      %v927 = vpop.f32.mrb[0].mxu0
      %928 = vmatprep.mubr.bf16.mxu0 0
      %929 = vmatmul.mubr.bf16.gmra.mrb[0].mxu0 %v845
      %v930 = vpop.f32.mrb[0].mxu0
      %v931 = vadd.f32 0.0, %v930
      %v932 = vpop.f32.mrb[0].mxu0
      %v933 = vpop.f32.mrb[0].mxu0
      %v934 = vadd.f32 0.0, %v933
      %v935 = vpop.f32.mrb[0].mxu0
      %936 = vmatprep.mubr.bf16.mxu0 0
      %937 = vmatmul.mubr.bf16.gmra.mrb[0].mxu0 %v848
      %v938 = vpop.f32.mrb[0].mxu0
      %v939 = vadd.f32 0.0, %v938
      %v940 = vpop.f32.mrb[0].mxu0
      %v941 = vpop.f32.mrb[0].mxu0
      %v942 = vadd.f32 0.0, %v941
      %v943 = vpop.f32.mrb[0].mxu0
      %944 = vmatprep.mubr.bf16.mxu0 0
      %945 = vmatmul.mubr.bf16.gmra.mrb[0].mxu0 %v851
      %v946 = vpop.f32.mrb[0].mxu0
      %v947 = vadd.f32 0.0, %v946
      %v948 = vpop.f32.mrb[0].mxu0
      %v949 = vpop.f32.mrb[0].mxu0
      %v950 = vadd.f32 0.0, %v949
      %v951 = vpop.f32.mrb[0].mxu0
      %952 = vdwg.mxu0
      %v953 = vadd.f32 %v658, %v891
      %v954 = vadd.f32 %v661, %v894
      %v955 = vadd.f32 %v666, %v899
      %v956 = vadd.f32 %v669, %v902
      %v957 = vadd.f32 %v674, %v907
      %v958 = vadd.f32 %v677, %v910
      %v959 = vadd.f32 %v682, %v915
      %v960 = vadd.f32 %v685, %v918
      %v961 = vadd.f32 %v690, %v923
      %v962 = vadd.f32 %v693, %v926
      %v963 = vadd.f32 %v698, %v931
      %v964 = vadd.f32 %v701, %v934
      %v965 = vadd.f32 %v706, %v939
      %v966 = vadd.f32 %v709, %v942
      %v967 = vadd.f32 %v714, %v947
      %v968 = vadd.f32 %v717, %v950
      %s969 = scalar_lea.vmem %s172, 12
      %v970 = vld [vmem:[%s969] sm:$0xf]
      %v971 = vld [vmem:[%s969 + $0x4] sm:$0xf]
      %v972 = vld [vmem:[%s969 + $0xc] sm:$0xf]
      %v973 = vld [vmem:[%s969 + $0x10] sm:$0xf]
      %v974 = vld [vmem:[%s969 + $0x18] sm:$0xf]
      %v975 = vld [vmem:[%s969 + $0x1c] sm:$0xf]
      %v976 = vld [vmem:[%s969 + $0x24] sm:$0xf]
      %v977 = vld [vmem:[%s969 + $0x28] sm:$0xf]
      %v978 = vld [vmem:[%s969 + $0x30] sm:$0xf]
      %v979 = vld [vmem:[%s969 + $0x34] sm:$0xf]
      %v980 = vld [vmem:[%s969 + $0x3c] sm:$0xf]
      %v981 = vld [vmem:[%s969 + $0x40] sm:$0xf]
      %v982 = vld [vmem:[%s969 + $0x48] sm:$0xf]
      %v983 = vld [vmem:[%s969 + $0x4c] sm:$0xf]
      %v984 = vld [vmem:[%s969 + $0x54] sm:$0xf]
      %v985 = vld [vmem:[%s969 + $0x58] sm:$0xf]
      %s986 = scalar_lea.vmem %s1, 12
      %v987 = vld [vmem:[%s986] sm:$0xf]
      %v1004 = vunpack.c.l.b16 %v970
      %v1005 = vunpack.c.l.b16 %v971
      %v1006 = vunpack.c.l.b16 %v972
      %v1007 = vunpack.c.l.b16 %v973
      %v1008 = vunpack.c.l.b16 %v974
      %v1009 = vunpack.c.l.b16 %v975
      %v1010 = vunpack.c.l.b16 %v976
      %v1011 = vunpack.c.l.b16 %v977
      %v1012 = vunpack.c.l.b16 %v978
      %v1013 = vunpack.c.l.b16 %v979
      %v1014 = vunpack.c.l.b16 %v980
      %v1015 = vunpack.c.l.b16 %v981
      %v1016 = vunpack.c.l.b16 %v982
      %v1017 = vunpack.c.l.b16 %v983
      %v1018 = vunpack.c.l.b16 %v984
      %v1019 = vunpack.c.l.b16 %v985
      %v1020 = vpack.c.b16 %v1005, %v1004
      %v1021 = vpack.c.b16 %v1007, %v1006
      %v1022 = vpack.c.b16 %v1009, %v1008
      %v1023 = vpack.c.b16 %v1011, %v1010
      %v1024 = vpack.c.b16 %v1013, %v1012
      %v1025 = vpack.c.b16 %v1015, %v1014
      %v1026 = vpack.c.b16 %v1017, %v1016
      %v1027 = vpack.c.b16 %v1019, %v1018
      %v1029 = vsel %vm430, %v1020, 0
      %v1032 = vsel %vm430, %v1021, 0
      %v1035 = vsel %vm430, %v1022, 0
      %v1038 = vsel %vm430, %v1023, 0
      %v1041 = vsel %vm430, %v1024, 0
      %v1044 = vsel %vm430, %v1025, 0
      %v1047 = vsel %vm430, %v1026, 0
      %v1050 = vsel %vm430, %v1027, 0
      %v1053 = vsel %vm455, %v987, 0
      %1055 = vmatprep.subr.bf16.mxu0 0
      %1056 = vmatpush1.bf16.msra.mxu0 %v1053
      %1057 = vmatprep.subr.bf16.mxu0 0
      %1058 = vmatpush1.bf16.msra.mxu0 0
      %1059 = vmatprep.subr.bf16.mxu0 0
      %1060 = vmatpush1.bf16.msra.mxu0 0
      %1061 = vmatprep.subr.bf16.mxu0 0
      %1062 = vmatpush1.bf16.msra.mxu0 0
      %1063 = vmatprep.subr.bf16.mxu0 0
      %1064 = vmatpush1.bf16.msra.mxu0 0
      %1065 = vmatprep.subr.bf16.mxu0 0
      %1066 = vmatpush1.bf16.msra.mxu0 0
      %1067 = vmatprep.subr.bf16.mxu0 0
      %1068 = vmatpush1.bf16.msra.mxu0 0
      %1069 = vmatprep.subr.bf16.mxu0 0
      %1070 = vmatpush1.bf16.msra.mxu0 0
      %1071 = vmatprep.subr.bf16.mxu0 0
      %1072 = vmatpush1.bf16.msra.mxu0 0
      %1073 = vmatprep.subr.bf16.mxu0 0
      %1074 = vmatpush1.bf16.msra.mxu0 0
      %1075 = vmatprep.subr.bf16.mxu0 0
      %1076 = vmatpush1.bf16.msra.mxu0 0
      %1077 = vmatprep.subr.bf16.mxu0 0
      %1078 = vmatpush1.bf16.msra.mxu0 0
      %1079 = vmatprep.subr.bf16.mxu0 0
      %1080 = vmatpush1.bf16.msra.mxu0 0
      %1081 = vmatprep.subr.bf16.mxu0 0
      %1082 = vmatpush1.bf16.msra.mxu0 0
      %1083 = vmatprep.subr.bf16.mxu0 0
      %1084 = vmatpush1.bf16.msra.mxu0 0
      %1085 = vmatprep.subr.bf16.mxu0 0
      %1086 = vmatpush1.bf16.msra.mxu0 0
      %1087 = vmatprep.mubr.bf16.mxu0 0
      %1088 = vmatmul.mubr.bf16.gmra.mrb[0].mxu0 %v1029
      %v1089 = vpop.f32.mrb[0].mxu0
      %v1090 = vadd.f32 0.0, %v1089
      %v1091 = vpop.f32.mrb[0].mxu0
      %v1092 = vpop.f32.mrb[0].mxu0
      %v1093 = vadd.f32 0.0, %v1092
      %v1094 = vpop.f32.mrb[0].mxu0
      %1095 = vmatprep.mubr.bf16.mxu0 0
      %1096 = vmatmul.mubr.bf16.gmra.mrb[0].mxu0 %v1032
      %v1097 = vpop.f32.mrb[0].mxu0
      %v1098 = vadd.f32 0.0, %v1097
      %v1099 = vpop.f32.mrb[0].mxu0
      %v1100 = vpop.f32.mrb[0].mxu0
      %v1101 = vadd.f32 0.0, %v1100
      %v1102 = vpop.f32.mrb[0].mxu0
      %1103 = vmatprep.mubr.bf16.mxu0 0
      %1104 = vmatmul.mubr.bf16.gmra.mrb[0].mxu0 %v1035
      %v1105 = vpop.f32.mrb[0].mxu0
      %v1106 = vadd.f32 0.0, %v1105
      %v1107 = vpop.f32.mrb[0].mxu0
      %v1108 = vpop.f32.mrb[0].mxu0
      %v1109 = vadd.f32 0.0, %v1108
      %v1110 = vpop.f32.mrb[0].mxu0
      %1111 = vmatprep.mubr.bf16.mxu0 0
      %1112 = vmatmul.mubr.bf16.gmra.mrb[0].mxu0 %v1038
      %v1113 = vpop.f32.mrb[0].mxu0
      %v1114 = vadd.f32 0.0, %v1113
      %v1115 = vpop.f32.mrb[0].mxu0
      %v1116 = vpop.f32.mrb[0].mxu0
      %v1117 = vadd.f32 0.0, %v1116
      %v1118 = vpop.f32.mrb[0].mxu0
      %1119 = vmatprep.mubr.bf16.mxu0 0
      %1120 = vmatmul.mubr.bf16.gmra.mrb[0].mxu0 %v1041
      %v1121 = vpop.f32.mrb[0].mxu0
      %v1122 = vadd.f32 0.0, %v1121
      %v1123 = vpop.f32.mrb[0].mxu0
      %v1124 = vpop.f32.mrb[0].mxu0
      %v1125 = vadd.f32 0.0, %v1124
      %v1126 = vpop.f32.mrb[0].mxu0
      %1127 = vmatprep.mubr.bf16.mxu0 0
      %1128 = vmatmul.mubr.bf16.gmra.mrb[0].mxu0 %v1044
      %v1129 = vpop.f32.mrb[0].mxu0
      %v1130 = vadd.f32 0.0, %v1129
      %v1131 = vpop.f32.mrb[0].mxu0
      %v1132 = vpop.f32.mrb[0].mxu0
      %v1133 = vadd.f32 0.0, %v1132
      %v1134 = vpop.f32.mrb[0].mxu0
      %1135 = vmatprep.mubr.bf16.mxu0 0
      %1136 = vmatmul.mubr.bf16.gmra.mrb[0].mxu0 %v1047
      %v1137 = vpop.f32.mrb[0].mxu0
      %v1138 = vadd.f32 0.0, %v1137
      %v1139 = vpop.f32.mrb[0].mxu0
      %v1140 = vpop.f32.mrb[0].mxu0
      %v1141 = vadd.f32 0.0, %v1140
      %v1142 = vpop.f32.mrb[0].mxu0
      %1143 = vmatprep.mubr.bf16.mxu0 0
      %1144 = vmatmul.mubr.bf16.gmra.mrb[0].mxu0 %v1050
      %v1145 = vpop.f32.mrb[0].mxu0
      %v1146 = vadd.f32 0.0, %v1145
      %v1147 = vpop.f32.mrb[0].mxu0
      %v1148 = vpop.f32.mrb[0].mxu0
      %v1149 = vadd.f32 0.0, %v1148
      %v1150 = vpop.f32.mrb[0].mxu0
      %1151 = vdwg.mxu0
      %v1152 = vadd.f32 %v953, %v1090
      %v1153 = vadd.f32 %v954, %v1093
      %v1154 = vadd.f32 %v955, %v1098
      %v1155 = vadd.f32 %v956, %v1101
      %v1156 = vadd.f32 %v957, %v1106
      %v1157 = vadd.f32 %v958, %v1109
      %v1158 = vadd.f32 %v959, %v1114
      %v1159 = vadd.f32 %v960, %v1117
      %v1160 = vadd.f32 %v961, %v1122
      %v1161 = vadd.f32 %v962, %v1125
      %v1162 = vadd.f32 %v963, %v1130
      %v1163 = vadd.f32 %v964, %v1133
      %v1164 = vadd.f32 %v965, %v1138
      %v1165 = vadd.f32 %v966, %v1141
      %v1166 = vadd.f32 %v967, %v1146
      %v1167 = vadd.f32 %v968, %v1149
      %v1168 = vld [vmem:[%s969] sm:$0xf]
      %v1169 = vld [vmem:[%s969 + $0x4] sm:$0xf]
      %v1170 = vld [vmem:[%s969 + $0x8] sm:$0x1]
      %v1171 = vld [vmem:[%s969 + $0xc] sm:$0xf]
      %v1172 = vld [vmem:[%s969 + $0x10] sm:$0xf]
      %v1173 = vld [vmem:[%s969 + $0x14] sm:$0x1]
      %v1174 = vld [vmem:[%s969 + $0x18] sm:$0xf]
      %v1175 = vld [vmem:[%s969 + $0x1c] sm:$0xf]
      %v1176 = vld [vmem:[%s969 + $0x20] sm:$0x1]
      %v1177 = vld [vmem:[%s969 + $0x24] sm:$0xf]
      %v1178 = vld [vmem:[%s969 + $0x28] sm:$0xf]
      %v1179 = vld [vmem:[%s969 + $0x2c] sm:$0x1]
      %v1180 = vld [vmem:[%s969 + $0x30] sm:$0xf]
      %v1181 = vld [vmem:[%s969 + $0x34] sm:$0xf]
      %v1182 = vld [vmem:[%s969 + $0x38] sm:$0x1]
      %v1183 = vld [vmem:[%s969 + $0x3c] sm:$0xf]
      %v1184 = vld [vmem:[%s969 + $0x40] sm:$0xf]
      %v1185 = vld [vmem:[%s969 + $0x44] sm:$0x1]
      %v1186 = vld [vmem:[%s969 + $0x48] sm:$0xf]
      %v1187 = vld [vmem:[%s969 + $0x4c] sm:$0xf]
      %v1188 = vld [vmem:[%s969 + $0x50] sm:$0x1]
      %v1189 = vld [vmem:[%s969 + $0x54] sm:$0xf]
      %v1190 = vld [vmem:[%s969 + $0x58] sm:$0xf]
      %v1191 = vld [vmem:[%s969 + $0x5c] sm:$0x1]
      %v1193 = vshrl.u32 %v1168, 16
      %v1195 = vrot.slane %v1193, 4
      %v1196 = vshll.u32 %v1168, 16
      %v1198 = vrot.slane %v1196, 5
      %v1199 = vor.u32 %v1195, %v1198
      %v1200 = vrot.slane %v1199, 4
      %v1202 = vshll.u32 %v1169, 16
      %v1204 = vrot.slane %v1202, 5
      %v1205 = vsel %vm211, %v1200, %v1204
      %v1206 = vshrl.u32 %v1169, 16
      %v1208 = vrot.slane %v1206, 4
      %v1209 = vor.u32 %v1208, %v1204
      %v1210 = vrot.slane %v1209, 4
      %v1212 = vshll.u32 %v1170, 16
      %v1214 = vrot.slane %v1212, 5
      %v1215 = vsel %vm211, %v1210, %v1214
      %v1217 = vshrl.u32 %v1171, 16
      %v1219 = vrot.slane %v1217, 4
      %v1220 = vshll.u32 %v1171, 16
      %v1222 = vrot.slane %v1220, 5
      %v1223 = vor.u32 %v1219, %v1222
      %v1224 = vrot.slane %v1223, 4
      %v1226 = vshll.u32 %v1172, 16
      %v1228 = vrot.slane %v1226, 5
      %v1229 = vsel %vm211, %v1224, %v1228
      %v1230 = vshrl.u32 %v1172, 16
      %v1232 = vrot.slane %v1230, 4
      %v1233 = vor.u32 %v1232, %v1228
      %v1234 = vrot.slane %v1233, 4
      %v1236 = vshll.u32 %v1173, 16
      %v1238 = vrot.slane %v1236, 5
      %v1239 = vsel %vm211, %v1234, %v1238
      %v1241 = vshrl.u32 %v1174, 16
      %v1243 = vrot.slane %v1241, 4
      %v1244 = vshll.u32 %v1174, 16
      %v1246 = vrot.slane %v1244, 5
      %v1247 = vor.u32 %v1243, %v1246
      %v1248 = vrot.slane %v1247, 4
      %v1250 = vshll.u32 %v1175, 16
      %v1252 = vrot.slane %v1250, 5
      %v1253 = vsel %vm211, %v1248, %v1252
      %v1254 = vshrl.u32 %v1175, 16
      %v1256 = vrot.slane %v1254, 4
      %v1257 = vor.u32 %v1256, %v1252
      %v1258 = vrot.slane %v1257, 4
      %v1260 = vshll.u32 %v1176, 16
      %v1262 = vrot.slane %v1260, 5
      %v1263 = vsel %vm211, %v1258, %v1262
      %v1265 = vshrl.u32 %v1177, 16
      %v1267 = vrot.slane %v1265, 4
      %v1268 = vshll.u32 %v1177, 16
      %v1270 = vrot.slane %v1268, 5
      %v1271 = vor.u32 %v1267, %v1270
      %v1272 = vrot.slane %v1271, 4
      %v1274 = vshll.u32 %v1178, 16
      %v1276 = vrot.slane %v1274, 5
      %v1277 = vsel %vm211, %v1272, %v1276
      %v1278 = vshrl.u32 %v1178, 16
      %v1280 = vrot.slane %v1278, 4
      %v1281 = vor.u32 %v1280, %v1276
      %v1282 = vrot.slane %v1281, 4
      %v1284 = vshll.u32 %v1179, 16
      %v1286 = vrot.slane %v1284, 5
      %v1287 = vsel %vm211, %v1282, %v1286
      %v1289 = vshrl.u32 %v1180, 16
      %v1291 = vrot.slane %v1289, 4
      %v1292 = vshll.u32 %v1180, 16
      %v1294 = vrot.slane %v1292, 5
      %v1295 = vor.u32 %v1291, %v1294
      %v1296 = vrot.slane %v1295, 4
      %v1298 = vshll.u32 %v1181, 16
      %v1300 = vrot.slane %v1298, 5
      %v1301 = vsel %vm211, %v1296, %v1300
      %v1302 = vshrl.u32 %v1181, 16
      %v1304 = vrot.slane %v1302, 4
      %v1305 = vor.u32 %v1304, %v1300
      %v1306 = vrot.slane %v1305, 4
      %v1308 = vshll.u32 %v1182, 16
      %v1310 = vrot.slane %v1308, 5
      %v1311 = vsel %vm211, %v1306, %v1310
      %v1313 = vshrl.u32 %v1183, 16
      %v1315 = vrot.slane %v1313, 4
      %v1316 = vshll.u32 %v1183, 16
      %v1318 = vrot.slane %v1316, 5
      %v1319 = vor.u32 %v1315, %v1318
      %v1320 = vrot.slane %v1319, 4
      %v1322 = vshll.u32 %v1184, 16
      %v1324 = vrot.slane %v1322, 5
      %v1325 = vsel %vm211, %v1320, %v1324
      %v1326 = vshrl.u32 %v1184, 16
      %v1328 = vrot.slane %v1326, 4
      %v1329 = vor.u32 %v1328, %v1324
      %v1330 = vrot.slane %v1329, 4
      %v1332 = vshll.u32 %v1185, 16
      %v1334 = vrot.slane %v1332, 5
      %v1335 = vsel %vm211, %v1330, %v1334
      %v1337 = vshrl.u32 %v1186, 16
      %v1339 = vrot.slane %v1337, 4
      %v1340 = vshll.u32 %v1186, 16
      %v1342 = vrot.slane %v1340, 5
      %v1343 = vor.u32 %v1339, %v1342
      %v1344 = vrot.slane %v1343, 4
      %v1346 = vshll.u32 %v1187, 16
      %v1348 = vrot.slane %v1346, 5
      %v1349 = vsel %vm211, %v1344, %v1348
      %v1350 = vshrl.u32 %v1187, 16
      %v1352 = vrot.slane %v1350, 4
      %v1353 = vor.u32 %v1352, %v1348
      %v1354 = vrot.slane %v1353, 4
      %v1356 = vshll.u32 %v1188, 16
      %v1358 = vrot.slane %v1356, 5
      %v1359 = vsel %vm211, %v1354, %v1358
      %v1361 = vshrl.u32 %v1189, 16
      %v1363 = vrot.slane %v1361, 4
      %v1364 = vshll.u32 %v1189, 16
      %v1366 = vrot.slane %v1364, 5
      %v1367 = vor.u32 %v1363, %v1366
      %v1368 = vrot.slane %v1367, 4
      %v1370 = vshll.u32 %v1190, 16
      %v1372 = vrot.slane %v1370, 5
      %v1373 = vsel %vm211, %v1368, %v1372
      %v1374 = vshrl.u32 %v1190, 16
      %v1376 = vrot.slane %v1374, 4
      %v1377 = vor.u32 %v1376, %v1372
      %v1378 = vrot.slane %v1377, 4
      %v1380 = vshll.u32 %v1191, 16
      %v1382 = vrot.slane %v1380, 5
      %v1383 = vsel %vm211, %v1378, %v1382
      %s1384 = scalar_lea.vmem %s1, 16
      %v1385 = vld [vmem:[%s1384] sm:$0xf]
      %v1386 = vunpack.c.l.b16 %v1205
      %v1387 = vunpack.c.l.b16 %v1215
      %v1388 = vunpack.c.l.b16 %v1229
      %v1389 = vunpack.c.l.b16 %v1239
      %v1390 = vunpack.c.l.b16 %v1253
      %v1391 = vunpack.c.l.b16 %v1263
      %v1392 = vunpack.c.l.b16 %v1277
      %v1393 = vunpack.c.l.b16 %v1287
      %v1394 = vunpack.c.l.b16 %v1301
      %v1395 = vunpack.c.l.b16 %v1311
      %v1396 = vunpack.c.l.b16 %v1325
      %v1397 = vunpack.c.l.b16 %v1335
      %v1398 = vunpack.c.l.b16 %v1349
      %v1399 = vunpack.c.l.b16 %v1359
      %v1400 = vunpack.c.l.b16 %v1373
      %v1401 = vunpack.c.l.b16 %v1383
      %v1402 = vpack.c.b16 %v1387, %v1386
      %v1403 = vpack.c.b16 %v1389, %v1388
      %v1404 = vpack.c.b16 %v1391, %v1390
      %v1405 = vpack.c.b16 %v1393, %v1392
      %v1406 = vpack.c.b16 %v1395, %v1394
      %v1407 = vpack.c.b16 %v1397, %v1396
      %v1408 = vpack.c.b16 %v1399, %v1398
      %v1409 = vpack.c.b16 %v1401, %v1400
      %v1411 = vsel %vm430, %v1402, 0
      %v1414 = vsel %vm430, %v1403, 0
      %v1417 = vsel %vm430, %v1404, 0
      %v1420 = vsel %vm430, %v1405, 0
      %v1423 = vsel %vm430, %v1406, 0
      %v1426 = vsel %vm430, %v1407, 0
      %v1429 = vsel %vm430, %v1408, 0
      %v1432 = vsel %vm430, %v1409, 0
      %v1435 = vsel %vm455, %v1385, 0
      %1437 = vmatprep.subr.bf16.mxu0 0
      %1438 = vmatpush1.bf16.msra.mxu0 %v1435
      %1439 = vmatprep.subr.bf16.mxu0 0
      %1440 = vmatpush1.bf16.msra.mxu0 0
      %1441 = vmatprep.subr.bf16.mxu0 0
      %1442 = vmatpush1.bf16.msra.mxu0 0
      %1443 = vmatprep.subr.bf16.mxu0 0
      %1444 = vmatpush1.bf16.msra.mxu0 0
      %1445 = vmatprep.subr.bf16.mxu0 0
      %1446 = vmatpush1.bf16.msra.mxu0 0
      %1447 = vmatprep.subr.bf16.mxu0 0
      %1448 = vmatpush1.bf16.msra.mxu0 0
      %1449 = vmatprep.subr.bf16.mxu0 0
      %1450 = vmatpush1.bf16.msra.mxu0 0
      %1451 = vmatprep.subr.bf16.mxu0 0
      %1452 = vmatpush1.bf16.msra.mxu0 0
      %1453 = vmatprep.subr.bf16.mxu0 0
      %1454 = vmatpush1.bf16.msra.mxu0 0
      %1455 = vmatprep.subr.bf16.mxu0 0
      %1456 = vmatpush1.bf16.msra.mxu0 0
      %1457 = vmatprep.subr.bf16.mxu0 0
      %1458 = vmatpush1.bf16.msra.mxu0 0
      %1459 = vmatprep.subr.bf16.mxu0 0
      %1460 = vmatpush1.bf16.msra.mxu0 0
      %1461 = vmatprep.subr.bf16.mxu0 0
      %1462 = vmatpush1.bf16.msra.mxu0 0
      %1463 = vmatprep.subr.bf16.mxu0 0
      %1464 = vmatpush1.bf16.msra.mxu0 0
      %1465 = vmatprep.subr.bf16.mxu0 0
      %1466 = vmatpush1.bf16.msra.mxu0 0
      %1467 = vmatprep.subr.bf16.mxu0 0
      %1468 = vmatpush1.bf16.msra.mxu0 0
      %1469 = vmatprep.mubr.bf16.mxu0 0
      %1470 = vmatmul.mubr.bf16.gmra.mrb[0].mxu0 %v1411
      %v1471 = vpop.f32.mrb[0].mxu0
      %v1472 = vadd.f32 0.0, %v1471
      %v1473 = vpop.f32.mrb[0].mxu0
      %v1474 = vpop.f32.mrb[0].mxu0
      %v1475 = vadd.f32 0.0, %v1474
      %v1476 = vpop.f32.mrb[0].mxu0
      %1477 = vmatprep.mubr.bf16.mxu0 0
      %1478 = vmatmul.mubr.bf16.gmra.mrb[0].mxu0 %v1414
      %v1479 = vpop.f32.mrb[0].mxu0
      %v1480 = vadd.f32 0.0, %v1479
      %v1481 = vpop.f32.mrb[0].mxu0
      %v1482 = vpop.f32.mrb[0].mxu0
      %v1483 = vadd.f32 0.0, %v1482
      %v1484 = vpop.f32.mrb[0].mxu0
      %1485 = vmatprep.mubr.bf16.mxu0 0
      %1486 = vmatmul.mubr.bf16.gmra.mrb[0].mxu0 %v1417
      %v1487 = vpop.f32.mrb[0].mxu0
      %v1488 = vadd.f32 0.0, %v1487
      %v1489 = vpop.f32.mrb[0].mxu0
      %v1490 = vpop.f32.mrb[0].mxu0
      %v1491 = vadd.f32 0.0, %v1490
      %v1492 = vpop.f32.mrb[0].mxu0
      %1493 = vmatprep.mubr.bf16.mxu0 0
      %1494 = vmatmul.mubr.bf16.gmra.mrb[0].mxu0 %v1420
      %v1495 = vpop.f32.mrb[0].mxu0
      %v1496 = vadd.f32 0.0, %v1495
      %v1497 = vpop.f32.mrb[0].mxu0
      %v1498 = vpop.f32.mrb[0].mxu0
      %v1499 = vadd.f32 0.0, %v1498
      %v1500 = vpop.f32.mrb[0].mxu0
      %1501 = vmatprep.mubr.bf16.mxu0 0
      %1502 = vmatmul.mubr.bf16.gmra.mrb[0].mxu0 %v1423
      %v1503 = vpop.f32.mrb[0].mxu0
      %v1504 = vadd.f32 0.0, %v1503
      %v1505 = vpop.f32.mrb[0].mxu0
      %v1506 = vpop.f32.mrb[0].mxu0
      %v1507 = vadd.f32 0.0, %v1506
      %v1508 = vpop.f32.mrb[0].mxu0
      %1509 = vmatprep.mubr.bf16.mxu0 0
      %1510 = vmatmul.mubr.bf16.gmra.mrb[0].mxu0 %v1426
      %v1511 = vpop.f32.mrb[0].mxu0
      %v1512 = vadd.f32 0.0, %v1511
      %v1513 = vpop.f32.mrb[0].mxu0
      %v1514 = vpop.f32.mrb[0].mxu0
      %v1515 = vadd.f32 0.0, %v1514
      %v1516 = vpop.f32.mrb[0].mxu0
      %1517 = vmatprep.mubr.bf16.mxu0 0
      %1518 = vmatmul.mubr.bf16.gmra.mrb[0].mxu0 %v1429
      %v1519 = vpop.f32.mrb[0].mxu0
      %v1520 = vadd.f32 0.0, %v1519
      %v1521 = vpop.f32.mrb[0].mxu0
      %v1522 = vpop.f32.mrb[0].mxu0
      %v1523 = vadd.f32 0.0, %v1522
      %v1524 = vpop.f32.mrb[0].mxu0
      %1525 = vmatprep.mubr.bf16.mxu0 0
      %1526 = vmatmul.mubr.bf16.gmra.mrb[0].mxu0 %v1432
      %v1527 = vpop.f32.mrb[0].mxu0
      %v1528 = vadd.f32 0.0, %v1527
      %v1529 = vpop.f32.mrb[0].mxu0
      %v1530 = vpop.f32.mrb[0].mxu0
      %v1531 = vadd.f32 0.0, %v1530
      %v1532 = vpop.f32.mrb[0].mxu0
      %1533 = vdwg.mxu0
      %v1534 = vadd.f32 %v1152, %v1472
      %v1535 = vadd.f32 %v1153, %v1475
      %v1536 = vadd.f32 %v1154, %v1480
      %v1537 = vadd.f32 %v1155, %v1483
      %v1538 = vadd.f32 %v1156, %v1488
      %v1539 = vadd.f32 %v1157, %v1491
      %v1540 = vadd.f32 %v1158, %v1496
      %v1541 = vadd.f32 %v1159, %v1499
      %v1542 = vadd.f32 %v1160, %v1504
      %v1543 = vadd.f32 %v1161, %v1507
      %v1544 = vadd.f32 %v1162, %v1512
      %v1545 = vadd.f32 %v1163, %v1515
      %v1546 = vadd.f32 %v1164, %v1520
      %v1547 = vadd.f32 %v1165, %v1523
      %v1548 = vadd.f32 %v1166, %v1528
      %v1549 = vadd.f32 %v1167, %v1531
      %v1550 = vld [vmem:[%s969] sm:$0xe]
      %v1551 = vld [vmem:[%s969 + $0xc] sm:$0xe]
      %v1552 = vld [vmem:[%s969 + $0x18] sm:$0xe]
      %v1553 = vld [vmem:[%s969 + $0x24] sm:$0xe]
      %v1554 = vld [vmem:[%s969 + $0x30] sm:$0xe]
      %v1555 = vld [vmem:[%s969 + $0x3c] sm:$0xe]
      %v1556 = vld [vmem:[%s969 + $0x48] sm:$0xe]
      %v1557 = vld [vmem:[%s969 + $0x54] sm:$0xe]
      %v1582 = vrot.slane %v1550, 5
      %v1583 = vrot.slane %v1582, 4
      %v1584 = vrot.slane %v1169, 5
      %v1585 = vsel %vm746, %v1583, %v1584
      %v1586 = vrot.slane %v1584, 4
      %v1587 = vrot.slane %v1170, 5
      %v1588 = vsel %vm746, %v1586, %v1587
      %v1589 = vrot.slane %v1551, 5
      %v1590 = vrot.slane %v1589, 4
      %v1591 = vrot.slane %v1172, 5
      %v1592 = vsel %vm746, %v1590, %v1591
      %v1593 = vrot.slane %v1591, 4
      %v1594 = vrot.slane %v1173, 5
      %v1595 = vsel %vm746, %v1593, %v1594
      %v1596 = vrot.slane %v1552, 5
      %v1597 = vrot.slane %v1596, 4
      %v1598 = vrot.slane %v1175, 5
      %v1599 = vsel %vm746, %v1597, %v1598
      %v1600 = vrot.slane %v1598, 4
      %v1601 = vrot.slane %v1176, 5
      %v1602 = vsel %vm746, %v1600, %v1601
      %v1603 = vrot.slane %v1553, 5
      %v1604 = vrot.slane %v1603, 4
      %v1605 = vrot.slane %v1178, 5
      %v1606 = vsel %vm746, %v1604, %v1605
      %v1607 = vrot.slane %v1605, 4
      %v1608 = vrot.slane %v1179, 5
      %v1609 = vsel %vm746, %v1607, %v1608
      %v1610 = vrot.slane %v1554, 5
      %v1611 = vrot.slane %v1610, 4
      %v1612 = vrot.slane %v1181, 5
      %v1613 = vsel %vm746, %v1611, %v1612
      %v1614 = vrot.slane %v1612, 4
      %v1615 = vrot.slane %v1182, 5
      %v1616 = vsel %vm746, %v1614, %v1615
      %v1617 = vrot.slane %v1555, 5
      %v1618 = vrot.slane %v1617, 4
      %v1619 = vrot.slane %v1184, 5
      %v1620 = vsel %vm746, %v1618, %v1619
      %v1621 = vrot.slane %v1619, 4
      %v1622 = vrot.slane %v1185, 5
      %v1623 = vsel %vm746, %v1621, %v1622
      %v1624 = vrot.slane %v1556, 5
      %v1625 = vrot.slane %v1624, 4
      %v1626 = vrot.slane %v1187, 5
      %v1627 = vsel %vm746, %v1625, %v1626
      %v1628 = vrot.slane %v1626, 4
      %v1629 = vrot.slane %v1188, 5
      %v1630 = vsel %vm746, %v1628, %v1629
      %v1631 = vrot.slane %v1557, 5
      %v1632 = vrot.slane %v1631, 4
      %v1633 = vrot.slane %v1190, 5
      %v1634 = vsel %vm746, %v1632, %v1633
      %v1635 = vrot.slane %v1633, 4
      %v1636 = vrot.slane %v1191, 5
      %v1637 = vsel %vm746, %v1635, %v1636
      %s1638 = scalar_lea.vmem %s1, 20
      %v1639 = vld [vmem:[%s1638] sm:$0xf]
      %v1640 = vunpack.c.l.b16 %v1585
      %v1641 = vunpack.c.l.b16 %v1588
      %v1642 = vunpack.c.l.b16 %v1592
      %v1643 = vunpack.c.l.b16 %v1595
      %v1644 = vunpack.c.l.b16 %v1599
      %v1645 = vunpack.c.l.b16 %v1602
      %v1646 = vunpack.c.l.b16 %v1606
      %v1647 = vunpack.c.l.b16 %v1609
      %v1648 = vunpack.c.l.b16 %v1613
      %v1649 = vunpack.c.l.b16 %v1616
      %v1650 = vunpack.c.l.b16 %v1620
      %v1651 = vunpack.c.l.b16 %v1623
      %v1652 = vunpack.c.l.b16 %v1627
      %v1653 = vunpack.c.l.b16 %v1630
      %v1654 = vunpack.c.l.b16 %v1634
      %v1655 = vunpack.c.l.b16 %v1637
      %v1656 = vpack.c.b16 %v1641, %v1640
      %v1657 = vpack.c.b16 %v1643, %v1642
      %v1658 = vpack.c.b16 %v1645, %v1644
      %v1659 = vpack.c.b16 %v1647, %v1646
      %v1660 = vpack.c.b16 %v1649, %v1648
      %v1661 = vpack.c.b16 %v1651, %v1650
      %v1662 = vpack.c.b16 %v1653, %v1652
      %v1663 = vpack.c.b16 %v1655, %v1654
      %v1665 = vsel %vm430, %v1656, 0
      %v1668 = vsel %vm430, %v1657, 0
      %v1671 = vsel %vm430, %v1658, 0
      %v1674 = vsel %vm430, %v1659, 0
      %v1677 = vsel %vm430, %v1660, 0
      %v1680 = vsel %vm430, %v1661, 0
      %v1683 = vsel %vm430, %v1662, 0
      %v1686 = vsel %vm430, %v1663, 0
      %v1689 = vsel %vm455, %v1639, 0
      %1691 = vmatprep.subr.bf16.mxu0 0
      %1692 = vmatpush1.bf16.msra.mxu0 %v1689
      %1693 = vmatprep.subr.bf16.mxu0 0
      %1694 = vmatpush1.bf16.msra.mxu0 0
      %1695 = vmatprep.subr.bf16.mxu0 0
      %1696 = vmatpush1.bf16.msra.mxu0 0
      %1697 = vmatprep.subr.bf16.mxu0 0
      %1698 = vmatpush1.bf16.msra.mxu0 0
      %1699 = vmatprep.subr.bf16.mxu0 0
      %1700 = vmatpush1.bf16.msra.mxu0 0
      %1701 = vmatprep.subr.bf16.mxu0 0
      %1702 = vmatpush1.bf16.msra.mxu0 0
      %1703 = vmatprep.subr.bf16.mxu0 0
      %1704 = vmatpush1.bf16.msra.mxu0 0
      %1705 = vmatprep.subr.bf16.mxu0 0
      %1706 = vmatpush1.bf16.msra.mxu0 0
      %1707 = vmatprep.subr.bf16.mxu0 0
      %1708 = vmatpush1.bf16.msra.mxu0 0
      %1709 = vmatprep.subr.bf16.mxu0 0
      %1710 = vmatpush1.bf16.msra.mxu0 0
      %1711 = vmatprep.subr.bf16.mxu0 0
      %1712 = vmatpush1.bf16.msra.mxu0 0
      %1713 = vmatprep.subr.bf16.mxu0 0
      %1714 = vmatpush1.bf16.msra.mxu0 0
      %1715 = vmatprep.subr.bf16.mxu0 0
      %1716 = vmatpush1.bf16.msra.mxu0 0
      %1717 = vmatprep.subr.bf16.mxu0 0
      %1718 = vmatpush1.bf16.msra.mxu0 0
      %1719 = vmatprep.subr.bf16.mxu0 0
      %1720 = vmatpush1.bf16.msra.mxu0 0
      %1721 = vmatprep.subr.bf16.mxu0 0
      %1722 = vmatpush1.bf16.msra.mxu0 0
      %1723 = vmatprep.mubr.bf16.mxu0 0
      %1724 = vmatmul.mubr.bf16.gmra.mrb[0].mxu0 %v1665
      %v1725 = vpop.f32.mrb[0].mxu0
      %v1726 = vadd.f32 0.0, %v1725
      %v1727 = vpop.f32.mrb[0].mxu0
      %v1728 = vpop.f32.mrb[0].mxu0
      %v1729 = vadd.f32 0.0, %v1728
      %v1730 = vpop.f32.mrb[0].mxu0
      %1731 = vmatprep.mubr.bf16.mxu0 0
      %1732 = vmatmul.mubr.bf16.gmra.mrb[0].mxu0 %v1668
      %v1733 = vpop.f32.mrb[0].mxu0
      %v1734 = vadd.f32 0.0, %v1733
      %v1735 = vpop.f32.mrb[0].mxu0
      %v1736 = vpop.f32.mrb[0].mxu0
      %v1737 = vadd.f32 0.0, %v1736
      %v1738 = vpop.f32.mrb[0].mxu0
      %1739 = vmatprep.mubr.bf16.mxu0 0
      %1740 = vmatmul.mubr.bf16.gmra.mrb[0].mxu0 %v1671
      %v1741 = vpop.f32.mrb[0].mxu0
      %v1742 = vadd.f32 0.0, %v1741
      %v1743 = vpop.f32.mrb[0].mxu0
      %v1744 = vpop.f32.mrb[0].mxu0
      %v1745 = vadd.f32 0.0, %v1744
      %v1746 = vpop.f32.mrb[0].mxu0
      %1747 = vmatprep.mubr.bf16.mxu0 0
      %1748 = vmatmul.mubr.bf16.gmra.mrb[0].mxu0 %v1674
      %v1749 = vpop.f32.mrb[0].mxu0
      %v1750 = vadd.f32 0.0, %v1749
      %v1751 = vpop.f32.mrb[0].mxu0
      %v1752 = vpop.f32.mrb[0].mxu0
      %v1753 = vadd.f32 0.0, %v1752
      %v1754 = vpop.f32.mrb[0].mxu0
      %1755 = vmatprep.mubr.bf16.mxu0 0
      %1756 = vmatmul.mubr.bf16.gmra.mrb[0].mxu0 %v1677
      %v1757 = vpop.f32.mrb[0].mxu0
      %v1758 = vadd.f32 0.0, %v1757
      %v1759 = vpop.f32.mrb[0].mxu0
      %v1760 = vpop.f32.mrb[0].mxu0
      %v1761 = vadd.f32 0.0, %v1760
      %v1762 = vpop.f32.mrb[0].mxu0
      %1763 = vmatprep.mubr.bf16.mxu0 0
      %1764 = vmatmul.mubr.bf16.gmra.mrb[0].mxu0 %v1680
      %v1765 = vpop.f32.mrb[0].mxu0
      %v1766 = vadd.f32 0.0, %v1765
      %v1767 = vpop.f32.mrb[0].mxu0
      %v1768 = vpop.f32.mrb[0].mxu0
      %v1769 = vadd.f32 0.0, %v1768
      %v1770 = vpop.f32.mrb[0].mxu0
      %1771 = vmatprep.mubr.bf16.mxu0 0
      %1772 = vmatmul.mubr.bf16.gmra.mrb[0].mxu0 %v1683
      %v1773 = vpop.f32.mrb[0].mxu0
      %v1774 = vadd.f32 0.0, %v1773
      %v1775 = vpop.f32.mrb[0].mxu0
      %v1776 = vpop.f32.mrb[0].mxu0
      %v1777 = vadd.f32 0.0, %v1776
      %v1778 = vpop.f32.mrb[0].mxu0
      %1779 = vmatprep.mubr.bf16.mxu0 0
      %1780 = vmatmul.mubr.bf16.gmra.mrb[0].mxu0 %v1686
      %v1781 = vpop.f32.mrb[0].mxu0
      %v1782 = vadd.f32 0.0, %v1781
      %v1783 = vpop.f32.mrb[0].mxu0
      %v1784 = vpop.f32.mrb[0].mxu0
      %v1785 = vadd.f32 0.0, %v1784
      %v1786 = vpop.f32.mrb[0].mxu0
      %1787 = vdwg.mxu0
      %v1788 = vadd.f32 %v1534, %v1726
      %v1789 = vadd.f32 %v1535, %v1729
      %v1790 = vadd.f32 %v1536, %v1734
      %v1791 = vadd.f32 %v1537, %v1737
      %v1792 = vadd.f32 %v1538, %v1742
      %v1793 = vadd.f32 %v1539, %v1745
      %v1794 = vadd.f32 %v1540, %v1750
      %v1795 = vadd.f32 %v1541, %v1753
      %v1796 = vadd.f32 %v1542, %v1758
      %v1797 = vadd.f32 %v1543, %v1761
      %v1798 = vadd.f32 %v1544, %v1766
      %v1799 = vadd.f32 %v1545, %v1769
      %v1800 = vadd.f32 %v1546, %v1774
      %v1801 = vadd.f32 %v1547, %v1777
      %v1802 = vadd.f32 %v1548, %v1782
      %v1803 = vadd.f32 %v1549, %v1785
      %s1804 = scalar_lea.vmem %s172, 24
      %v1805 = vld [vmem:[%s1804] sm:$0xf]
      %v1806 = vld [vmem:[%s1804 + $0x4] sm:$0xf]
      %v1807 = vld [vmem:[%s1804 + $0xc] sm:$0xf]
      %v1808 = vld [vmem:[%s1804 + $0x10] sm:$0xf]
      %v1809 = vld [vmem:[%s1804 + $0x18] sm:$0xf]
      %v1810 = vld [vmem:[%s1804 + $0x1c] sm:$0xf]
      %v1811 = vld [vmem:[%s1804 + $0x24] sm:$0xf]
      %v1812 = vld [vmem:[%s1804 + $0x28] sm:$0xf]
      %v1813 = vld [vmem:[%s1804 + $0x30] sm:$0xf]
      %v1814 = vld [vmem:[%s1804 + $0x34] sm:$0xf]
      %v1815 = vld [vmem:[%s1804 + $0x3c] sm:$0xf]
      %v1816 = vld [vmem:[%s1804 + $0x40] sm:$0xf]
      %v1817 = vld [vmem:[%s1804 + $0x48] sm:$0xf]
      %v1818 = vld [vmem:[%s1804 + $0x4c] sm:$0xf]
      %v1819 = vld [vmem:[%s1804 + $0x54] sm:$0xf]
      %v1820 = vld [vmem:[%s1804 + $0x58] sm:$0xf]
      %s1821 = scalar_lea.vmem %s1, 24
      %v1822 = vld [vmem:[%s1821] sm:$0xf]
      %v1839 = vunpack.c.l.b16 %v1805
      %v1840 = vunpack.c.l.b16 %v1806
      %v1841 = vunpack.c.l.b16 %v1807
      %v1842 = vunpack.c.l.b16 %v1808
      %v1843 = vunpack.c.l.b16 %v1809
      %v1844 = vunpack.c.l.b16 %v1810
      %v1845 = vunpack.c.l.b16 %v1811
      %v1846 = vunpack.c.l.b16 %v1812
      %v1847 = vunpack.c.l.b16 %v1813
      %v1848 = vunpack.c.l.b16 %v1814
      %v1849 = vunpack.c.l.b16 %v1815
      %v1850 = vunpack.c.l.b16 %v1816
      %v1851 = vunpack.c.l.b16 %v1817
      %v1852 = vunpack.c.l.b16 %v1818
      %v1853 = vunpack.c.l.b16 %v1819
      %v1854 = vunpack.c.l.b16 %v1820
      %v1855 = vpack.c.b16 %v1840, %v1839
      %v1856 = vpack.c.b16 %v1842, %v1841
      %v1857 = vpack.c.b16 %v1844, %v1843
      %v1858 = vpack.c.b16 %v1846, %v1845
      %v1859 = vpack.c.b16 %v1848, %v1847
      %v1860 = vpack.c.b16 %v1850, %v1849
      %v1861 = vpack.c.b16 %v1852, %v1851
      %v1862 = vpack.c.b16 %v1854, %v1853
      %v1864 = vsel %vm430, %v1855, 0
      %v1867 = vsel %vm430, %v1856, 0
      %v1870 = vsel %vm430, %v1857, 0
      %v1873 = vsel %vm430, %v1858, 0
      %v1876 = vsel %vm430, %v1859, 0
      %v1879 = vsel %vm430, %v1860, 0
      %v1882 = vsel %vm430, %v1861, 0
      %v1885 = vsel %vm430, %v1862, 0
      %v1888 = vsel %vm455, %v1822, 0
      %1890 = vmatprep.subr.bf16.mxu0 0
      %1891 = vmatpush1.bf16.msra.mxu0 %v1888
      %1892 = vmatprep.subr.bf16.mxu0 0
      %1893 = vmatpush1.bf16.msra.mxu0 0
      %1894 = vmatprep.subr.bf16.mxu0 0
      %1895 = vmatpush1.bf16.msra.mxu0 0
      %1896 = vmatprep.subr.bf16.mxu0 0
      %1897 = vmatpush1.bf16.msra.mxu0 0
      %1898 = vmatprep.subr.bf16.mxu0 0
      %1899 = vmatpush1.bf16.msra.mxu0 0
      %1900 = vmatprep.subr.bf16.mxu0 0
      %1901 = vmatpush1.bf16.msra.mxu0 0
      %1902 = vmatprep.subr.bf16.mxu0 0
      %1903 = vmatpush1.bf16.msra.mxu0 0
      %1904 = vmatprep.subr.bf16.mxu0 0
      %1905 = vmatpush1.bf16.msra.mxu0 0
      %1906 = vmatprep.subr.bf16.mxu0 0
      %1907 = vmatpush1.bf16.msra.mxu0 0
      %1908 = vmatprep.subr.bf16.mxu0 0
      %1909 = vmatpush1.bf16.msra.mxu0 0
      %1910 = vmatprep.subr.bf16.mxu0 0
      %1911 = vmatpush1.bf16.msra.mxu0 0
      %1912 = vmatprep.subr.bf16.mxu0 0
      %1913 = vmatpush1.bf16.msra.mxu0 0
      %1914 = vmatprep.subr.bf16.mxu0 0
      %1915 = vmatpush1.bf16.msra.mxu0 0
      %1916 = vmatprep.subr.bf16.mxu0 0
      %1917 = vmatpush1.bf16.msra.mxu0 0
      %1918 = vmatprep.subr.bf16.mxu0 0
      %1919 = vmatpush1.bf16.msra.mxu0 0
      %1920 = vmatprep.subr.bf16.mxu0 0
      %1921 = vmatpush1.bf16.msra.mxu0 0
      %1922 = vmatprep.mubr.bf16.mxu0 0
      %1923 = vmatmul.mubr.bf16.gmra.mrb[0].mxu0 %v1864
      %v1924 = vpop.f32.mrb[0].mxu0
      %v1925 = vadd.f32 0.0, %v1924
      %v1926 = vpop.f32.mrb[0].mxu0
      %v1927 = vpop.f32.mrb[0].mxu0
      %v1928 = vadd.f32 0.0, %v1927
      %v1929 = vpop.f32.mrb[0].mxu0
      %1930 = vmatprep.mubr.bf16.mxu0 0
      %1931 = vmatmul.mubr.bf16.gmra.mrb[0].mxu0 %v1867
      %v1932 = vpop.f32.mrb[0].mxu0
      %v1933 = vadd.f32 0.0, %v1932
      %v1934 = vpop.f32.mrb[0].mxu0
      %v1935 = vpop.f32.mrb[0].mxu0
      %v1936 = vadd.f32 0.0, %v1935
      %v1937 = vpop.f32.mrb[0].mxu0
      %1938 = vmatprep.mubr.bf16.mxu0 0
      %1939 = vmatmul.mubr.bf16.gmra.mrb[0].mxu0 %v1870
      %v1940 = vpop.f32.mrb[0].mxu0
      %v1941 = vadd.f32 0.0, %v1940
      %v1942 = vpop.f32.mrb[0].mxu0
      %v1943 = vpop.f32.mrb[0].mxu0
      %v1944 = vadd.f32 0.0, %v1943
      %v1945 = vpop.f32.mrb[0].mxu0
      %1946 = vmatprep.mubr.bf16.mxu0 0
      %1947 = vmatmul.mubr.bf16.gmra.mrb[0].mxu0 %v1873
      %v1948 = vpop.f32.mrb[0].mxu0
      %v1949 = vadd.f32 0.0, %v1948
      %v1950 = vpop.f32.mrb[0].mxu0
      %v1951 = vpop.f32.mrb[0].mxu0
      %v1952 = vadd.f32 0.0, %v1951
      %v1953 = vpop.f32.mrb[0].mxu0
      %1954 = vmatprep.mubr.bf16.mxu0 0
      %1955 = vmatmul.mubr.bf16.gmra.mrb[0].mxu0 %v1876
      %v1956 = vpop.f32.mrb[0].mxu0
      %v1957 = vadd.f32 0.0, %v1956
      %v1958 = vpop.f32.mrb[0].mxu0
      %v1959 = vpop.f32.mrb[0].mxu0
      %v1960 = vadd.f32 0.0, %v1959
      %v1961 = vpop.f32.mrb[0].mxu0
      %1962 = vmatprep.mubr.bf16.mxu0 0
      %1963 = vmatmul.mubr.bf16.gmra.mrb[0].mxu0 %v1879
      %v1964 = vpop.f32.mrb[0].mxu0
      %v1965 = vadd.f32 0.0, %v1964
      %v1966 = vpop.f32.mrb[0].mxu0
      %v1967 = vpop.f32.mrb[0].mxu0
      %v1968 = vadd.f32 0.0, %v1967
      %v1969 = vpop.f32.mrb[0].mxu0
      %1970 = vmatprep.mubr.bf16.mxu0 0
      %1971 = vmatmul.mubr.bf16.gmra.mrb[0].mxu0 %v1882
      %v1972 = vpop.f32.mrb[0].mxu0
      %v1973 = vadd.f32 0.0, %v1972
      %v1974 = vpop.f32.mrb[0].mxu0
      %v1975 = vpop.f32.mrb[0].mxu0
      %v1976 = vadd.f32 0.0, %v1975
      %v1977 = vpop.f32.mrb[0].mxu0
      %1978 = vmatprep.mubr.bf16.mxu0 0
      %1979 = vmatmul.mubr.bf16.gmra.mrb[0].mxu0 %v1885
      %v1980 = vpop.f32.mrb[0].mxu0
      %v1981 = vadd.f32 0.0, %v1980
      %v1982 = vpop.f32.mrb[0].mxu0
      %v1983 = vpop.f32.mrb[0].mxu0
      %v1984 = vadd.f32 0.0, %v1983
      %v1985 = vpop.f32.mrb[0].mxu0
      %1986 = vdwg.mxu0
      %v1987 = vadd.f32 %v1788, %v1925
      %v1988 = vadd.f32 %v1789, %v1928
      %v1989 = vadd.f32 %v1790, %v1933
      %v1990 = vadd.f32 %v1791, %v1936
      %v1991 = vadd.f32 %v1792, %v1941
      %v1992 = vadd.f32 %v1793, %v1944
      %v1993 = vadd.f32 %v1794, %v1949
      %v1994 = vadd.f32 %v1795, %v1952
      %v1995 = vadd.f32 %v1796, %v1957
      %v1996 = vadd.f32 %v1797, %v1960
      %v1997 = vadd.f32 %v1798, %v1965
      %v1998 = vadd.f32 %v1799, %v1968
      %v1999 = vadd.f32 %v1800, %v1973
      %v2000 = vadd.f32 %v1801, %v1976
      %v2001 = vadd.f32 %v1802, %v1981
      %v2002 = vadd.f32 %v1803, %v1984
      %v2003 = vld [vmem:[%s1804] sm:$0xf]
      %v2004 = vld [vmem:[%s1804 + $0x4] sm:$0xf]
      %v2005 = vld [vmem:[%s1804 + $0x8] sm:$0x1]
      %v2006 = vld [vmem:[%s1804 + $0xc] sm:$0xf]
      %v2007 = vld [vmem:[%s1804 + $0x10] sm:$0xf]
      %v2008 = vld [vmem:[%s1804 + $0x14] sm:$0x1]
      %v2009 = vld [vmem:[%s1804 + $0x18] sm:$0xf]
      %v2010 = vld [vmem:[%s1804 + $0x1c] sm:$0xf]
      %v2011 = vld [vmem:[%s1804 + $0x20] sm:$0x1]
      %v2012 = vld [vmem:[%s1804 + $0x24] sm:$0xf]
      %v2013 = vld [vmem:[%s1804 + $0x28] sm:$0xf]
      %v2014 = vld [vmem:[%s1804 + $0x2c] sm:$0x1]
      %v2015 = vld [vmem:[%s1804 + $0x30] sm:$0xf]
      %v2016 = vld [vmem:[%s1804 + $0x34] sm:$0xf]
      %v2017 = vld [vmem:[%s1804 + $0x38] sm:$0x1]
      %v2018 = vld [vmem:[%s1804 + $0x3c] sm:$0xf]
      %v2019 = vld [vmem:[%s1804 + $0x40] sm:$0xf]
      %v2020 = vld [vmem:[%s1804 + $0x44] sm:$0x1]
      %v2021 = vld [vmem:[%s1804 + $0x48] sm:$0xf]
      %v2022 = vld [vmem:[%s1804 + $0x4c] sm:$0xf]
      %v2023 = vld [vmem:[%s1804 + $0x50] sm:$0x1]
      %v2024 = vld [vmem:[%s1804 + $0x54] sm:$0xf]
      %v2025 = vld [vmem:[%s1804 + $0x58] sm:$0xf]
      %v2026 = vld [vmem:[%s1804 + $0x5c] sm:$0x1]
      %v2028 = vshrl.u32 %v2003, 16
      %v2030 = vrot.slane %v2028, 4
      %v2031 = vshll.u32 %v2003, 16
      %v2033 = vrot.slane %v2031, 5
      %v2034 = vor.u32 %v2030, %v2033
      %v2035 = vrot.slane %v2034, 4
      %v2037 = vshll.u32 %v2004, 16
      %v2039 = vrot.slane %v2037, 5
      %v2040 = vsel %vm211, %v2035, %v2039
      %v2041 = vshrl.u32 %v2004, 16
      %v2043 = vrot.slane %v2041, 4
      %v2044 = vor.u32 %v2043, %v2039
      %v2045 = vrot.slane %v2044, 4
      %v2047 = vshll.u32 %v2005, 16
      %v2049 = vrot.slane %v2047, 5
      %v2050 = vsel %vm211, %v2045, %v2049
      %v2052 = vshrl.u32 %v2006, 16
      %v2054 = vrot.slane %v2052, 4
      %v2055 = vshll.u32 %v2006, 16
      %v2057 = vrot.slane %v2055, 5
      %v2058 = vor.u32 %v2054, %v2057
      %v2059 = vrot.slane %v2058, 4
      %v2061 = vshll.u32 %v2007, 16
      %v2063 = vrot.slane %v2061, 5
      %v2064 = vsel %vm211, %v2059, %v2063
      %v2065 = vshrl.u32 %v2007, 16
      %v2067 = vrot.slane %v2065, 4
      %v2068 = vor.u32 %v2067, %v2063
      %v2069 = vrot.slane %v2068, 4
      %v2071 = vshll.u32 %v2008, 16
      %v2073 = vrot.slane %v2071, 5
      %v2074 = vsel %vm211, %v2069, %v2073
      %v2076 = vshrl.u32 %v2009, 16
      %v2078 = vrot.slane %v2076, 4
      %v2079 = vshll.u32 %v2009, 16
      %v2081 = vrot.slane %v2079, 5
      %v2082 = vor.u32 %v2078, %v2081
      %v2083 = vrot.slane %v2082, 4
      %v2085 = vshll.u32 %v2010, 16
      %v2087 = vrot.slane %v2085, 5
      %v2088 = vsel %vm211, %v2083, %v2087
      %v2089 = vshrl.u32 %v2010, 16
      %v2091 = vrot.slane %v2089, 4
      %v2092 = vor.u32 %v2091, %v2087
      %v2093 = vrot.slane %v2092, 4
      %v2095 = vshll.u32 %v2011, 16
      %v2097 = vrot.slane %v2095, 5
      %v2098 = vsel %vm211, %v2093, %v2097
      %v2100 = vshrl.u32 %v2012, 16
      %v2102 = vrot.slane %v2100, 4
      %v2103 = vshll.u32 %v2012, 16
      %v2105 = vrot.slane %v2103, 5
      %v2106 = vor.u32 %v2102, %v2105
      %v2107 = vrot.slane %v2106, 4
      %v2109 = vshll.u32 %v2013, 16
      %v2111 = vrot.slane %v2109, 5
      %v2112 = vsel %vm211, %v2107, %v2111
      %v2113 = vshrl.u32 %v2013, 16
      %v2115 = vrot.slane %v2113, 4
      %v2116 = vor.u32 %v2115, %v2111
      %v2117 = vrot.slane %v2116, 4
      %v2119 = vshll.u32 %v2014, 16
      %v2121 = vrot.slane %v2119, 5
      %v2122 = vsel %vm211, %v2117, %v2121
      %v2124 = vshrl.u32 %v2015, 16
      %v2126 = vrot.slane %v2124, 4
      %v2127 = vshll.u32 %v2015, 16
      %v2129 = vrot.slane %v2127, 5
      %v2130 = vor.u32 %v2126, %v2129
      %v2131 = vrot.slane %v2130, 4
      %v2133 = vshll.u32 %v2016, 16
      %v2135 = vrot.slane %v2133, 5
      %v2136 = vsel %vm211, %v2131, %v2135
      %v2137 = vshrl.u32 %v2016, 16
      %v2139 = vrot.slane %v2137, 4
      %v2140 = vor.u32 %v2139, %v2135
      %v2141 = vrot.slane %v2140, 4
      %v2143 = vshll.u32 %v2017, 16
      %v2145 = vrot.slane %v2143, 5
      %v2146 = vsel %vm211, %v2141, %v2145
      %v2148 = vshrl.u32 %v2018, 16
      %v2150 = vrot.slane %v2148, 4
      %v2151 = vshll.u32 %v2018, 16
      %v2153 = vrot.slane %v2151, 5
      %v2154 = vor.u32 %v2150, %v2153
      %v2155 = vrot.slane %v2154, 4
      %v2157 = vshll.u32 %v2019, 16
      %v2159 = vrot.slane %v2157, 5
      %v2160 = vsel %vm211, %v2155, %v2159
      %v2161 = vshrl.u32 %v2019, 16
      %v2163 = vrot.slane %v2161, 4
      %v2164 = vor.u32 %v2163, %v2159
      %v2165 = vrot.slane %v2164, 4
      %v2167 = vshll.u32 %v2020, 16
      %v2169 = vrot.slane %v2167, 5
      %v2170 = vsel %vm211, %v2165, %v2169
      %v2172 = vshrl.u32 %v2021, 16
      %v2174 = vrot.slane %v2172, 4
      %v2175 = vshll.u32 %v2021, 16
      %v2177 = vrot.slane %v2175, 5
      %v2178 = vor.u32 %v2174, %v2177
      %v2179 = vrot.slane %v2178, 4
      %v2181 = vshll.u32 %v2022, 16
      %v2183 = vrot.slane %v2181, 5
      %v2184 = vsel %vm211, %v2179, %v2183
      %v2185 = vshrl.u32 %v2022, 16
      %v2187 = vrot.slane %v2185, 4
      %v2188 = vor.u32 %v2187, %v2183
      %v2189 = vrot.slane %v2188, 4
      %v2191 = vshll.u32 %v2023, 16
      %v2193 = vrot.slane %v2191, 5
      %v2194 = vsel %vm211, %v2189, %v2193
      %v2196 = vshrl.u32 %v2024, 16
      %v2198 = vrot.slane %v2196, 4
      %v2199 = vshll.u32 %v2024, 16
      %v2201 = vrot.slane %v2199, 5
      %v2202 = vor.u32 %v2198, %v2201
      %v2203 = vrot.slane %v2202, 4
      %v2205 = vshll.u32 %v2025, 16
      %v2207 = vrot.slane %v2205, 5
      %v2208 = vsel %vm211, %v2203, %v2207
      %v2209 = vshrl.u32 %v2025, 16
      %v2211 = vrot.slane %v2209, 4
      %v2212 = vor.u32 %v2211, %v2207
      %v2213 = vrot.slane %v2212, 4
      %v2215 = vshll.u32 %v2026, 16
      %v2217 = vrot.slane %v2215, 5
      %v2218 = vsel %vm211, %v2213, %v2217
      %s2219 = scalar_lea.vmem %s1, 28
      %v2220 = vld [vmem:[%s2219] sm:$0xf]
      %v2221 = vunpack.c.l.b16 %v2040
      %v2222 = vunpack.c.l.b16 %v2050
      %v2223 = vunpack.c.l.b16 %v2064
      %v2224 = vunpack.c.l.b16 %v2074
      %v2225 = vunpack.c.l.b16 %v2088
      %v2226 = vunpack.c.l.b16 %v2098
      %v2227 = vunpack.c.l.b16 %v2112
      %v2228 = vunpack.c.l.b16 %v2122
      %v2229 = vunpack.c.l.b16 %v2136
      %v2230 = vunpack.c.l.b16 %v2146
      %v2231 = vunpack.c.l.b16 %v2160
      %v2232 = vunpack.c.l.b16 %v2170
      %v2233 = vunpack.c.l.b16 %v2184
      %v2234 = vunpack.c.l.b16 %v2194
      %v2235 = vunpack.c.l.b16 %v2208
      %v2236 = vunpack.c.l.b16 %v2218
      %v2237 = vpack.c.b16 %v2222, %v2221
      %v2238 = vpack.c.b16 %v2224, %v2223
      %v2239 = vpack.c.b16 %v2226, %v2225
      %v2240 = vpack.c.b16 %v2228, %v2227
      %v2241 = vpack.c.b16 %v2230, %v2229
      %v2242 = vpack.c.b16 %v2232, %v2231
      %v2243 = vpack.c.b16 %v2234, %v2233
      %v2244 = vpack.c.b16 %v2236, %v2235
      %v2246 = vsel %vm430, %v2237, 0
      %v2249 = vsel %vm430, %v2238, 0
      %v2252 = vsel %vm430, %v2239, 0
      %v2255 = vsel %vm430, %v2240, 0
      %v2258 = vsel %vm430, %v2241, 0
      %v2261 = vsel %vm430, %v2242, 0
      %v2264 = vsel %vm430, %v2243, 0
      %v2267 = vsel %vm430, %v2244, 0
      %v2270 = vsel %vm455, %v2220, 0
      %2272 = vmatprep.subr.bf16.mxu0 0
      %2273 = vmatpush1.bf16.msra.mxu0 %v2270
      %2274 = vmatprep.subr.bf16.mxu0 0
      %2275 = vmatpush1.bf16.msra.mxu0 0
      %2276 = vmatprep.subr.bf16.mxu0 0
      %2277 = vmatpush1.bf16.msra.mxu0 0
      %2278 = vmatprep.subr.bf16.mxu0 0
      %2279 = vmatpush1.bf16.msra.mxu0 0
      %2280 = vmatprep.subr.bf16.mxu0 0
      %2281 = vmatpush1.bf16.msra.mxu0 0
      %2282 = vmatprep.subr.bf16.mxu0 0
      %2283 = vmatpush1.bf16.msra.mxu0 0
      %2284 = vmatprep.subr.bf16.mxu0 0
      %2285 = vmatpush1.bf16.msra.mxu0 0
      %2286 = vmatprep.subr.bf16.mxu0 0
      %2287 = vmatpush1.bf16.msra.mxu0 0
      %2288 = vmatprep.subr.bf16.mxu0 0
      %2289 = vmatpush1.bf16.msra.mxu0 0
      %2290 = vmatprep.subr.bf16.mxu0 0
      %2291 = vmatpush1.bf16.msra.mxu0 0
      %2292 = vmatprep.subr.bf16.mxu0 0
      %2293 = vmatpush1.bf16.msra.mxu0 0
      %2294 = vmatprep.subr.bf16.mxu0 0
      %2295 = vmatpush1.bf16.msra.mxu0 0
      %2296 = vmatprep.subr.bf16.mxu0 0
      %2297 = vmatpush1.bf16.msra.mxu0 0
      %2298 = vmatprep.subr.bf16.mxu0 0
      %2299 = vmatpush1.bf16.msra.mxu0 0
      %2300 = vmatprep.subr.bf16.mxu0 0
      %2301 = vmatpush1.bf16.msra.mxu0 0
      %2302 = vmatprep.subr.bf16.mxu0 0
      %2303 = vmatpush1.bf16.msra.mxu0 0
      %2304 = vmatprep.mubr.bf16.mxu0 0
      %2305 = vmatmul.mubr.bf16.gmra.mrb[0].mxu0 %v2246
      %v2306 = vpop.f32.mrb[0].mxu0
      %v2307 = vadd.f32 0.0, %v2306
      %v2308 = vpop.f32.mrb[0].mxu0
      %v2309 = vpop.f32.mrb[0].mxu0
      %v2310 = vadd.f32 0.0, %v2309
      %v2311 = vpop.f32.mrb[0].mxu0
      %2312 = vmatprep.mubr.bf16.mxu0 0
      %2313 = vmatmul.mubr.bf16.gmra.mrb[0].mxu0 %v2249
      %v2314 = vpop.f32.mrb[0].mxu0
      %v2315 = vadd.f32 0.0, %v2314
      %v2316 = vpop.f32.mrb[0].mxu0
      %v2317 = vpop.f32.mrb[0].mxu0
      %v2318 = vadd.f32 0.0, %v2317
      %v2319 = vpop.f32.mrb[0].mxu0
      %2320 = vmatprep.mubr.bf16.mxu0 0
      %2321 = vmatmul.mubr.bf16.gmra.mrb[0].mxu0 %v2252
      %v2322 = vpop.f32.mrb[0].mxu0
      %v2323 = vadd.f32 0.0, %v2322
      %v2324 = vpop.f32.mrb[0].mxu0
      %v2325 = vpop.f32.mrb[0].mxu0
      %v2326 = vadd.f32 0.0, %v2325
      %v2327 = vpop.f32.mrb[0].mxu0
      %2328 = vmatprep.mubr.bf16.mxu0 0
      %2329 = vmatmul.mubr.bf16.gmra.mrb[0].mxu0 %v2255
      %v2330 = vpop.f32.mrb[0].mxu0
      %v2331 = vadd.f32 0.0, %v2330
      %v2332 = vpop.f32.mrb[0].mxu0
      %v2333 = vpop.f32.mrb[0].mxu0
      %v2334 = vadd.f32 0.0, %v2333
      %v2335 = vpop.f32.mrb[0].mxu0
      %2336 = vmatprep.mubr.bf16.mxu0 0
      %2337 = vmatmul.mubr.bf16.gmra.mrb[0].mxu0 %v2258
      %v2338 = vpop.f32.mrb[0].mxu0
      %v2339 = vadd.f32 0.0, %v2338
      %v2340 = vpop.f32.mrb[0].mxu0
      %v2341 = vpop.f32.mrb[0].mxu0
      %v2342 = vadd.f32 0.0, %v2341
      %v2343 = vpop.f32.mrb[0].mxu0
      %2344 = vmatprep.mubr.bf16.mxu0 0
      %2345 = vmatmul.mubr.bf16.gmra.mrb[0].mxu0 %v2261
      %v2346 = vpop.f32.mrb[0].mxu0
      %v2347 = vadd.f32 0.0, %v2346
      %v2348 = vpop.f32.mrb[0].mxu0
      %v2349 = vpop.f32.mrb[0].mxu0
      %v2350 = vadd.f32 0.0, %v2349
      %v2351 = vpop.f32.mrb[0].mxu0
      %2352 = vmatprep.mubr.bf16.mxu0 0
      %2353 = vmatmul.mubr.bf16.gmra.mrb[0].mxu0 %v2264
      %v2354 = vpop.f32.mrb[0].mxu0
      %v2355 = vadd.f32 0.0, %v2354
      %v2356 = vpop.f32.mrb[0].mxu0
      %v2357 = vpop.f32.mrb[0].mxu0
      %v2358 = vadd.f32 0.0, %v2357
      %v2359 = vpop.f32.mrb[0].mxu0
      %2360 = vmatprep.mubr.bf16.mxu0 0
      %2361 = vmatmul.mubr.bf16.gmra.mrb[0].mxu0 %v2267
      %v2362 = vpop.f32.mrb[0].mxu0
      %v2363 = vadd.f32 0.0, %v2362
      %v2364 = vpop.f32.mrb[0].mxu0
      %v2365 = vpop.f32.mrb[0].mxu0
      %v2366 = vadd.f32 0.0, %v2365
      %v2367 = vpop.f32.mrb[0].mxu0
      %2368 = vdwg.mxu0
      %v2369 = vadd.f32 %v1987, %v2307
      %v2370 = vadd.f32 %v1988, %v2310
      %v2371 = vadd.f32 %v1989, %v2315
      %v2372 = vadd.f32 %v1990, %v2318
      %v2373 = vadd.f32 %v1991, %v2323
      %v2374 = vadd.f32 %v1992, %v2326
      %v2375 = vadd.f32 %v1993, %v2331
      %v2376 = vadd.f32 %v1994, %v2334
      %v2377 = vadd.f32 %v1995, %v2339
      %v2378 = vadd.f32 %v1996, %v2342
      %v2379 = vadd.f32 %v1997, %v2347
      %v2380 = vadd.f32 %v1998, %v2350
      %v2381 = vadd.f32 %v1999, %v2355
      %v2382 = vadd.f32 %v2000, %v2358
      %v2383 = vadd.f32 %v2001, %v2363
      %v2384 = vadd.f32 %v2002, %v2366
      %v2385 = vld [vmem:[%s1804] sm:$0xe]
      %v2386 = vld [vmem:[%s1804 + $0xc] sm:$0xe]
      %v2387 = vld [vmem:[%s1804 + $0x18] sm:$0xe]
      %v2388 = vld [vmem:[%s1804 + $0x24] sm:$0xe]
      %v2389 = vld [vmem:[%s1804 + $0x30] sm:$0xe]
      %v2390 = vld [vmem:[%s1804 + $0x3c] sm:$0xe]
      %v2391 = vld [vmem:[%s1804 + $0x48] sm:$0xe]
      %v2392 = vld [vmem:[%s1804 + $0x54] sm:$0xe]
      %v2417 = vrot.slane %v2385, 5
      %v2418 = vrot.slane %v2417, 4
      %v2419 = vrot.slane %v2004, 5
      %v2420 = vsel %vm746, %v2418, %v2419
      %v2421 = vrot.slane %v2419, 4
      %v2422 = vrot.slane %v2005, 5
      %v2423 = vsel %vm746, %v2421, %v2422
      %v2424 = vrot.slane %v2386, 5
      %v2425 = vrot.slane %v2424, 4
      %v2426 = vrot.slane %v2007, 5
      %v2427 = vsel %vm746, %v2425, %v2426
      %v2428 = vrot.slane %v2426, 4
      %v2429 = vrot.slane %v2008, 5
      %v2430 = vsel %vm746, %v2428, %v2429
      %v2431 = vrot.slane %v2387, 5
      %v2432 = vrot.slane %v2431, 4
      %v2433 = vrot.slane %v2010, 5
      %v2434 = vsel %vm746, %v2432, %v2433
      %v2435 = vrot.slane %v2433, 4
      %v2436 = vrot.slane %v2011, 5
      %v2437 = vsel %vm746, %v2435, %v2436
      %v2438 = vrot.slane %v2388, 5
      %v2439 = vrot.slane %v2438, 4
      %v2440 = vrot.slane %v2013, 5
      %v2441 = vsel %vm746, %v2439, %v2440
      %v2442 = vrot.slane %v2440, 4
      %v2443 = vrot.slane %v2014, 5
      %v2444 = vsel %vm746, %v2442, %v2443
      %v2445 = vrot.slane %v2389, 5
      %v2446 = vrot.slane %v2445, 4
      %v2447 = vrot.slane %v2016, 5
      %v2448 = vsel %vm746, %v2446, %v2447
      %v2449 = vrot.slane %v2447, 4
      %v2450 = vrot.slane %v2017, 5
      %v2451 = vsel %vm746, %v2449, %v2450
      %v2452 = vrot.slane %v2390, 5
      %v2453 = vrot.slane %v2452, 4
      %v2454 = vrot.slane %v2019, 5
      %v2455 = vsel %vm746, %v2453, %v2454
      %v2456 = vrot.slane %v2454, 4
      %v2457 = vrot.slane %v2020, 5
      %v2458 = vsel %vm746, %v2456, %v2457
      %v2459 = vrot.slane %v2391, 5
      %v2460 = vrot.slane %v2459, 4
      %v2461 = vrot.slane %v2022, 5
      %v2462 = vsel %vm746, %v2460, %v2461
      %v2463 = vrot.slane %v2461, 4
      %v2464 = vrot.slane %v2023, 5
      %v2465 = vsel %vm746, %v2463, %v2464
      %v2466 = vrot.slane %v2392, 5
      %v2467 = vrot.slane %v2466, 4
      %v2468 = vrot.slane %v2025, 5
      %v2469 = vsel %vm746, %v2467, %v2468
      %v2470 = vrot.slane %v2468, 4
      %v2471 = vrot.slane %v2026, 5
      %v2472 = vsel %vm746, %v2470, %v2471
      %s2473 = scalar_lea.vmem %s1, 32
      %v2474 = vld [vmem:[%s2473] sm:$0xf]
      %v2475 = vunpack.c.l.b16 %v2420
      %v2476 = vunpack.c.l.b16 %v2423
      %v2477 = vunpack.c.l.b16 %v2427
      %v2478 = vunpack.c.l.b16 %v2430
      %v2479 = vunpack.c.l.b16 %v2434
      %v2480 = vunpack.c.l.b16 %v2437
      %v2481 = vunpack.c.l.b16 %v2441
      %v2482 = vunpack.c.l.b16 %v2444
      %v2483 = vunpack.c.l.b16 %v2448
      %v2484 = vunpack.c.l.b16 %v2451
      %v2485 = vunpack.c.l.b16 %v2455
      %v2486 = vunpack.c.l.b16 %v2458
      %v2487 = vunpack.c.l.b16 %v2462
      %v2488 = vunpack.c.l.b16 %v2465
      %v2489 = vunpack.c.l.b16 %v2469
      %v2490 = vunpack.c.l.b16 %v2472
      %v2491 = vpack.c.b16 %v2476, %v2475
      %v2492 = vpack.c.b16 %v2478, %v2477
      %v2493 = vpack.c.b16 %v2480, %v2479
      %v2494 = vpack.c.b16 %v2482, %v2481
      %v2495 = vpack.c.b16 %v2484, %v2483
      %v2496 = vpack.c.b16 %v2486, %v2485
      %v2497 = vpack.c.b16 %v2488, %v2487
      %v2498 = vpack.c.b16 %v2490, %v2489
      %v2500 = vsel %vm430, %v2491, 0
      %v2503 = vsel %vm430, %v2492, 0
      %v2506 = vsel %vm430, %v2493, 0
      %v2509 = vsel %vm430, %v2494, 0
      %v2512 = vsel %vm430, %v2495, 0
      %v2515 = vsel %vm430, %v2496, 0
      %v2518 = vsel %vm430, %v2497, 0
      %v2521 = vsel %vm430, %v2498, 0
      %v2524 = vsel %vm455, %v2474, 0
      %2526 = vmatprep.subr.bf16.mxu0 0
      %2527 = vmatpush1.bf16.msra.mxu0 %v2524
      %2528 = vmatprep.subr.bf16.mxu0 0
      %2529 = vmatpush1.bf16.msra.mxu0 0
      %2530 = vmatprep.subr.bf16.mxu0 0
      %2531 = vmatpush1.bf16.msra.mxu0 0
      %2532 = vmatprep.subr.bf16.mxu0 0
      %2533 = vmatpush1.bf16.msra.mxu0 0
      %2534 = vmatprep.subr.bf16.mxu0 0
      %2535 = vmatpush1.bf16.msra.mxu0 0
      %2536 = vmatprep.subr.bf16.mxu0 0
      %2537 = vmatpush1.bf16.msra.mxu0 0
      %2538 = vmatprep.subr.bf16.mxu0 0
      %2539 = vmatpush1.bf16.msra.mxu0 0
      %2540 = vmatprep.subr.bf16.mxu0 0
      %2541 = vmatpush1.bf16.msra.mxu0 0
      %2542 = vmatprep.subr.bf16.mxu0 0
      %2543 = vmatpush1.bf16.msra.mxu0 0
      %2544 = vmatprep.subr.bf16.mxu0 0
      %2545 = vmatpush1.bf16.msra.mxu0 0
      %2546 = vmatprep.subr.bf16.mxu0 0
      %2547 = vmatpush1.bf16.msra.mxu0 0
      %2548 = vmatprep.subr.bf16.mxu0 0
      %2549 = vmatpush1.bf16.msra.mxu0 0
      %2550 = vmatprep.subr.bf16.mxu0 0
      %2551 = vmatpush1.bf16.msra.mxu0 0
      %2552 = vmatprep.subr.bf16.mxu0 0
      %2553 = vmatpush1.bf16.msra.mxu0 0
      %2554 = vmatprep.subr.bf16.mxu0 0
      %2555 = vmatpush1.bf16.msra.mxu0 0
      %2556 = vmatprep.subr.bf16.mxu0 0
      %2557 = vmatpush1.bf16.msra.mxu0 0
      %2558 = vmatprep.mubr.bf16.mxu0 0
      %2559 = vmatmul.mubr.bf16.gmra.mrb[0].mxu0 %v2500
      %v2560 = vpop.f32.mrb[0].mxu0
      %v2561 = vadd.f32 0.0, %v2560
      %v2562 = vpop.f32.mrb[0].mxu0
      %v2563 = vpop.f32.mrb[0].mxu0
      %v2564 = vadd.f32 0.0, %v2563
      %v2565 = vpop.f32.mrb[0].mxu0
      %2566 = vmatprep.mubr.bf16.mxu0 0
      %2567 = vmatmul.mubr.bf16.gmra.mrb[0].mxu0 %v2503
      %v2568 = vpop.f32.mrb[0].mxu0
      %v2569 = vadd.f32 0.0, %v2568
      %v2570 = vpop.f32.mrb[0].mxu0
      %v2571 = vpop.f32.mrb[0].mxu0
      %v2572 = vadd.f32 0.0, %v2571
      %v2573 = vpop.f32.mrb[0].mxu0
      %2574 = vmatprep.mubr.bf16.mxu0 0
      %2575 = vmatmul.mubr.bf16.gmra.mrb[0].mxu0 %v2506
      %v2576 = vpop.f32.mrb[0].mxu0
      %v2577 = vadd.f32 0.0, %v2576
      %v2578 = vpop.f32.mrb[0].mxu0
      %v2579 = vpop.f32.mrb[0].mxu0
      %v2580 = vadd.f32 0.0, %v2579
      %v2581 = vpop.f32.mrb[0].mxu0
      %2582 = vmatprep.mubr.bf16.mxu0 0
      %2583 = vmatmul.mubr.bf16.gmra.mrb[0].mxu0 %v2509
      %v2584 = vpop.f32.mrb[0].mxu0
      %v2585 = vadd.f32 0.0, %v2584
      %v2586 = vpop.f32.mrb[0].mxu0
      %v2587 = vpop.f32.mrb[0].mxu0
      %v2588 = vadd.f32 0.0, %v2587
      %v2589 = vpop.f32.mrb[0].mxu0
      %2590 = vmatprep.mubr.bf16.mxu0 0
      %2591 = vmatmul.mubr.bf16.gmra.mrb[0].mxu0 %v2512
      %v2592 = vpop.f32.mrb[0].mxu0
      %v2593 = vadd.f32 0.0, %v2592
      %v2594 = vpop.f32.mrb[0].mxu0
      %v2595 = vpop.f32.mrb[0].mxu0
      %v2596 = vadd.f32 0.0, %v2595
      %v2597 = vpop.f32.mrb[0].mxu0
      %2598 = vmatprep.mubr.bf16.mxu0 0
      %2599 = vmatmul.mubr.bf16.gmra.mrb[0].mxu0 %v2515
      %v2600 = vpop.f32.mrb[0].mxu0
      %v2601 = vadd.f32 0.0, %v2600
      %v2602 = vpop.f32.mrb[0].mxu0
      %v2603 = vpop.f32.mrb[0].mxu0
      %v2604 = vadd.f32 0.0, %v2603
      %v2605 = vpop.f32.mrb[0].mxu0
      %2606 = vmatprep.mubr.bf16.mxu0 0
      %2607 = vmatmul.mubr.bf16.gmra.mrb[0].mxu0 %v2518
      %v2608 = vpop.f32.mrb[0].mxu0
      %v2609 = vadd.f32 0.0, %v2608
      %v2610 = vpop.f32.mrb[0].mxu0
      %v2611 = vpop.f32.mrb[0].mxu0
      %v2612 = vadd.f32 0.0, %v2611
      %v2613 = vpop.f32.mrb[0].mxu0
      %2614 = vmatprep.mubr.bf16.mxu0 0
      %2615 = vmatmul.mubr.bf16.gmra.mrb[0].mxu0 %v2521
      %v2616 = vpop.f32.mrb[0].mxu0
      %v2617 = vadd.f32 0.0, %v2616
      %v2618 = vpop.f32.mrb[0].mxu0
      %v2619 = vpop.f32.mrb[0].mxu0
      %v2620 = vadd.f32 0.0, %v2619
      %v2621 = vpop.f32.mrb[0].mxu0
      %2622 = vdwg.mxu0
      %v2623 = vadd.f32 %v2369, %v2561
      %v2624 = vadd.f32 %v2370, %v2564
      %v2625 = vadd.f32 %v2371, %v2569
      %v2626 = vadd.f32 %v2372, %v2572
      %v2627 = vadd.f32 %v2373, %v2577
      %v2628 = vadd.f32 %v2374, %v2580
      %v2629 = vadd.f32 %v2375, %v2585
      %v2630 = vadd.f32 %v2376, %v2588
      %v2631 = vadd.f32 %v2377, %v2593
      %v2632 = vadd.f32 %v2378, %v2596
      %v2633 = vadd.f32 %v2379, %v2601
      %v2634 = vadd.f32 %v2380, %v2604
      %v2635 = vadd.f32 %v2381, %v2609
      %v2636 = vadd.f32 %v2382, %v2612
      %v2637 = vadd.f32 %v2383, %v2617
      %v2638 = vadd.f32 %v2384, %v2620
      %v2639 = vpack.c.bf16 %v2624, %v2623
      %v2640 = vpack.c.bf16 %v2626, %v2625
      %v2641 = vpack.c.bf16 %v2628, %v2627
      %v2642 = vpack.c.bf16 %v2630, %v2629
      %v2643 = vpack.c.bf16 %v2632, %v2631
      %v2644 = vpack.c.bf16 %v2634, %v2633
      %v2645 = vpack.c.bf16 %v2636, %v2635
      %v2646 = vpack.c.bf16 %v2638, %v2637
      %v2655 = vunpack.c.l.b16 %v2639
      %v2656 = vunpack.c.h.b16 %v2639
      %v2657 = vunpack.c.l.b16 %v2640
      %v2658 = vunpack.c.h.b16 %v2640
      %v2659 = vunpack.c.l.b16 %v2641
      %v2660 = vunpack.c.h.b16 %v2641
      %v2661 = vunpack.c.l.b16 %v2642
      %v2662 = vunpack.c.h.b16 %v2642
      %v2663 = vunpack.c.l.b16 %v2643
      %v2664 = vunpack.c.h.b16 %v2643
      %v2665 = vunpack.c.l.b16 %v2644
      %v2666 = vunpack.c.h.b16 %v2644
      %v2667 = vunpack.c.l.b16 %v2645
      %v2668 = vunpack.c.h.b16 %v2645
      %v2669 = vunpack.c.l.b16 %v2646
      %v2670 = vunpack.c.h.b16 %v2646
      %v2671 = vpack.c.b16 %v2655, %v2655
      %v2672 = vpack.c.b16 %v2656, %v2656
      %v2673 = vpack.c.b16 %v2657, %v2657
      %v2674 = vpack.c.b16 %v2658, %v2658
      %v2675 = vpack.c.b16 %v2659, %v2659
      %v2676 = vpack.c.b16 %v2660, %v2660
      %v2677 = vpack.c.b16 %v2661, %v2661
      %v2678 = vpack.c.b16 %v2662, %v2662
      %v2679 = vpack.c.b16 %v2663, %v2663
      %v2680 = vpack.c.b16 %v2664, %v2664
      %v2681 = vpack.c.b16 %v2665, %v2665
      %v2682 = vpack.c.b16 %v2666, %v2666
      %v2683 = vpack.c.b16 %v2667, %v2667
      %v2684 = vpack.c.b16 %v2668, %v2668
      %v2685 = vpack.c.b16 %v2669, %v2669
      %v2686 = vpack.c.b16 %v2670, %v2670
      %2703 = vst [vmem:[%s177] sm:$0xf] %v2671
      %2704 = vst [vmem:[%s177 + $0x4] sm:$0xf] %v2672
      %2705 = vst [vmem:[%s177 + $0x8] sm:$0xf] %v2673
      %2706 = vst [vmem:[%s177 + $0xc] sm:$0xf] %v2674
      %2707 = vst [vmem:[%s177 + $0x10] sm:$0xf] %v2675
      %2708 = vst [vmem:[%s177 + $0x14] sm:$0xf] %v2676
      %2709 = vst [vmem:[%s177 + $0x18] sm:$0xf] %v2677
      %2710 = vst [vmem:[%s177 + $0x1c] sm:$0xf] %v2678
      %2711 = vst [vmem:[%s177 + $0x20] sm:$0xf] %v2679
      %2712 = vst [vmem:[%s177 + $0x24] sm:$0xf] %v2680
      %2713 = vst [vmem:[%s177 + $0x28] sm:$0xf] %v2681
      %2714 = vst [vmem:[%s177 + $0x2c] sm:$0xf] %v2682
      %2715 = vst [vmem:[%s177 + $0x30] sm:$0xf] %v2683
      %2716 = vst [vmem:[%s177 + $0x34] sm:$0xf] %v2684
      %2717 = vst [vmem:[%s177 + $0x38] sm:$0xf] %v2685
      %2718 = vst [vmem:[%s177 + $0x3c] sm:$0xf] %v2686
      %v2719 = vlaneseq
      %v2720 = vshrl.u32 %v2719, 7
      %v2721 = vadd.s32 %v2720, 8
      %v2722 = vadd.s32 %v2720, 16
      %v2723 = vadd.s32 %v2720, 24
      %v2724 = vadd.s32 %v2720, 32
      %v2725 = vadd.s32 %v2720, 40
      %v2726 = vadd.s32 %v2720, 48
      %v2727 = vadd.s32 %v2720, 56
      %v2728 = vadd.s32 %v2720, 64
      %v2729 = vadd.s32 %v2720, 72
      %v2730 = vadd.s32 %v2720, 80
      %v2731 = vadd.s32 %v2720, 88
      %v2732 = vadd.s32 %v2720, 96
      %v2733 = vadd.s32 %v2720, 104
      %v2734 = vadd.s32 %v2720, 112
      %v2735 = vadd.s32 %v2720, 120
      %vm2736 = vcmp.lt.s32.totalorder %v2720, 0
      %v2737 = vsub.s32 0, %v2720
      %v2738 = vsel %vm2736, %v2737, %v2720
      %v2739 = vshrl.u32 %v2738, 4
      %v2740 = vand.u32 %v2738, 15
      %v2741 = vsub.s32 0, %v2740
      %v2742 = vsel %vm2736, %v2741, %v2740
      %vm2743 = vcmp.lt.s32.totalorder %v2721, 0
      %v2744 = vsub.s32 0, %v2721
      %v2745 = vsel %vm2743, %v2744, %v2721
      %v2746 = vshrl.u32 %v2745, 4
      %v2747 = vand.u32 %v2745, 15
      %v2748 = vsub.s32 0, %v2747
      %v2749 = vsel %vm2743, %v2748, %v2747
      %vm2750 = vcmp.lt.s32.totalorder %v2722, 0
      %v2751 = vsub.s32 0, %v2722
      %v2752 = vsel %vm2750, %v2751, %v2722
      %v2753 = vshrl.u32 %v2752, 4
      %v2754 = vand.u32 %v2752, 15
      %v2755 = vsub.s32 0, %v2754
      %v2756 = vsel %vm2750, %v2755, %v2754
      %vm2757 = vcmp.lt.s32.totalorder %v2723, 0
      %v2758 = vsub.s32 0, %v2723
      %v2759 = vsel %vm2757, %v2758, %v2723
      %v2760 = vshrl.u32 %v2759, 4
      %v2761 = vand.u32 %v2759, 15
      %v2762 = vsub.s32 0, %v2761
      %v2763 = vsel %vm2757, %v2762, %v2761
      %vm2764 = vcmp.lt.s32.totalorder %v2724, 0
      %v2765 = vsub.s32 0, %v2724
      %v2766 = vsel %vm2764, %v2765, %v2724
      %v2767 = vshrl.u32 %v2766, 4
      %v2768 = vand.u32 %v2766, 15
      %v2769 = vsub.s32 0, %v2768
      %v2770 = vsel %vm2764, %v2769, %v2768
      %vm2771 = vcmp.lt.s32.totalorder %v2725, 0
      %v2772 = vsub.s32 0, %v2725
      %v2773 = vsel %vm2771, %v2772, %v2725
      %v2774 = vshrl.u32 %v2773, 4
      %v2775 = vand.u32 %v2773, 15
      %v2776 = vsub.s32 0, %v2775
      %v2777 = vsel %vm2771, %v2776, %v2775
      %vm2778 = vcmp.lt.s32.totalorder %v2726, 0
      %v2779 = vsub.s32 0, %v2726
      %v2780 = vsel %vm2778, %v2779, %v2726
      %v2781 = vshrl.u32 %v2780, 4
      %v2782 = vand.u32 %v2780, 15
      %v2783 = vsub.s32 0, %v2782
      %v2784 = vsel %vm2778, %v2783, %v2782
      %vm2785 = vcmp.lt.s32.totalorder %v2727, 0
      %v2786 = vsub.s32 0, %v2727
      %v2787 = vsel %vm2785, %v2786, %v2727
      %v2788 = vshrl.u32 %v2787, 4
      %v2789 = vand.u32 %v2787, 15
      %v2790 = vsub.s32 0, %v2789
      %v2791 = vsel %vm2785, %v2790, %v2789
      %vm2792 = vcmp.lt.s32.totalorder %v2728, 0
      %v2793 = vsub.s32 0, %v2728
      %v2794 = vsel %vm2792, %v2793, %v2728
      %v2795 = vshrl.u32 %v2794, 4
      %v2796 = vand.u32 %v2794, 15
      %v2797 = vsub.s32 0, %v2796
      %v2798 = vsel %vm2792, %v2797, %v2796
      %vm2799 = vcmp.lt.s32.totalorder %v2729, 0
      %v2800 = vsub.s32 0, %v2729
      %v2801 = vsel %vm2799, %v2800, %v2729
      %v2802 = vshrl.u32 %v2801, 4
      %v2803 = vand.u32 %v2801, 15
      %v2804 = vsub.s32 0, %v2803
      %v2805 = vsel %vm2799, %v2804, %v2803
      %vm2806 = vcmp.lt.s32.totalorder %v2730, 0
      %v2807 = vsub.s32 0, %v2730
      %v2808 = vsel %vm2806, %v2807, %v2730
      %v2809 = vshrl.u32 %v2808, 4
      %v2810 = vand.u32 %v2808, 15
      %v2811 = vsub.s32 0, %v2810
      %v2812 = vsel %vm2806, %v2811, %v2810
      %vm2813 = vcmp.lt.s32.totalorder %v2731, 0
      %v2814 = vsub.s32 0, %v2731
      %v2815 = vsel %vm2813, %v2814, %v2731
      %v2816 = vshrl.u32 %v2815, 4
      %v2817 = vand.u32 %v2815, 15
      %v2818 = vsub.s32 0, %v2817
      %v2819 = vsel %vm2813, %v2818, %v2817
      %vm2820 = vcmp.lt.s32.totalorder %v2732, 0
      %v2821 = vsub.s32 0, %v2732
      %v2822 = vsel %vm2820, %v2821, %v2732
      %v2823 = vshrl.u32 %v2822, 4
      %v2824 = vand.u32 %v2822, 15
      %v2825 = vsub.s32 0, %v2824
      %v2826 = vsel %vm2820, %v2825, %v2824
      %vm2827 = vcmp.lt.s32.totalorder %v2733, 0
      %v2828 = vsub.s32 0, %v2733
      %v2829 = vsel %vm2827, %v2828, %v2733
      %v2830 = vshrl.u32 %v2829, 4
      %v2831 = vand.u32 %v2829, 15
      %v2832 = vsub.s32 0, %v2831
      %v2833 = vsel %vm2827, %v2832, %v2831
      %vm2834 = vcmp.lt.s32.totalorder %v2734, 0
      %v2835 = vsub.s32 0, %v2734
      %v2836 = vsel %vm2834, %v2835, %v2734
      %v2837 = vshrl.u32 %v2836, 4
      %v2838 = vand.u32 %v2836, 15
      %v2839 = vsub.s32 0, %v2838
      %v2840 = vsel %vm2834, %v2839, %v2838
      %vm2841 = vcmp.lt.s32.totalorder %v2735, 0
      %v2842 = vsub.s32 0, %v2735
      %v2843 = vsel %vm2841, %v2842, %v2735
      %v2844 = vshrl.u32 %v2843, 4
      %v2845 = vand.u32 %v2843, 15
      %v2846 = vsub.s32 0, %v2845
      %v2847 = vsel %vm2841, %v2846, %v2845
      %vm2848 = vcmp.ne.s32.totalorder %v2742, 0
      %vm2849 = vcmp.ne.s32.totalorder %v2749, 0
      %vm2850 = vcmp.ne.s32.totalorder %v2756, 0
      %vm2851 = vcmp.ne.s32.totalorder %v2763, 0
      %vm2852 = vcmp.ne.s32.totalorder %v2770, 0
      %vm2853 = vcmp.ne.s32.totalorder %v2777, 0
      %vm2854 = vcmp.ne.s32.totalorder %v2784, 0
      %vm2855 = vcmp.ne.s32.totalorder %v2791, 0
      %vm2856 = vcmp.ne.s32.totalorder %v2798, 0
      %vm2857 = vcmp.ne.s32.totalorder %v2805, 0
      %vm2858 = vcmp.ne.s32.totalorder %v2812, 0
      %vm2859 = vcmp.ne.s32.totalorder %v2819, 0
      %vm2860 = vcmp.ne.s32.totalorder %v2826, 0
      %vm2861 = vcmp.ne.s32.totalorder %v2833, 0
      %vm2862 = vcmp.ne.s32.totalorder %v2840, 0
      %vm2863 = vcmp.ne.s32.totalorder %v2847, 0
      %vm2864 = vcmp.lt.s32.totalorder %v2742, 0
      %vm2865 = vcmp.lt.s32.totalorder %v2749, 0
      %vm2866 = vcmp.lt.s32.totalorder %v2756, 0
      %vm2867 = vcmp.lt.s32.totalorder %v2763, 0
      %vm2868 = vcmp.lt.s32.totalorder %v2770, 0
      %vm2869 = vcmp.lt.s32.totalorder %v2777, 0
      %vm2870 = vcmp.lt.s32.totalorder %v2784, 0
      %vm2871 = vcmp.lt.s32.totalorder %v2791, 0
      %vm2872 = vcmp.lt.s32.totalorder %v2798, 0
      %vm2873 = vcmp.lt.s32.totalorder %v2805, 0
      %vm2874 = vcmp.lt.s32.totalorder %v2812, 0
      %vm2875 = vcmp.lt.s32.totalorder %v2819, 0
      %vm2876 = vcmp.lt.s32.totalorder %v2826, 0
      %vm2877 = vcmp.lt.s32.totalorder %v2833, 0
      %vm2878 = vcmp.lt.s32.totalorder %v2840, 0
      %vm2879 = vcmp.lt.s32.totalorder %v2847, 0
      %vm2880 = vmand %vm2864, %vm2848
      %vm2881 = vmand %vm2865, %vm2849
      %vm2882 = vmand %vm2866, %vm2850
      %vm2883 = vmand %vm2867, %vm2851
      %vm2884 = vmand %vm2868, %vm2852
      %vm2885 = vmand %vm2869, %vm2853
      %vm2886 = vmand %vm2870, %vm2854
      %vm2887 = vmand %vm2871, %vm2855
      %vm2888 = vmand %vm2872, %vm2856
      %vm2889 = vmand %vm2873, %vm2857
      %vm2890 = vmand %vm2874, %vm2858
      %vm2891 = vmand %vm2875, %vm2859
      %vm2892 = vmand %vm2876, %vm2860
      %vm2893 = vmand %vm2877, %vm2861
      %vm2894 = vmand %vm2878, %vm2862
      %vm2895 = vmand %vm2879, %vm2863
      %v2896 = vadd.s32 %v2742, 16
      %v2897 = vadd.s32 %v2749, 16
      %v2898 = vadd.s32 %v2756, 16
      %v2899 = vadd.s32 %v2763, 16
      %v2900 = vadd.s32 %v2770, 16
      %v2901 = vadd.s32 %v2777, 16
      %v2902 = vadd.s32 %v2784, 16
      %v2903 = vadd.s32 %v2791, 16
      %v2904 = vadd.s32 %v2798, 16
      %v2905 = vadd.s32 %v2805, 16
      %v2906 = vadd.s32 %v2812, 16
      %v2907 = vadd.s32 %v2819, 16
      %v2908 = vadd.s32 %v2826, 16
      %v2909 = vadd.s32 %v2833, 16
      %v2910 = vadd.s32 %v2840, 16
      %v2911 = vadd.s32 %v2847, 16
      %v2912 = vsel %vm2880, %v2896, %v2742
      %v2913 = vsel %vm2881, %v2897, %v2749
      %v2914 = vsel %vm2882, %v2898, %v2756
      %v2915 = vsel %vm2883, %v2899, %v2763
      %v2916 = vsel %vm2884, %v2900, %v2770
      %v2917 = vsel %vm2885, %v2901, %v2777
      %v2918 = vsel %vm2886, %v2902, %v2784
      %v2919 = vsel %vm2887, %v2903, %v2791
      %v2920 = vsel %vm2888, %v2904, %v2798
      %v2921 = vsel %vm2889, %v2905, %v2805
      %v2922 = vsel %vm2890, %v2906, %v2812
      %v2923 = vsel %vm2891, %v2907, %v2819
      %v2924 = vsel %vm2892, %v2908, %v2826
      %v2925 = vsel %vm2893, %v2909, %v2833
      %v2926 = vsel %vm2894, %v2910, %v2840
      %v2927 = vsel %vm2895, %v2911, %v2847
      %vm2928 = vcmp.lt.s32.totalorder %v2912, 8
      %vm2929 = vcmp.lt.s32.totalorder %v2913, 8
      %vm2930 = vcmp.lt.s32.totalorder %v2914, 8
      %vm2931 = vcmp.lt.s32.totalorder %v2915, 8
      %vm2932 = vcmp.lt.s32.totalorder %v2916, 8
      %vm2933 = vcmp.lt.s32.totalorder %v2917, 8
      %vm2934 = vcmp.lt.s32.totalorder %v2918, 8
      %vm2935 = vcmp.lt.s32.totalorder %v2919, 8
      %vm2936 = vcmp.lt.s32.totalorder %v2920, 8
      %vm2937 = vcmp.lt.s32.totalorder %v2921, 8
      %vm2938 = vcmp.lt.s32.totalorder %v2922, 8
      %vm2939 = vcmp.lt.s32.totalorder %v2923, 8
      %vm2940 = vcmp.lt.s32.totalorder %v2924, 8
      %vm2941 = vcmp.lt.s32.totalorder %v2925, 8
      %vm2942 = vcmp.lt.s32.totalorder %v2926, 8
      %vm2943 = vcmp.lt.s32.totalorder %v2927, 8
      %v2944 = vsel %vm2928, 1, 0
      %v2945 = vsel %vm2929, 1, 0
      %v2946 = vsel %vm2930, 1, 0
      %v2947 = vsel %vm2931, 1, 0
      %v2948 = vsel %vm2932, 1, 0
      %v2949 = vsel %vm2933, 1, 0
      %v2950 = vsel %vm2934, 1, 0
      %v2951 = vsel %vm2935, 1, 0
      %v2952 = vsel %vm2936, 1, 0
      %v2953 = vsel %vm2937, 1, 0
      %v2954 = vsel %vm2938, 1, 0
      %v2955 = vsel %vm2939, 1, 0
      %v2956 = vsel %vm2940, 1, 0
      %v2957 = vsel %vm2941, 1, 0
      %v2958 = vsel %vm2942, 1, 0
      %v2959 = vsel %vm2943, 1, 0
      %vm2960 = vcmp.eq.s32.totalorder %v2944, 1
      %vm2961 = vcmp.eq.s32.totalorder %v2945, 1
      %vm2962 = vcmp.eq.s32.totalorder %v2946, 1
      %vm2963 = vcmp.eq.s32.totalorder %v2947, 1
      %vm2964 = vcmp.eq.s32.totalorder %v2948, 1
      %vm2965 = vcmp.eq.s32.totalorder %v2949, 1
      %vm2966 = vcmp.eq.s32.totalorder %v2950, 1
      %vm2967 = vcmp.eq.s32.totalorder %v2951, 1
      %vm2968 = vcmp.eq.s32.totalorder %v2952, 1
      %vm2969 = vcmp.eq.s32.totalorder %v2953, 1
      %vm2970 = vcmp.eq.s32.totalorder %v2954, 1
      %vm2971 = vcmp.eq.s32.totalorder %v2955, 1
      %vm2972 = vcmp.eq.s32.totalorder %v2956, 1
      %vm2973 = vcmp.eq.s32.totalorder %v2957, 1
      %vm2974 = vcmp.eq.s32.totalorder %v2958, 1
      %vm2975 = vcmp.eq.s32.totalorder %v2959, 1
      %v2976 = vsel %vm2960, %v2623, 0.0
      %v2977 = vsel %vm2961, %v2624, 0.0
      %v2978 = vsel %vm2962, %v2625, 0.0
      %v2979 = vsel %vm2963, %v2626, 0.0
      %v2980 = vsel %vm2964, %v2627, 0.0
      %v2981 = vsel %vm2965, %v2628, 0.0
      %v2982 = vsel %vm2966, %v2629, 0.0
      %v2983 = vsel %vm2967, %v2630, 0.0
      %v2984 = vsel %vm2968, %v2631, 0.0
      %v2985 = vsel %vm2969, %v2632, 0.0
      %v2986 = vsel %vm2970, %v2633, 0.0
      %v2987 = vsel %vm2971, %v2634, 0.0
      %v2988 = vsel %vm2972, %v2635, 0.0
      %v2989 = vsel %vm2973, %v2636, 0.0
      %v2990 = vsel %vm2974, %v2637, 0.0
      %v2991 = vsel %vm2975, %v2638, 0.0
      %v2992 = vadd.f32 %v2976, %v2977
      %v2993 = vadd.f32 %v2992, %v2978
      %v2994 = vadd.f32 %v2993, %v2979
      %v2995 = vadd.f32 %v2994, %v2980
      %v2996 = vadd.f32 %v2995, %v2981
      %v2997 = vadd.f32 %v2996, %v2982
      %v2998 = vadd.f32 %v2997, %v2983
      %v2999 = vadd.f32 %v2998, %v2984
      %v3000 = vadd.f32 %v2999, %v2985
      %v3001 = vadd.f32 %v3000, %v2986
      %v3002 = vadd.f32 %v3001, %v2987
      %v3003 = vadd.f32 %v3002, %v2988
      %v3004 = vadd.f32 %v3003, %v2989
      %v3005 = vadd.f32 %v3004, %v2990
      %v3006 = vadd.f32 %v3005, %v2991
      %v3007 = vrot.slane %v3006, 4
      %v3008 = vadd.f32 %v3006, %v3007
      %v3009 = vrot.slane %v3008, 2
      %v3010 = vadd.f32 %v3008, %v3009
      %v3011 = vrot.slane %v3010, 1
      %v3012 = vadd.f32 %v3010, %v3011
      %3013 = vst [vmem:[%s182] sm:$0x1] %v3012
      %v3014 = vmul.f32 %v2976, %v2976
      %v3015 = vmul.f32 %v2977, %v2977
      %v3016 = vmul.f32 %v2978, %v2978
      %v3017 = vmul.f32 %v2979, %v2979
      %v3018 = vmul.f32 %v2980, %v2980
      %v3019 = vmul.f32 %v2981, %v2981
      %v3020 = vmul.f32 %v2982, %v2982
      %v3021 = vmul.f32 %v2983, %v2983
      %v3022 = vmul.f32 %v2984, %v2984
      %v3023 = vmul.f32 %v2985, %v2985
      %v3024 = vmul.f32 %v2986, %v2986
      %v3025 = vmul.f32 %v2987, %v2987
      %v3026 = vmul.f32 %v2988, %v2988
      %v3027 = vmul.f32 %v2989, %v2989
      %v3028 = vmul.f32 %v2990, %v2990
      %v3029 = vmul.f32 %v2991, %v2991
      %v3030 = vadd.f32 %v3014, %v3015
      %v3031 = vadd.f32 %v3030, %v3016
      %v3032 = vadd.f32 %v3031, %v3017
      %v3033 = vadd.f32 %v3032, %v3018
      %v3034 = vadd.f32 %v3033, %v3019
      %v3035 = vadd.f32 %v3034, %v3020
      %v3036 = vadd.f32 %v3035, %v3021
      %v3037 = vadd.f32 %v3036, %v3022
      %v3038 = vadd.f32 %v3037, %v3023
      %v3039 = vadd.f32 %v3038, %v3024
      %v3040 = vadd.f32 %v3039, %v3025
      %v3041 = vadd.f32 %v3040, %v3026
      %v3042 = vadd.f32 %v3041, %v3027
      %v3043 = vadd.f32 %v3042, %v3028
      %v3044 = vadd.f32 %v3043, %v3029
      %v3045 = vrot.slane %v3044, 4
      %v3046 = vadd.f32 %v3044, %v3045
      %v3047 = vrot.slane %v3046, 2
      %v3048 = vadd.f32 %v3046, %v3047
      %v3049 = vrot.slane %v3048, 1
      %v3050 = vadd.f32 %v3048, %v3049
      %3051 = vst [vmem:[%s182 + $0x1] sm:$0x1] %v3050
      %s3052 = smul.u32 16, %s15
      %p3053 = scmp.lt.s32.totalorder %s3052, 31
      %s3054 = scalar_select %p3053, %s3052, 31
      %s3055 = smul.addr %s3054, 4
      %s3056 = scalar_lea.vmem %s2, %s3055
      %p3057 = scmp.lt.s32.totalorder %s15, 1
      %s3058 = scalar_select %p3057, %s15, 1
      %s3059 = smul.addr %s3058, 2
      %s3060 = scalar_lea.vmem %s3, %s3059
      // Predicated region
      $region29: #{decoder_block_2d.2} parent=27 // pred_check
        %p3061 = pneg %p80
      $region30: #{decoder_block_2d.2} parent=27 // pred_check_branch
        %3063 = sbr.rel (%p3061) target = $region32
      $region31: #{decoder_block_2d.2} parent=27 // pred_region
        %s3064 = smul.u32 16, %s15
      $region32: #{decoder_block_2d.2} parent=27 // pred_fallthru
        _
      // Predicated region
      $region33: #{decoder_block_2d.2} parent=27 // pred_check
        %p3065 = pneg %p106
      $region34: #{decoder_block_2d.2} parent=27 // pred_check_branch
        %3067 = sbr.rel (%p3065) target = $region36
      $region35: #{decoder_block_2d.2} parent=27 // pred_region
        _
      $region36: #{decoder_block_2d.2} parent=27 // pred_fallthru
        _
    $region28: #{decoder_block_2d.2} parent=5 // pred_fallthru
      _
    %p3068 = scmp.le.s32.totalorder 2, %s10
    // Predicated region
    $region37: #{decoder_block_2d.2} parent=5 // pred_check
      %p3069 = pneg %p3068
    $region38: #{decoder_block_2d.2} parent=5 // pred_check_branch
      %3071 = sbr.rel (%p3069) target = $region40
    $region39: #{decoder_block_2d.2} parent=5 // pred_region
      %s3072 = ssub.s32 %s10, 2
      // Predicated region
      $region41: #{decoder_block_2d.2} parent=39 // pred_check
        %p3073 = pneg %p86
      $region42: #{decoder_block_2d.2} parent=39 // pred_check_branch
        %3075 = sbr.rel (%p3073) target = $region44
      $region43: #{decoder_block_2d.2} parent=39 // pred_region
        %s3076 = smul.u32 16, %s16
        %p3077 = scmp.lt.s32.totalorder %s3076, 31
        %s3078 = scalar_select %p3077, %s3076, 31
        %s3079 = smul.addr %s3078, 4
        %s3080 = scalar_lea.vmem %s2, %s3079
      $region44: #{decoder_block_2d.2} parent=39 // pred_fallthru
        _
      // Predicated region
      $region45: #{decoder_block_2d.2} parent=39 // pred_check
        %p3081 = pneg %p112
      $region46: #{decoder_block_2d.2} parent=39 // pred_check_branch
        %3083 = sbr.rel (%p3081) target = $region48
      $region47: #{decoder_block_2d.2} parent=39 // pred_region
        %p3084 = scmp.lt.s32.totalorder %s16, 1
        %s3085 = scalar_select %p3084, %s16, 1
        %s3086 = smul.addr %s3085, 2
        %s3087 = scalar_lea.vmem %s3, %s3086
      $region48: #{decoder_block_2d.2} parent=39 // pred_fallthru
        _
    $region40: #{decoder_block_2d.2} parent=5 // pred_fallthru
      _
  $region6: #{decoder_block_2d.2} parent=0 // loop_footer
    %s14 = sadd.s32 1, %s10
  $region7: #{decoder_block_2d.2} parent=0 // loop_footer_branch
    %9 = sbr.rel target = $region3
  $region8: #{decoder_block_2d.2} parent=0 // loop_exit
    _

</llo_original>
